<compile_context>
chip_gen: v6e
topology: v6e:2x2x1
jax: 0.10.0
libtpu: 0.0.40
codegen_flags: <defaults>
</compile_context>

<pallas_src>
import jax
import jax.numpy as jnp
from jax.experimental import pallas as pl
from jax.experimental.pallas import tpu as pltpu

# ----------------------------- problem sizes / config -----------------------------
N, C, D, H, W = 2, 1, 16, 16, 16          # small shapes
HW = H * W                                 # 256 lanes -> fully lane-dense slabs
HID = 16                                   # hidden width of synthetic RCN flow MLP
FLOW_SCALE = 2.0                           # max |displacement| in voxels
MASK_THRESHOLD = 0.5                       # cfg.mask_threshold (>= 0 -> main path)
JAC_THRES = 3.0                            # thres in extract_tumor_mask
MASKED_NEIGHBOR = 3                        # cfg.masked_neighbor (avg_pool3d kernel)


# ================================ Pallas kernels ==================================
def _flow_mlp_kernel(w1_ref, b1_ref, w2_ref, b2_ref, f_ref, m_ref, o_ref):
    """Per-voxel 1x1x1-conv MLP (2 -> 16 -> 3, tanh) on the VPU/EUP.

    No MXU: K=2 / N_out=3 would waste >98% of the systolic array. Weights are
    SMEM scalars; activations are lane-dense (D, H*W) planes.
    """
    f = f_ref[0]                                      # (D, HW) = (16, 256)
    m = m_ref[0]
    # output accumulators initialised with the biases (broadcast hoisted, once)
    acc = [jnp.zeros_like(f) + b2_ref[k] for k in range(3)]
    for j in range(HID):                              # static unroll
        h = jnp.tanh(f * w1_ref[0, j] + m * w1_ref[1, j] + b1_ref[j])
        for k in range(3):
            acc[k] = acc[k] + h * w2_ref[j, k]
    for k in range(3):
        o_ref[0, k] = jnp.tanh(acc[k]) * FLOW_SCALE   # lane-dense (16,256) stores


def _extract_ratio_kernel(flow_ref, seg_ref, mm_ref, o_ref):
    """extract_tumor_mask * target_ratio, fused, one batch per grid step.

    jacobian_det(identity + flow) -> abs -> clamp(1/3,3) -> avg_pool3d(k=3,s=1,p=1)
    -> filter_nonorgan(seg) -> * (sum(seg>0.5)/sum(mask_moving>0.5)).
    All D/H/W shifts are pltpu.roll (XLU) with iota edge masks on a lane-dense
    (D, H*W) view: lane = h*W + w, sublane = d.
    """
    fd = flow_ref[0, 0]          # flow component along D, (D, HW)
    fh = flow_ref[0, 1]          # along H
    fw = flow_ref[0, 2]          # along W
    seg = seg_ref[0]
    mm = mm_ref[0]
    shape = fd.shape

    # boundary masks: w index = lane & (W-1), h index = lane // W, d index = sublane
    lane = jax.lax.broadcasted_iota(jnp.int32, shape, 1)
    sub = jax.lax.broadcasted_iota(jnp.int32, shape, 0)
    w_idx = jnp.bitwise_and(lane, W - 1)
    not_last_w, not_first_w = w_idx < (W - 1), w_idx > 0
    not_last_h, not_first_h = lane < (HW - W), lane >= W
    not_last_d, not_first_d = sub < (D - 1), sub > 0

    def lroll(x, s):             # lane-axis roll (jnp.roll semantics, static shift >= 0)
        return pltpu.roll(x, shift=s % HW, axis=1)

    def sroll(x, s):             # sublane-axis roll
        return pltpu.roll(x, shift=s % D, axis=0)

    nxt_w, prv_w = (lambda x: lroll(x, -1)), (lambda x: lroll(x, 1))
    nxt_h, prv_h = (lambda x: lroll(x, -W)), (lambda x: lroll(x, W))
    nxt_d, prv_d = (lambda x: sroll(x, -1)), (lambda x: sroll(x, 1))

    def fdiff(x, nxt, prv, not_last):
        # forward difference with the last difference replicated (matches the
        # jacobian_det reference edge handling of the previous implementation)
        d = nxt(x) - x
        return jnp.where(not_last, d, prv(d))

    def grad3(x):                # (d/dD, d/dH, d/dW)
        return (fdiff(x, nxt_d, prv_d, not_last_d),
                fdiff(x, nxt_h, prv_h, not_last_h),
                fdiff(x, nxt_w, prv_w, not_last_w))

    a00, a01, a02 = grad3(fd)
    a10, a11, a12 = grad3(fh)
    a20, a21, a22 = grad3(fw)

    # det(I + grad(flow)) via direct cofactor expansion (only the 3 diagonal +1 adds)
    m00, m11, m22 = a00 + 1.0, a11 + 1.0, a22 + 1.0
    det = (m00 * (m11 * m22 - a12 * a21)
           - a01 * (a10 * m22 - a12 * a20)
           + a02 * (a10 * a21 - m11 * a20))

    ratio = jnp.clip(jnp.abs(det), 1.0 / JAC_THRES, JAC_THRES)

    # avg_pool3d(kernel=3, stride=1, padding=1, count_include_pad=True): separable
    # 3-tap box sums (zero outside the volume) along D, then H, then W, / 27.
    def box(x, nxt, prv, not_last, not_first):
        return (jnp.where(not_first, prv(x), 0.0) + x
                + jnp.where(not_last, nxt(x), 0.0))

    pooled = box(box(box(ratio, nxt_d, prv_d, not_last_d, not_first_d),
                     nxt_h, prv_h, not_last_h, not_first_h),
                 nxt_w, prv_w, not_last_w, not_first_w) * (1.0 / 27.0)

    # fused count_ratio: target_ratio = |seg>0.5| / |mask_moving>0.5| for this batch
    def sum_all(x):              # two single-axis reductions -> (1, 1)
        return jnp.sum(jnp.sum(x, axis=1, keepdims=True), axis=0, keepdims=True)

    inside = seg > 0.5
    cnt_seg = sum_all(inside.astype(jnp.float32))
    cnt_mm = sum_all((mm > 0.5).astype(jnp.float32))
    tratio = cnt_seg / cnt_mm    # NOTE: no epsilon, same as the PyTorch reference

    # filter_nonorgan (only_shrink=True) fused with the target_ratio scaling
    o_ref[0] = jnp.where(inside, pooled * tratio, 0.0)


def _soft_mask_kernel(dm_ref, mm_ref, seg_ref, soft_ref):
    # masked == 'soft', soft_transform == 'sigm'
    dm = dm_ref[...]
    mm = mm_ref[...]
    soft = jax.nn.sigmoid((dm - MASK_THRESHOLD) * 5.0)
    soft = jnp.where(mm > 0.5, soft, 0.0)   # filter_nonorgan(soft_mask, mask_moving)
    soft_ref[...] = soft
    seg_ref[...] = soft + mm                # input_seg = soft_mask + mask_moving


# ================================ kernel wrappers =================================
def flow_mlp(f_slab, m_slab, params):
    """f_slab, m_slab: (N, D, H*W) lane-dense slabs -> flow (N, 3, D, H*W)."""
    smem = pl.BlockSpec(memory_space=pltpu.MemorySpace.SMEM)
    return pl.pallas_call(
        _flow_mlp_kernel,
        out_shape=jax.ShapeDtypeStruct((N, 3, D, HW), jnp.float32),
        grid=(N,),
        in_specs=[smem, smem, smem, smem,
                  pl.BlockSpec((1, D, HW), lambda i: (i, 0, 0)),
                  pl.BlockSpec((1, D, HW), lambda i: (i, 0, 0))],
        out_specs=pl.BlockSpec((1, 3, D, HW), lambda i: (i, 0, 0, 0)),
        compiler_params=pltpu.CompilerParams(dimension_semantics=("parallel",)),
    )(params["w1"], params["b1"], params["w2"], params["b2"], f_slab, m_slab)


def extract_tumor_ratio(flow5, seg5, mm5):
    """flow5: (N,3,D,H,W), seg5/mm5: (N,1,D,H,W) -> flow_ratio * target_ratio."""
    flow = flow5.reshape(N, 3, D, HW)
    seg = seg5.reshape(N, D, HW)
    mm = mm5.reshape(N, D, HW)
    out = pl.pallas_call(
        _extract_ratio_kernel,
        out_shape=jax.ShapeDtypeStruct((N, D, HW), jnp.float32),
        grid=(N,),
        in_specs=[pl.BlockSpec((1, 3, D, HW), lambda i: (i, 0, 0, 0)),
                  pl.BlockSpec((1, D, HW), lambda i: (i, 0, 0)),
                  pl.BlockSpec((1, D, HW), lambda i: (i, 0, 0))],
        out_specs=pl.BlockSpec((1, D, HW), lambda i: (i, 0, 0)),
        compiler_params=pltpu.CompilerParams(dimension_semantics=("parallel",)),
    )(flow, seg, mm)
    return out.reshape(N, 1, D, H, W)


def soft_and_input_seg(dynamic_mask, mask_moving):
    dm = dynamic_mask.reshape(N * D, HW)        # (32, 256): one lane-dense block
    mm = mask_moving.reshape(N * D, HW)
    blk = pl.BlockSpec((N * D, HW), lambda i: (0, 0))
    input_seg, soft_mask = pl.pallas_call(
        _soft_mask_kernel,
        out_shape=(jax.ShapeDtypeStruct(dm.shape, jnp.float32),
                   jax.ShapeDtypeStruct(dm.shape, jnp.float32)),
        grid=(1,),
        in_specs=[blk, blk],
        out_specs=(blk, blk),
    )(dm, mm)
    return (input_seg.reshape(mask_moving.shape),
            soft_mask.reshape(mask_moving.shape))


# =========================== synthetic frozen RCN (glue) ==========================
def reconstruction(img, flow):
    """Trilinear warp of img by voxel-displacement flow (N,3,D,H,W)."""
    # TODO(synk): gather-based grid sample stays in plain JAX — Mosaic has no general
    #             cross-vreg gather, so an in-kernel jnp.take of a 4096-entry table
    #             would not lower.
    n, c, d, h, w = img.shape
    zz, yy, xx = jnp.meshgrid(jnp.arange(d, dtype=jnp.float32),
                              jnp.arange(h, dtype=jnp.float32),
                              jnp.arange(w, dtype=jnp.float32), indexing="ij")
    z = jnp.clip(zz[None] + flow[:, 0], 0.0, d - 1.0)
    y = jnp.clip(yy[None] + flow[:, 1], 0.0, h - 1.0)
    x = jnp.clip(xx[None] + flow[:, 2], 0.0, w - 1.0)
    z0, y0, x0 = jnp.floor(z), jnp.floor(y), jnp.floor(x)
    z1 = jnp.minimum(z0 + 1.0, d - 1.0)
    y1 = jnp.minimum(y0 + 1.0, h - 1.0)
    x1 = jnp.minimum(x0 + 1.0, w - 1.0)
    wz, wy, wx = (z - z0)[:, None], (y - y0)[:, None], (x - x0)[:, None]
    flat = img.reshape(n, c, d * h * w)

    def gather(zi, yi, xi):
        idx = ((zi * h + yi) * w + xi).astype(jnp.int32)
        g = jax.vmap(lambda f, i: jnp.take(f, i.reshape(-1), axis=1))(flat, idx)
        return g.reshape(n, c, d, h, w)

    c000, c001 = gather(z0, y0, x0), gather(z0, y0, x1)
    c010, c011 = gather(z0, y1, x0), gather(z0, y1, x1)
    c100, c101 = gather(z1, y0, x0), gather(z1, y0, x1)
    c110, c111 = gather(z1, y1, x0), gather(z1, y1, x1)
    return ((1 - wz) * ((1 - wy) * ((1 - wx) * c000 + wx * c001)
                        + wy * ((1 - wx) * c010 + wx * c011))
            + wz * ((1 - wy) * ((1 - wx) * c100 + wx * c101)
                    + wy * ((1 - wx) * c110 + wx * c111)))


def rcn_forward(fixed, moving, params, **kwargs):
    """Frozen synthetic RCN: returns ([warped], None, [agg_flow])."""
    f_slab = fixed.reshape(N, D, HW)     # lane-dense slabs; no NCDHW->NDHWC transpose
    m_slab = moving.reshape(N, D, HW)
    flow = flow_mlp(f_slab, m_slab, params).reshape(N, 3, D, H, W)
    warped = reconstruction(moving, flow)
    return [warped], None, [flow]


# ============================== PreRegister.forward ===============================
def pre_register_forward(fixed, moving, params, template_input, template_seg):
    # --- stage 1: register template to moving, warp template seg -> organ mask ---
    stage1_inputs = moving
    template_in_e = jnp.broadcast_to(template_input, stage1_inputs.shape)
    _, _, s1_agg_flows = rcn_forward(stage1_inputs, template_in_e, params,
                                     return_neg=False)
    s1_flow = s1_agg_flows[-1]
    template_seg_e = jnp.broadcast_to(template_seg, template_in_e.shape)
    mask_moving = reconstruction(template_seg_e, s1_flow)

    # --- warp(fixed, moving, mask_moving) ---   (use_bilateral=False)
    w_moving_list, _, rs1_agg_flows = rcn_forward(fixed, moving, params)
    rs1_flow = rs1_agg_flows[-1]
    w_moving = w_moving_list[-1]
    w_moving_seg = reconstruction(mask_moving, rs1_flow)

    # --- extract_tumor_mask * target_ratio (single fused Pallas kernel) ---
    # (use_2nd_flow=False; boundary_thickness==0 -> remove_boundary_weights skipped)
    flow_ratio = extract_tumor_ratio(rs1_flow, w_moving_seg, mask_moving)

    # --- reverse flow and pull the ratio map back to moving space ---
    _, _, rev_flows = rcn_forward(moving, w_moving, params)
    rev_flow_ratio = reconstruction(flow_ratio, rev_flows[-1])
    dynamic_mask = rev_flow_ratio                       # use_2nd_flow=False

    # --- soft mask + input seg (single-block Pallas elementwise kernel) ---
    input_seg, soft_mask = soft_and_input_seg(dynamic_mask, mask_moving)
    return input_seg, soft_mask


# ===================================== main =======================================
if __name__ == "__main__":
    key = jax.random.PRNGKey(0)
    k1, k2, k3, k4 = jax.random.split(key, 4)

    fixed = jax.random.uniform(k1, (N, C, D, H, W), jnp.float32)
    moving = jax.random.uniform(k2, (N, C, D, H, W), jnp.float32)

    # deterministic frozen RCN parameters (1x1x1 conv MLP: 2 -> 16 -> 3)
    params = {
        "w1": 0.5 * jax.random.normal(k3, (2, HID), jnp.float32),
        "b1": jnp.zeros((HID,), jnp.float32),
        "w2": 0.5 * jax.random.normal(k4, (HID, 3), jnp.float32),
        "b2": jnp.zeros((3,), jnp.float32),
    }

    # deterministic template image (gaussian blob) and template seg (sphere)
    zz, yy, xx = jnp.meshgrid(jnp.arange(D, dtype=jnp.float32),
                              jnp.arange(H, dtype=jnp.float32),
                              jnp.arange(W, dtype=jnp.float32), indexing="ij")
    ctr = jnp.array([D / 2 - 0.5, H / 2 - 0.5, W / 2 - 0.5])
    r2 = (zz - ctr[0]) ** 2 + (yy - ctr[1]) ** 2 + (xx - ctr[2]) ** 2
    template_input = jnp.exp(-r2 / (2.0 * 4.0 ** 2))[None, None]          # (1,1,D,H,W)
    template_seg = (r2 < 5.0 ** 2).astype(jnp.float32)[None, None]        # (1,1,D,H,W)

    fwd = jax.jit(pre_register_forward)
    input_seg, soft_mask = fwd(fixed, moving, params, template_input, template_seg)
    jax.block_until_ready((input_seg, soft_mask))

    assert input_seg.shape == (N, C, D, H, W) and soft_mask.shape == (N, C, D, H, W)
    assert bool(jnp.all(jnp.isfinite(input_seg))) and bool(jnp.all(jnp.isfinite(soft_mask)))
    print("KERNEL_OK")
</pallas_src>

<mosaic_0001>
module attributes {stable_mosaic.version = 11 : i64} {
  func.func @_flow_mlp_kernel(%arg0: i32, %arg1: memref<2x16xf32, #tpu.memory_space<smem>>, %arg2: memref<16xf32, #tpu.memory_space<smem>>, %arg3: memref<16x3xf32, #tpu.memory_space<smem>>, %arg4: memref<3xf32, #tpu.memory_space<smem>>, %arg5: memref<1x16x256xf32, #tpu.memory_space<vmem>>, %arg6: memref<1x16x256xf32, #tpu.memory_space<vmem>>, %arg7: memref<1x3x16x256xf32, #tpu.memory_space<vmem>>) attributes {dimension_semantics = [#tpu.dimension_semantics<parallel>], iteration_bounds = array<i64: 2>, scalar_prefetch = 0 : i64, scratch_operands = 0 : i64, tpu.core_type = #tpu.core_type<tc>, window_params = [{transform_indices = @transform_0, window_bounds = array<i64: 2, 16>}, {transform_indices = @transform_1, window_bounds = array<i64: 16>}, {transform_indices = @transform_2, window_bounds = array<i64: 16, 3>}, {transform_indices = @transform_3, window_bounds = array<i64: 3>}, {transform_indices = @transform_4, window_bounds = array<i64: 1, 16, 256>}, {transform_indices = @transform_5, window_bounds = array<i64: 1, 16, 256>}, {transform_indices = @transform_6, window_bounds = array<i64: 1, 3, 16, 256>}]} {
    %c0 = arith.constant 0 : index
    %c0_0 = arith.constant 0 : index
    %c0_1 = arith.constant 0 : index
    %0 = vector.load %arg5[%c0, %c0_0, %c0_1] : memref<1x16x256xf32, #tpu.memory_space<vmem>>, vector<1x16x256xf32>
    %1 = vector.shape_cast %0 : vector<1x16x256xf32> to vector<16x256xf32>
    %c0_2 = arith.constant 0 : index
    %c0_3 = arith.constant 0 : index
    %c0_4 = arith.constant 0 : index
    %2 = vector.load %arg6[%c0_2, %c0_3, %c0_4] : memref<1x16x256xf32, #tpu.memory_space<vmem>>, vector<1x16x256xf32>
    %3 = vector.shape_cast %2 : vector<1x16x256xf32> to vector<16x256xf32>
    %cst = arith.constant 0.000000e+00 : f32
    %4 = vector.broadcast %cst : f32 to vector<16x256xf32>
    %c0_5 = arith.constant 0 : index
    %5 = memref.load %arg4[%c0_5] : memref<3xf32, #tpu.memory_space<smem>>
    %6 = vector.broadcast %5 : f32 to vector<16x256xf32>
    %7 = arith.addf %4, %6 : vector<16x256xf32>
    %cst_6 = arith.constant 0.000000e+00 : f32
    %8 = vector.broadcast %cst_6 : f32 to vector<16x256xf32>
    %c1 = arith.constant 1 : index
    %9 = memref.load %arg4[%c1] : memref<3xf32, #tpu.memory_space<smem>>
    %10 = vector.broadcast %9 : f32 to vector<16x256xf32>
    %11 = arith.addf %8, %10 : vector<16x256xf32>
    %cst_7 = arith.constant 0.000000e+00 : f32
    %12 = vector.broadcast %cst_7 : f32 to vector<16x256xf32>
    %c2 = arith.constant 2 : index
    %13 = memref.load %arg4[%c2] : memref<3xf32, #tpu.memory_space<smem>>
    %14 = vector.broadcast %13 : f32 to vector<16x256xf32>
    %15 = arith.addf %12, %14 : vector<16x256xf32>
    %c0_8 = arith.constant 0 : index
    %c0_9 = arith.constant 0 : index
    %16 = memref.load %arg1[%c0_8, %c0_9] : memref<2x16xf32, #tpu.memory_space<smem>>
    %17 = vector.broadcast %16 : f32 to vector<16x256xf32>
    %18 = arith.mulf %1, %17 : vector<16x256xf32>
    %c1_10 = arith.constant 1 : index
    %c0_11 = arith.constant 0 : index
    %19 = memref.load %arg1[%c1_10, %c0_11] : memref<2x16xf32, #tpu.memory_space<smem>>
    %20 = vector.broadcast %19 : f32 to vector<16x256xf32>
    %21 = arith.mulf %3, %20 : vector<16x256xf32>
    %22 = arith.addf %18, %21 : vector<16x256xf32>
    %c0_12 = arith.constant 0 : index
    %23 = memref.load %arg2[%c0_12] : memref<16xf32, #tpu.memory_space<smem>>
    %24 = vector.broadcast %23 : f32 to vector<16x256xf32>
    %25 = arith.addf %22, %24 : vector<16x256xf32>
    %26 = math.tanh %25 : vector<16x256xf32>
    %c0_13 = arith.constant 0 : index
    %c0_14 = arith.constant 0 : index
    %27 = memref.load %arg3[%c0_13, %c0_14] : memref<16x3xf32, #tpu.memory_space<smem>>
    %28 = vector.broadcast %27 : f32 to vector<16x256xf32>
    %29 = arith.mulf %26, %28 : vector<16x256xf32>
    %30 = arith.addf %7, %29 : vector<16x256xf32>
    %c0_15 = arith.constant 0 : index
    %c1_16 = arith.constant 1 : index
    %31 = memref.load %arg3[%c0_15, %c1_16] : memref<16x3xf32, #tpu.memory_space<smem>>
    %32 = vector.broadcast %31 : f32 to vector<16x256xf32>
    %33 = arith.mulf %26, %32 : vector<16x256xf32>
    %34 = arith.addf %11, %33 : vector<16x256xf32>
    %c0_17 = arith.constant 0 : index
    %c2_18 = arith.constant 2 : index
    %35 = memref.load %arg3[%c0_17, %c2_18] : memref<16x3xf32, #tpu.memory_space<smem>>
    %36 = vector.broadcast %35 : f32 to vector<16x256xf32>
    %37 = arith.mulf %26, %36 : vector<16x256xf32>
    %38 = arith.addf %15, %37 : vector<16x256xf32>
    %c0_19 = arith.constant 0 : index
    %c1_20 = arith.constant 1 : index
    %39 = memref.load %arg1[%c0_19, %c1_20] : memref<2x16xf32, #tpu.memory_space<smem>>
    %40 = vector.broadcast %39 : f32 to vector<16x256xf32>
    %41 = arith.mulf %1, %40 : vector<16x256xf32>
    %c1_21 = arith.constant 1 : index
    %c1_22 = arith.constant 1 : index
    %42 = memref.load %arg1[%c1_21, %c1_22] : memref<2x16xf32, #tpu.memory_space<smem>>
    %43 = vector.broadcast %42 : f32 to vector<16x256xf32>
    %44 = arith.mulf %3, %43 : vector<16x256xf32>
    %45 = arith.addf %41, %44 : vector<16x256xf32>
    %c1_23 = arith.constant 1 : index
    %46 = memref.load %arg2[%c1_23] : memref<16xf32, #tpu.memory_space<smem>>
    %47 = vector.broadcast %46 : f32 to vector<16x256xf32>
    %48 = arith.addf %45, %47 : vector<16x256xf32>
    %49 = math.tanh %48 : vector<16x256xf32>
    %c1_24 = arith.constant 1 : index
    %c0_25 = arith.constant 0 : index
    %50 = memref.load %arg3[%c1_24, %c0_25] : memref<16x3xf32, #tpu.memory_space<smem>>
    %51 = vector.broadcast %50 : f32 to vector<16x256xf32>
    %52 = arith.mulf %49, %51 : vector<16x256xf32>
    %53 = arith.addf %30, %52 : vector<16x256xf32>
    %c1_26 = arith.constant 1 : index
    %c1_27 = arith.constant 1 : index
    %54 = memref.load %arg3[%c1_26, %c1_27] : memref<16x3xf32, #tpu.memory_space<smem>>
    %55 = vector.broadcast %54 : f32 to vector<16x256xf32>
    %56 = arith.mulf %49, %55 : vector<16x256xf32>
    %57 = arith.addf %34, %56 : vector<16x256xf32>
    %c1_28 = arith.constant 1 : index
    %c2_29 = arith.constant 2 : index
    %58 = memref.load %arg3[%c1_28, %c2_29] : memref<16x3xf32, #tpu.memory_space<smem>>
    %59 = vector.broadcast %58 : f32 to vector<16x256xf32>
    %60 = arith.mulf %49, %59 : vector<16x256xf32>
    %61 = arith.addf %38, %60 : vector<16x256xf32>
    %c0_30 = arith.constant 0 : index
    %c2_31 = arith.constant 2 : index
    %62 = memref.load %arg1[%c0_30, %c2_31] : memref<2x16xf32, #tpu.memory_space<smem>>
    %63 = vector.broadcast %62 : f32 to vector<16x256xf32>
    %64 = arith.mulf %1, %63 : vector<16x256xf32>
    %c1_32 = arith.constant 1 : index
    %c2_33 = arith.constant 2 : index
    %65 = memref.load %arg1[%c1_32, %c2_33] : memref<2x16xf32, #tpu.memory_space<smem>>
    %66 = vector.broadcast %65 : f32 to vector<16x256xf32>
    %67 = arith.mulf %3, %66 : vector<16x256xf32>
    %68 = arith.addf %64, %67 : vector<16x256xf32>
    %c2_34 = arith.constant 2 : index
    %69 = memref.load %arg2[%c2_34] : memref<16xf32, #tpu.memory_space<smem>>
    %70 = vector.broadcast %69 : f32 to vector<16x256xf32>
    %71 = arith.addf %68, %70 : vector<16x256xf32>
    %72 = math.tanh %71 : vector<16x256xf32>
    %c2_35 = arith.constant 2 : index
    %c0_36 = arith.constant 0 : index
    %73 = memref.load %arg3[%c2_35, %c0_36] : memref<16x3xf32, #tpu.memory_space<smem>>
    %74 = vector.broadcast %73 : f32 to vector<16x256xf32>
    %75 = arith.mulf %72, %74 : vector<16x256xf32>
    %76 = arith.addf %53, %75 : vector<16x256xf32>
    %c2_37 = arith.constant 2 : index
    %c1_38 = arith.constant 1 : index
    %77 = memref.load %arg3[%c2_37, %c1_38] : memref<16x3xf32, #tpu.memory_space<smem>>
    %78 = vector.broadcast %77 : f32 to vector<16x256xf32>
    %79 = arith.mulf %72, %78 : vector<16x256xf32>
    %80 = arith.addf %57, %79 : vector<16x256xf32>
    %c2_39 = arith.constant 2 : index
    %c2_40 = arith.constant 2 : index
    %81 = memref.load %arg3[%c2_39, %c2_40] : memref<16x3xf32, #tpu.memory_space<smem>>
    %82 = vector.broadcast %81 : f32 to vector<16x256xf32>
    %83 = arith.mulf %72, %82 : vector<16x256xf32>
    %84 = arith.addf %61, %83 : vector<16x256xf32>
    %c0_41 = arith.constant 0 : index
    %c3 = arith.constant 3 : index
    %85 = memref.load %arg1[%c0_41, %c3] : memref<2x16xf32, #tpu.memory_space<smem>>
    %86 = vector.broadcast %85 : f32 to vector<16x256xf32>
    %87 = arith.mulf %1, %86 : vector<16x256xf32>
    %c1_42 = arith.constant 1 : index
    %c3_43 = arith.constant 3 : index
    %88 = memref.load %arg1[%c1_42, %c3_43] : memref<2x16xf32, #tpu.memory_space<smem>>
    %89 = vector.broadcast %88 : f32 to vector<16x256xf32>
    %90 = arith.mulf %3, %89 : vector<16x256xf32>
    %91 = arith.addf %87, %90 : vector<16x256xf32>
    %c3_44 = arith.constant 3 : index
    %92 = memref.load %arg2[%c3_44] : memref<16xf32, #tpu.memory_space<smem>>
    %93 = vector.broadcast %92 : f32 to vector<16x256xf32>
    %94 = arith.addf %91, %93 : vector<16x256xf32>
    %95 = math.tanh %94 : vector<16x256xf32>
    %c3_45 = arith.constant 3 : index
    %c0_46 = arith.constant 0 : index
    %96 = memref.load %arg3[%c3_45, %c0_46] : memref<16x3xf32, #tpu.memory_space<smem>>
    %97 = vector.broadcast %96 : f32 to vector<16x256xf32>
    %98 = arith.mulf %95, %97 : vector<16x256xf32>
    %99 = arith.addf %76, %98 : vector<16x256xf32>
    %c3_47 = arith.constant 3 : index
    %c1_48 = arith.constant 1 : index
    %100 = memref.load %arg3[%c3_47, %c1_48] : memref<16x3xf32, #tpu.memory_space<smem>>
    %101 = vector.broadcast %100 : f32 to vector<16x256xf32>
    %102 = arith.mulf %95, %101 : vector<16x256xf32>
    %103 = arith.addf %80, %102 : vector<16x256xf32>
    %c3_49 = arith.constant 3 : index
    %c2_50 = arith.constant 2 : index
    %104 = memref.load %arg3[%c3_49, %c2_50] : memref<16x3xf32, #tpu.memory_space<smem>>
    %105 = vector.broadcast %104 : f32 to vector<16x256xf32>
    %106 = arith.mulf %95, %105 : vector<16x256xf32>
    %107 = arith.addf %84, %106 : vector<16x256xf32>
    %c0_51 = arith.constant 0 : index
    %c4 = arith.constant 4 : index
    %108 = memref.load %arg1[%c0_51, %c4] : memref<2x16xf32, #tpu.memory_space<smem>>
    %109 = vector.broadcast %108 : f32 to vector<16x256xf32>
    %110 = arith.mulf %1, %109 : vector<16x256xf32>
    %c1_52 = arith.constant 1 : index
    %c4_53 = arith.constant 4 : index
    %111 = memref.load %arg1[%c1_52, %c4_53] : memref<2x16xf32, #tpu.memory_space<smem>>
    %112 = vector.broadcast %111 : f32 to vector<16x256xf32>
    %113 = arith.mulf %3, %112 : vector<16x256xf32>
    %114 = arith.addf %110, %113 : vector<16x256xf32>
    %c4_54 = arith.constant 4 : index
    %115 = memref.load %arg2[%c4_54] : memref<16xf32, #tpu.memory_space<smem>>
    %116 = vector.broadcast %115 : f32 to vector<16x256xf32>
    %117 = arith.addf %114, %116 : vector<16x256xf32>
    %118 = math.tanh %117 : vector<16x256xf32>
    %c4_55 = arith.constant 4 : index
    %c0_56 = arith.constant 0 : index
    %119 = memref.load %arg3[%c4_55, %c0_56] : memref<16x3xf32, #tpu.memory_space<smem>>
    %120 = vector.broadcast %119 : f32 to vector<16x256xf32>
    %121 = arith.mulf %118, %120 : vector<16x256xf32>
    %122 = arith.addf %99, %121 : vector<16x256xf32>
    %c4_57 = arith.constant 4 : index
    %c1_58 = arith.constant 1 : index
    %123 = memref.load %arg3[%c4_57, %c1_58] : memref<16x3xf32, #tpu.memory_space<smem>>
    %124 = vector.broadcast %123 : f32 to vector<16x256xf32>
    %125 = arith.mulf %118, %124 : vector<16x256xf32>
    %126 = arith.addf %103, %125 : vector<16x256xf32>
    %c4_59 = arith.constant 4 : index
    %c2_60 = arith.constant 2 : index
    %127 = memref.load %arg3[%c4_59, %c2_60] : memref<16x3xf32, #tpu.memory_space<smem>>
    %128 = vector.broadcast %127 : f32 to vector<16x256xf32>
    %129 = arith.mulf %118, %128 : vector<16x256xf32>
    %130 = arith.addf %107, %129 : vector<16x256xf32>
    %c0_61 = arith.constant 0 : index
    %c5 = arith.constant 5 : index
    %131 = memref.load %arg1[%c0_61, %c5] : memref<2x16xf32, #tpu.memory_space<smem>>
    %132 = vector.broadcast %131 : f32 to vector<16x256xf32>
    %133 = arith.mulf %1, %132 : vector<16x256xf32>
    %c1_62 = arith.constant 1 : index
    %c5_63 = arith.constant 5 : index
    %134 = memref.load %arg1[%c1_62, %c5_63] : memref<2x16xf32, #tpu.memory_space<smem>>
    %135 = vector.broadcast %134 : f32 to vector<16x256xf32>
    %136 = arith.mulf %3, %135 : vector<16x256xf32>
    %137 = arith.addf %133, %136 : vector<16x256xf32>
    %c5_64 = arith.constant 5 : index
    %138 = memref.load %arg2[%c5_64] : memref<16xf32, #tpu.memory_space<smem>>
    %139 = vector.broadcast %138 : f32 to vector<16x256xf32>
    %140 = arith.addf %137, %139 : vector<16x256xf32>
    %141 = math.tanh %140 : vector<16x256xf32>
    %c5_65 = arith.constant 5 : index
    %c0_66 = arith.constant 0 : index
    %142 = memref.load %arg3[%c5_65, %c0_66] : memref<16x3xf32, #tpu.memory_space<smem>>
    %143 = vector.broadcast %142 : f32 to vector<16x256xf32>
    %144 = arith.mulf %141, %143 : vector<16x256xf32>
    %145 = arith.addf %122, %144 : vector<16x256xf32>
    %c5_67 = arith.constant 5 : index
    %c1_68 = arith.constant 1 : index
    %146 = memref.load %arg3[%c5_67, %c1_68] : memref<16x3xf32, #tpu.memory_space<smem>>
    %147 = vector.broadcast %146 : f32 to vector<16x256xf32>
    %148 = arith.mulf %141, %147 : vector<16x256xf32>
    %149 = arith.addf %126, %148 : vector<16x256xf32>
    %c5_69 = arith.constant 5 : index
    %c2_70 = arith.constant 2 : index
    %150 = memref.load %arg3[%c5_69, %c2_70] : memref<16x3xf32, #tpu.memory_space<smem>>
    %151 = vector.broadcast %150 : f32 to vector<16x256xf32>
    %152 = arith.mulf %141, %151 : vector<16x256xf32>
    %153 = arith.addf %130, %152 : vector<16x256xf32>
    %c0_71 = arith.constant 0 : index
    %c6 = arith.constant 6 : index
    %154 = memref.load %arg1[%c0_71, %c6] : memref<2x16xf32, #tpu.memory_space<smem>>
    %155 = vector.broadcast %154 : f32 to vector<16x256xf32>
    %156 = arith.mulf %1, %155 : vector<16x256xf32>
    %c1_72 = arith.constant 1 : index
    %c6_73 = arith.constant 6 : index
    %157 = memref.load %arg1[%c1_72, %c6_73] : memref<2x16xf32, #tpu.memory_space<smem>>
    %158 = vector.broadcast %157 : f32 to vector<16x256xf32>
    %159 = arith.mulf %3, %158 : vector<16x256xf32>
    %160 = arith.addf %156, %159 : vector<16x256xf32>
    %c6_74 = arith.constant 6 : index
    %161 = memref.load %arg2[%c6_74] : memref<16xf32, #tpu.memory_space<smem>>
    %162 = vector.broadcast %161 : f32 to vector<16x256xf32>
    %163 = arith.addf %160, %162 : vector<16x256xf32>
    %164 = math.tanh %163 : vector<16x256xf32>
    %c6_75 = arith.constant 6 : index
    %c0_76 = arith.constant 0 : index
    %165 = memref.load %arg3[%c6_75, %c0_76] : memref<16x3xf32, #tpu.memory_space<smem>>
    %166 = vector.broadcast %165 : f32 to vector<16x256xf32>
    %167 = arith.mulf %164, %166 : vector<16x256xf32>
    %168 = arith.addf %145, %167 : vector<16x256xf32>
    %c6_77 = arith.constant 6 : index
    %c1_78 = arith.constant 1 : index
    %169 = memref.load %arg3[%c6_77, %c1_78] : memref<16x3xf32, #tpu.memory_space<smem>>
    %170 = vector.broadcast %169 : f32 to vector<16x256xf32>
    %171 = arith.mulf %164, %170 : vector<16x256xf32>
    %172 = arith.addf %149, %171 : vector<16x256xf32>
    %c6_79 = arith.constant 6 : index
    %c2_80 = arith.constant 2 : index
    %173 = memref.load %arg3[%c6_79, %c2_80] : memref<16x3xf32, #tpu.memory_space<smem>>
    %174 = vector.broadcast %173 : f32 to vector<16x256xf32>
    %175 = arith.mulf %164, %174 : vector<16x256xf32>
    %176 = arith.addf %153, %175 : vector<16x256xf32>
    %c0_81 = arith.constant 0 : index
    %c7 = arith.constant 7 : index
    %177 = memref.load %arg1[%c0_81, %c7] : memref<2x16xf32, #tpu.memory_space<smem>>
    %178 = vector.broadcast %177 : f32 to vector<16x256xf32>
    %179 = arith.mulf %1, %178 : vector<16x256xf32>
    %c1_82 = arith.constant 1 : index
    %c7_83 = arith.constant 7 : index
    %180 = memref.load %arg1[%c1_82, %c7_83] : memref<2x16xf32, #tpu.memory_space<smem>>
    %181 = vector.broadcast %180 : f32 to vector<16x256xf32>
    %182 = arith.mulf %3, %181 : vector<16x256xf32>
    %183 = arith.addf %179, %182 : vector<16x256xf32>
    %c7_84 = arith.constant 7 : index
    %184 = memref.load %arg2[%c7_84] : memref<16xf32, #tpu.memory_space<smem>>
    %185 = vector.broadcast %184 : f32 to vector<16x256xf32>
    %186 = arith.addf %183, %185 : vector<16x256xf32>
    %187 = math.tanh %186 : vector<16x256xf32>
    %c7_85 = arith.constant 7 : index
    %c0_86 = arith.constant 0 : index
    %188 = memref.load %arg3[%c7_85, %c0_86] : memref<16x3xf32, #tpu.memory_space<smem>>
    %189 = vector.broadcast %188 : f32 to vector<16x256xf32>
    %190 = arith.mulf %187, %189 : vector<16x256xf32>
    %191 = arith.addf %168, %190 : vector<16x256xf32>
    %c7_87 = arith.constant 7 : index
    %c1_88 = arith.constant 1 : index
    %192 = memref.load %arg3[%c7_87, %c1_88] : memref<16x3xf32, #tpu.memory_space<smem>>
    %193 = vector.broadcast %192 : f32 to vector<16x256xf32>
    %194 = arith.mulf %187, %193 : vector<16x256xf32>
    %195 = arith.addf %172, %194 : vector<16x256xf32>
    %c7_89 = arith.constant 7 : index
    %c2_90 = arith.constant 2 : index
    %196 = memref.load %arg3[%c7_89, %c2_90] : memref<16x3xf32, #tpu.memory_space<smem>>
    %197 = vector.broadcast %196 : f32 to vector<16x256xf32>
    %198 = arith.mulf %187, %197 : vector<16x256xf32>
    %199 = arith.addf %176, %198 : vector<16x256xf32>
    %c0_91 = arith.constant 0 : index
    %c8 = arith.constant 8 : index
    %200 = memref.load %arg1[%c0_91, %c8] : memref<2x16xf32, #tpu.memory_space<smem>>
    %201 = vector.broadcast %200 : f32 to vector<16x256xf32>
    %202 = arith.mulf %1, %201 : vector<16x256xf32>
    %c1_92 = arith.constant 1 : index
    %c8_93 = arith.constant 8 : index
    %203 = memref.load %arg1[%c1_92, %c8_93] : memref<2x16xf32, #tpu.memory_space<smem>>
    %204 = vector.broadcast %203 : f32 to vector<16x256xf32>
    %205 = arith.mulf %3, %204 : vector<16x256xf32>
    %206 = arith.addf %202, %205 : vector<16x256xf32>
    %c8_94 = arith.constant 8 : index
    %207 = memref.load %arg2[%c8_94] : memref<16xf32, #tpu.memory_space<smem>>
    %208 = vector.broadcast %207 : f32 to vector<16x256xf32>
    %209 = arith.addf %206, %208 : vector<16x256xf32>
    %210 = math.tanh %209 : vector<16x256xf32>
    %c8_95 = arith.constant 8 : index
    %c0_96 = arith.constant 0 : index
    %211 = memref.load %arg3[%c8_95, %c0_96] : memref<16x3xf32, #tpu.memory_space<smem>>
    %212 = vector.broadcast %211 : f32 to vector<16x256xf32>
    %213 = arith.mulf %210, %212 : vector<16x256xf32>
    %214 = arith.addf %191, %213 : vector<16x256xf32>
    %c8_97 = arith.constant 8 : index
    %c1_98 = arith.constant 1 : index
    %215 = memref.load %arg3[%c8_97, %c1_98] : memref<16x3xf32, #tpu.memory_space<smem>>
    %216 = vector.broadcast %215 : f32 to vector<16x256xf32>
    %217 = arith.mulf %210, %216 : vector<16x256xf32>
    %218 = arith.addf %195, %217 : vector<16x256xf32>
    %c8_99 = arith.constant 8 : index
    %c2_100 = arith.constant 2 : index
    %219 = memref.load %arg3[%c8_99, %c2_100] : memref<16x3xf32, #tpu.memory_space<smem>>
    %220 = vector.broadcast %219 : f32 to vector<16x256xf32>
    %221 = arith.mulf %210, %220 : vector<16x256xf32>
    %222 = arith.addf %199, %221 : vector<16x256xf32>
    %c0_101 = arith.constant 0 : index
    %c9 = arith.constant 9 : index
    %223 = memref.load %arg1[%c0_101, %c9] : memref<2x16xf32, #tpu.memory_space<smem>>
    %224 = vector.broadcast %223 : f32 to vector<16x256xf32>
    %225 = arith.mulf %1, %224 : vector<16x256xf32>
    %c1_102 = arith.constant 1 : index
    %c9_103 = arith.constant 9 : index
    %226 = memref.load %arg1[%c1_102, %c9_103] : memref<2x16xf32, #tpu.memory_space<smem>>
    %227 = vector.broadcast %226 : f32 to vector<16x256xf32>
    %228 = arith.mulf %3, %227 : vector<16x256xf32>
    %229 = arith.addf %225, %228 : vector<16x256xf32>
    %c9_104 = arith.constant 9 : index
    %230 = memref.load %arg2[%c9_104] : memref<16xf32, #tpu.memory_space<smem>>
    %231 = vector.broadcast %230 : f32 to vector<16x256xf32>
    %232 = arith.addf %229, %231 : vector<16x256xf32>
    %233 = math.tanh %232 : vector<16x256xf32>
    %c9_105 = arith.constant 9 : index
    %c0_106 = arith.constant 0 : index
    %234 = memref.load %arg3[%c9_105, %c0_106] : memref<16x3xf32, #tpu.memory_space<smem>>
    %235 = vector.broadcast %234 : f32 to vector<16x256xf32>
    %236 = arith.mulf %233, %235 : vector<16x256xf32>
    %237 = arith.addf %214, %236 : vector<16x256xf32>
    %c9_107 = arith.constant 9 : index
    %c1_108 = arith.constant 1 : index
    %238 = memref.load %arg3[%c9_107, %c1_108] : memref<16x3xf32, #tpu.memory_space<smem>>
    %239 = vector.broadcast %238 : f32 to vector<16x256xf32>
    %240 = arith.mulf %233, %239 : vector<16x256xf32>
    %241 = arith.addf %218, %240 : vector<16x256xf32>
    %c9_109 = arith.constant 9 : index
    %c2_110 = arith.constant 2 : index
    %242 = memref.load %arg3[%c9_109, %c2_110] : memref<16x3xf32, #tpu.memory_space<smem>>
    %243 = vector.broadcast %242 : f32 to vector<16x256xf32>
    %244 = arith.mulf %233, %243 : vector<16x256xf32>
    %245 = arith.addf %222, %244 : vector<16x256xf32>
    %c0_111 = arith.constant 0 : index
    %c10 = arith.constant 10 : index
    %246 = memref.load %arg1[%c0_111, %c10] : memref<2x16xf32, #tpu.memory_space<smem>>
    %247 = vector.broadcast %246 : f32 to vector<16x256xf32>
    %248 = arith.mulf %1, %247 : vector<16x256xf32>
    %c1_112 = arith.constant 1 : index
    %c10_113 = arith.constant 10 : index
    %249 = memref.load %arg1[%c1_112, %c10_113] : memref<2x16xf32, #tpu.memory_space<smem>>
    %250 = vector.broadcast %249 : f32 to vector<16x256xf32>
    %251 = arith.mulf %3, %250 : vector<16x256xf32>
    %252 = arith.addf %248, %251 : vector<16x256xf32>
    %c10_114 = arith.constant 10 : index
    %253 = memref.load %arg2[%c10_114] : memref<16xf32, #tpu.memory_space<smem>>
    %254 = vector.broadcast %253 : f32 to vector<16x256xf32>
    %255 = arith.addf %252, %254 : vector<16x256xf32>
    %256 = math.tanh %255 : vector<16x256xf32>
    %c10_115 = arith.constant 10 : index
    %c0_116 = arith.constant 0 : index
    %257 = memref.load %arg3[%c10_115, %c0_116] : memref<16x3xf32, #tpu.memory_space<smem>>
    %258 = vector.broadcast %257 : f32 to vector<16x256xf32>
    %259 = arith.mulf %256, %258 : vector<16x256xf32>
    %260 = arith.addf %237, %259 : vector<16x256xf32>
    %c10_117 = arith.constant 10 : index
    %c1_118 = arith.constant 1 : index
    %261 = memref.load %arg3[%c10_117, %c1_118] : memref<16x3xf32, #tpu.memory_space<smem>>
    %262 = vector.broadcast %261 : f32 to vector<16x256xf32>
    %263 = arith.mulf %256, %262 : vector<16x256xf32>
    %264 = arith.addf %241, %263 : vector<16x256xf32>
    %c10_119 = arith.constant 10 : index
    %c2_120 = arith.constant 2 : index
    %265 = memref.load %arg3[%c10_119, %c2_120] : memref<16x3xf32, #tpu.memory_space<smem>>
    %266 = vector.broadcast %265 : f32 to vector<16x256xf32>
    %267 = arith.mulf %256, %266 : vector<16x256xf32>
    %268 = arith.addf %245, %267 : vector<16x256xf32>
    %c0_121 = arith.constant 0 : index
    %c11 = arith.constant 11 : index
    %269 = memref.load %arg1[%c0_121, %c11] : memref<2x16xf32, #tpu.memory_space<smem>>
    %270 = vector.broadcast %269 : f32 to vector<16x256xf32>
    %271 = arith.mulf %1, %270 : vector<16x256xf32>
    %c1_122 = arith.constant 1 : index
    %c11_123 = arith.constant 11 : index
    %272 = memref.load %arg1[%c1_122, %c11_123] : memref<2x16xf32, #tpu.memory_space<smem>>
    %273 = vector.broadcast %272 : f32 to vector<16x256xf32>
    %274 = arith.mulf %3, %273 : vector<16x256xf32>
    %275 = arith.addf %271, %274 : vector<16x256xf32>
    %c11_124 = arith.constant 11 : index
    %276 = memref.load %arg2[%c11_124] : memref<16xf32, #tpu.memory_space<smem>>
    %277 = vector.broadcast %276 : f32 to vector<16x256xf32>
    %278 = arith.addf %275, %277 : vector<16x256xf32>
    %279 = math.tanh %278 : vector<16x256xf32>
    %c11_125 = arith.constant 11 : index
    %c0_126 = arith.constant 0 : index
    %280 = memref.load %arg3[%c11_125, %c0_126] : memref<16x3xf32, #tpu.memory_space<smem>>
    %281 = vector.broadcast %280 : f32 to vector<16x256xf32>
    %282 = arith.mulf %279, %281 : vector<16x256xf32>
    %283 = arith.addf %260, %282 : vector<16x256xf32>
    %c11_127 = arith.constant 11 : index
    %c1_128 = arith.constant 1 : index
    %284 = memref.load %arg3[%c11_127, %c1_128] : memref<16x3xf32, #tpu.memory_space<smem>>
    %285 = vector.broadcast %284 : f32 to vector<16x256xf32>
    %286 = arith.mulf %279, %285 : vector<16x256xf32>
    %287 = arith.addf %264, %286 : vector<16x256xf32>
    %c11_129 = arith.constant 11 : index
    %c2_130 = arith.constant 2 : index
    %288 = memref.load %arg3[%c11_129, %c2_130] : memref<16x3xf32, #tpu.memory_space<smem>>
    %289 = vector.broadcast %288 : f32 to vector<16x256xf32>
    %290 = arith.mulf %279, %289 : vector<16x256xf32>
    %291 = arith.addf %268, %290 : vector<16x256xf32>
    %c0_131 = arith.constant 0 : index
    %c12 = arith.constant 12 : index
    %292 = memref.load %arg1[%c0_131, %c12] : memref<2x16xf32, #tpu.memory_space<smem>>
    %293 = vector.broadcast %292 : f32 to vector<16x256xf32>
    %294 = arith.mulf %1, %293 : vector<16x256xf32>
    %c1_132 = arith.constant 1 : index
    %c12_133 = arith.constant 12 : index
    %295 = memref.load %arg1[%c1_132, %c12_133] : memref<2x16xf32, #tpu.memory_space<smem>>
    %296 = vector.broadcast %295 : f32 to vector<16x256xf32>
    %297 = arith.mulf %3, %296 : vector<16x256xf32>
    %298 = arith.addf %294, %297 : vector<16x256xf32>
    %c12_134 = arith.constant 12 : index
    %299 = memref.load %arg2[%c12_134] : memref<16xf32, #tpu.memory_space<smem>>
    %300 = vector.broadcast %299 : f32 to vector<16x256xf32>
    %301 = arith.addf %298, %300 : vector<16x256xf32>
    %302 = math.tanh %301 : vector<16x256xf32>
    %c12_135 = arith.constant 12 : index
    %c0_136 = arith.constant 0 : index
    %303 = memref.load %arg3[%c12_135, %c0_136] : memref<16x3xf32, #tpu.memory_space<smem>>
    %304 = vector.broadcast %303 : f32 to vector<16x256xf32>
    %305 = arith.mulf %302, %304 : vector<16x256xf32>
    %306 = arith.addf %283, %305 : vector<16x256xf32>
    %c12_137 = arith.constant 12 : index
    %c1_138 = arith.constant 1 : index
    %307 = memref.load %arg3[%c12_137, %c1_138] : memref<16x3xf32, #tpu.memory_space<smem>>
    %308 = vector.broadcast %307 : f32 to vector<16x256xf32>
    %309 = arith.mulf %302, %308 : vector<16x256xf32>
    %310 = arith.addf %287, %309 : vector<16x256xf32>
    %c12_139 = arith.constant 12 : index
    %c2_140 = arith.constant 2 : index
    %311 = memref.load %arg3[%c12_139, %c2_140] : memref<16x3xf32, #tpu.memory_space<smem>>
    %312 = vector.broadcast %311 : f32 to vector<16x256xf32>
    %313 = arith.mulf %302, %312 : vector<16x256xf32>
    %314 = arith.addf %291, %313 : vector<16x256xf32>
    %c0_141 = arith.constant 0 : index
    %c13 = arith.constant 13 : index
    %315 = memref.load %arg1[%c0_141, %c13] : memref<2x16xf32, #tpu.memory_space<smem>>
    %316 = vector.broadcast %315 : f32 to vector<16x256xf32>
    %317 = arith.mulf %1, %316 : vector<16x256xf32>
    %c1_142 = arith.constant 1 : index
    %c13_143 = arith.constant 13 : index
    %318 = memref.load %arg1[%c1_142, %c13_143] : memref<2x16xf32, #tpu.memory_space<smem>>
    %319 = vector.broadcast %318 : f32 to vector<16x256xf32>
    %320 = arith.mulf %3, %319 : vector<16x256xf32>
    %321 = arith.addf %317, %320 : vector<16x256xf32>
    %c13_144 = arith.constant 13 : index
    %322 = memref.load %arg2[%c13_144] : memref<16xf32, #tpu.memory_space<smem>>
    %323 = vector.broadcast %322 : f32 to vector<16x256xf32>
    %324 = arith.addf %321, %323 : vector<16x256xf32>
    %325 = math.tanh %324 : vector<16x256xf32>
    %c13_145 = arith.constant 13 : index
    %c0_146 = arith.constant 0 : index
    %326 = memref.load %arg3[%c13_145, %c0_146] : memref<16x3xf32, #tpu.memory_space<smem>>
    %327 = vector.broadcast %326 : f32 to vector<16x256xf32>
    %328 = arith.mulf %325, %327 : vector<16x256xf32>
    %329 = arith.addf %306, %328 : vector<16x256xf32>
    %c13_147 = arith.constant 13 : index
    %c1_148 = arith.constant 1 : index
    %330 = memref.load %arg3[%c13_147, %c1_148] : memref<16x3xf32, #tpu.memory_space<smem>>
    %331 = vector.broadcast %330 : f32 to vector<16x256xf32>
    %332 = arith.mulf %325, %331 : vector<16x256xf32>
    %333 = arith.addf %310, %332 : vector<16x256xf32>
    %c13_149 = arith.constant 13 : index
    %c2_150 = arith.constant 2 : index
    %334 = memref.load %arg3[%c13_149, %c2_150] : memref<16x3xf32, #tpu.memory_space<smem>>
    %335 = vector.broadcast %334 : f32 to vector<16x256xf32>
    %336 = arith.mulf %325, %335 : vector<16x256xf32>
    %337 = arith.addf %314, %336 : vector<16x256xf32>
    %c0_151 = arith.constant 0 : index
    %c14 = arith.constant 14 : index
    %338 = memref.load %arg1[%c0_151, %c14] : memref<2x16xf32, #tpu.memory_space<smem>>
    %339 = vector.broadcast %338 : f32 to vector<16x256xf32>
    %340 = arith.mulf %1, %339 : vector<16x256xf32>
    %c1_152 = arith.constant 1 : index
    %c14_153 = arith.constant 14 : index
    %341 = memref.load %arg1[%c1_152, %c14_153] : memref<2x16xf32, #tpu.memory_space<smem>>
    %342 = vector.broadcast %341 : f32 to vector<16x256xf32>
    %343 = arith.mulf %3, %342 : vector<16x256xf32>
    %344 = arith.addf %340, %343 : vector<16x256xf32>
    %c14_154 = arith.constant 14 : index
    %345 = memref.load %arg2[%c14_154] : memref<16xf32, #tpu.memory_space<smem>>
    %346 = vector.broadcast %345 : f32 to vector<16x256xf32>
    %347 = arith.addf %344, %346 : vector<16x256xf32>
    %348 = math.tanh %347 : vector<16x256xf32>
    %c14_155 = arith.constant 14 : index
    %c0_156 = arith.constant 0 : index
    %349 = memref.load %arg3[%c14_155, %c0_156] : memref<16x3xf32, #tpu.memory_space<smem>>
    %350 = vector.broadcast %349 : f32 to vector<16x256xf32>
    %351 = arith.mulf %348, %350 : vector<16x256xf32>
    %352 = arith.addf %329, %351 : vector<16x256xf32>
    %c14_157 = arith.constant 14 : index
    %c1_158 = arith.constant 1 : index
    %353 = memref.load %arg3[%c14_157, %c1_158] : memref<16x3xf32, #tpu.memory_space<smem>>
    %354 = vector.broadcast %353 : f32 to vector<16x256xf32>
    %355 = arith.mulf %348, %354 : vector<16x256xf32>
    %356 = arith.addf %333, %355 : vector<16x256xf32>
    %c14_159 = arith.constant 14 : index
    %c2_160 = arith.constant 2 : index
    %357 = memref.load %arg3[%c14_159, %c2_160] : memref<16x3xf32, #tpu.memory_space<smem>>
    %358 = vector.broadcast %357 : f32 to vector<16x256xf32>
    %359 = arith.mulf %348, %358 : vector<16x256xf32>
    %360 = arith.addf %337, %359 : vector<16x256xf32>
    %c0_161 = arith.constant 0 : index
    %c15 = arith.constant 15 : index
    %361 = memref.load %arg1[%c0_161, %c15] : memref<2x16xf32, #tpu.memory_space<smem>>
    %362 = vector.broadcast %361 : f32 to vector<16x256xf32>
    %363 = arith.mulf %1, %362 : vector<16x256xf32>
    %c1_162 = arith.constant 1 : index
    %c15_163 = arith.constant 15 : index
    %364 = memref.load %arg1[%c1_162, %c15_163] : memref<2x16xf32, #tpu.memory_space<smem>>
    %365 = vector.broadcast %364 : f32 to vector<16x256xf32>
    %366 = arith.mulf %3, %365 : vector<16x256xf32>
    %367 = arith.addf %363, %366 : vector<16x256xf32>
    %c15_164 = arith.constant 15 : index
    %368 = memref.load %arg2[%c15_164] : memref<16xf32, #tpu.memory_space<smem>>
    %369 = vector.broadcast %368 : f32 to vector<16x256xf32>
    %370 = arith.addf %367, %369 : vector<16x256xf32>
    %371 = math.tanh %370 : vector<16x256xf32>
    %c15_165 = arith.constant 15 : index
    %c0_166 = arith.constant 0 : index
    %372 = memref.load %arg3[%c15_165, %c0_166] : memref<16x3xf32, #tpu.memory_space<smem>>
    %373 = vector.broadcast %372 : f32 to vector<16x256xf32>
    %374 = arith.mulf %371, %373 : vector<16x256xf32>
    %375 = arith.addf %352, %374 : vector<16x256xf32>
    %c15_167 = arith.constant 15 : index
    %c1_168 = arith.constant 1 : index
    %376 = memref.load %arg3[%c15_167, %c1_168] : memref<16x3xf32, #tpu.memory_space<smem>>
    %377 = vector.broadcast %376 : f32 to vector<16x256xf32>
    %378 = arith.mulf %371, %377 : vector<16x256xf32>
    %379 = arith.addf %356, %378 : vector<16x256xf32>
    %c15_169 = arith.constant 15 : index
    %c2_170 = arith.constant 2 : index
    %380 = memref.load %arg3[%c15_169, %c2_170] : memref<16x3xf32, #tpu.memory_space<smem>>
    %381 = vector.broadcast %380 : f32 to vector<16x256xf32>
    %382 = arith.mulf %371, %381 : vector<16x256xf32>
    %383 = arith.addf %360, %382 : vector<16x256xf32>
    %384 = math.tanh %375 : vector<16x256xf32>
    %cst_171 = arith.constant 2.000000e+00 : f32
    %385 = vector.broadcast %cst_171 : f32 to vector<16x256xf32>
    %386 = arith.mulf %384, %385 : vector<16x256xf32>
    %c0_172 = arith.constant 0 : index
    %c0_173 = arith.constant 0 : index
    %c0_174 = arith.constant 0 : index
    %c0_175 = arith.constant 0 : index
    %387 = vector.load %arg7[%c0_172, %c0_173, %c0_174, %c0_175] : memref<1x3x16x256xf32, #tpu.memory_space<vmem>>, vector<1x1x16x256xf32>
    %388 = vector.shape_cast %387 : vector<1x1x16x256xf32> to vector<16x256xf32>
    %389 = vector.shape_cast %386 : vector<16x256xf32> to vector<1x1x16x256xf32>
    tpu.vector_store %arg7[%c0_172, %c0_173, %c0_174, %c0_175], %389 {strides = array<i32>} : memref<1x3x16x256xf32, #tpu.memory_space<vmem>>, vector<1x1x16x256xf32>,
    %390 = math.tanh %379 : vector<16x256xf32>
    %cst_176 = arith.constant 2.000000e+00 : f32
    %391 = vector.broadcast %cst_176 : f32 to vector<16x256xf32>
    %392 = arith.mulf %390, %391 : vector<16x256xf32>
    %c0_177 = arith.constant 0 : index
    %c1_178 = arith.constant 1 : index
    %c0_179 = arith.constant 0 : index
    %c0_180 = arith.constant 0 : index
    %393 = vector.load %arg7[%c0_177, %c1_178, %c0_179, %c0_180] : memref<1x3x16x256xf32, #tpu.memory_space<vmem>>, vector<1x1x16x256xf32>
    %394 = vector.shape_cast %393 : vector<1x1x16x256xf32> to vector<16x256xf32>
    %395 = vector.shape_cast %392 : vector<16x256xf32> to vector<1x1x16x256xf32>
    tpu.vector_store %arg7[%c0_177, %c1_178, %c0_179, %c0_180], %395 {strides = array<i32>} : memref<1x3x16x256xf32, #tpu.memory_space<vmem>>, vector<1x1x16x256xf32>,
    %396 = math.tanh %383 : vector<16x256xf32>
    %cst_181 = arith.constant 2.000000e+00 : f32
    %397 = vector.broadcast %cst_181 : f32 to vector<16x256xf32>
    %398 = arith.mulf %396, %397 : vector<16x256xf32>
    %c0_182 = arith.constant 0 : index
    %c2_183 = arith.constant 2 : index
    %c0_184 = arith.constant 0 : index
    %c0_185 = arith.constant 0 : index
    %399 = vector.load %arg7[%c0_182, %c2_183, %c0_184, %c0_185] : memref<1x3x16x256xf32, #tpu.memory_space<vmem>>, vector<1x1x16x256xf32>
    %400 = vector.shape_cast %399 : vector<1x1x16x256xf32> to vector<16x256xf32>
    %401 = vector.shape_cast %398 : vector<16x256xf32> to vector<1x1x16x256xf32>
    tpu.vector_store %arg7[%c0_182, %c2_183, %c0_184, %c0_185], %401 {strides = array<i32>} : memref<1x3x16x256xf32, #tpu.memory_space<vmem>>, vector<1x1x16x256xf32>,
    return
  }
  func.func @transform_0(%arg0: i32) -> (i32, i32) {
    %c0_i32 = arith.constant 0 : i32
    %c0_i32_0 = arith.constant 0 : i32
    %c0_i32_1 = arith.constant 0 : i32
    return %c0_i32, %c0_i32_0 : i32, i32
  }
  func.func @transform_1(%arg0: i32) -> i32 {
    %c0_i32 = arith.constant 0 : i32
    %c0_i32_0 = arith.constant 0 : i32
    return %c0_i32 : i32
  }
  func.func @transform_2(%arg0: i32) -> (i32, i32) {
    %c0_i32 = arith.constant 0 : i32
    %c0_i32_0 = arith.constant 0 : i32
    %c0_i32_1 = arith.constant 0 : i32
    return %c0_i32, %c0_i32_0 : i32, i32
  }
  func.func @transform_3(%arg0: i32) -> i32 {
    %c0_i32 = arith.constant 0 : i32
    %c0_i32_0 = arith.constant 0 : i32
    return %c0_i32 : i32
  }
  func.func @transform_4(%arg0: i32) -> (i32, i32, i32) {
    %c0_i32 = arith.constant 0 : i32
    %c0_i32_0 = arith.constant 0 : i32
    %c0_i32_1 = arith.constant 0 : i32
    return %arg0, %c0_i32, %c0_i32_0 : i32, i32, i32
  }
  func.func @transform_5(%arg0: i32) -> (i32, i32, i32) {
    %c0_i32 = arith.constant 0 : i32
    %c0_i32_0 = arith.constant 0 : i32
    %c0_i32_1 = arith.constant 0 : i32
    return %arg0, %c0_i32, %c0_i32_0 : i32, i32, i32
  }
  func.func @transform_6(%arg0: i32) -> (i32, i32, i32, i32) {
    %c0_i32 = arith.constant 0 : i32
    %c0_i32_0 = arith.constant 0 : i32
    %c0_i32_1 = arith.constant 0 : i32
    %c0_i32_2 = arith.constant 0 : i32
    return %arg0, %c0_i32, %c0_i32_0, %c0_i32_1 : i32, i32, i32, i32
  }
}

module attributes {stable_mosaic.version = 11 : i64} {
  func.func @_flow_mlp_kernel(%arg0: i32, %arg1: memref<2x16xf32, #tpu.memory_space<smem>>, %arg2: memref<16xf32, #tpu.memory_space<smem>>, %arg3: memref<16x3xf32, #tpu.memory_space<smem>>, %arg4: memref<3xf32, #tpu.memory_space<smem>>, %arg5: memref<1x16x256xf32, #tpu.memory_space<vmem>>, %arg6: memref<1x16x256xf32, #tpu.memory_space<vmem>>, %arg7: memref<1x3x16x256xf32, #tpu.memory_space<vmem>>) attributes {dimension_semantics = [#tpu.dimension_semantics<parallel>], iteration_bounds = array<i64: 2>, scalar_prefetch = 0 : i64, scratch_operands = 0 : i64, tpu.core_type = #tpu.core_type<tc>, window_params = [{transform_indices = @transform_0, window_bounds = array<i64: 2, 16>}, {transform_indices = @transform_1, window_bounds = array<i64: 16>}, {transform_indices = @transform_2, window_bounds = array<i64: 16, 3>}, {transform_indices = @transform_3, window_bounds = array<i64: 3>}, {transform_indices = @transform_4, window_bounds = array<i64: 1, 16, 256>}, {transform_indices = @transform_5, window_bounds = array<i64: 1, 16, 256>}, {transform_indices = @transform_6, window_bounds = array<i64: 1, 3, 16, 256>}]} {
    %c0 = arith.constant 0 : index
    %c0_0 = arith.constant 0 : index
    %c0_1 = arith.constant 0 : index
    %0 = vector.load %arg5[%c0, %c0_0, %c0_1] : memref<1x16x256xf32, #tpu.memory_space<vmem>>, vector<1x16x256xf32>
    %1 = vector.shape_cast %0 : vector<1x16x256xf32> to vector<16x256xf32>
    %c0_2 = arith.constant 0 : index
    %c0_3 = arith.constant 0 : index
    %c0_4 = arith.constant 0 : index
    %2 = vector.load %arg6[%c0_2, %c0_3, %c0_4] : memref<1x16x256xf32, #tpu.memory_space<vmem>>, vector<1x16x256xf32>
    %3 = vector.shape_cast %2 : vector<1x16x256xf32> to vector<16x256xf32>
    %cst = arith.constant 0.000000e+00 : f32
    %4 = vector.broadcast %cst : f32 to vector<16x256xf32>
    %c0_5 = arith.constant 0 : index
    %5 = memref.load %arg4[%c0_5] : memref<3xf32, #tpu.memory_space<smem>>
    %6 = vector.broadcast %5 : f32 to vector<16x256xf32>
    %7 = arith.addf %4, %6 : vector<16x256xf32>
    %cst_6 = arith.constant 0.000000e+00 : f32
    %8 = vector.broadcast %cst_6 : f32 to vector<16x256xf32>
    %c1 = arith.constant 1 : index
    %9 = memref.load %arg4[%c1] : memref<3xf32, #tpu.memory_space<smem>>
    %10 = vector.broadcast %9 : f32 to vector<16x256xf32>
    %11 = arith.addf %8, %10 : vector<16x256xf32>
    %cst_7 = arith.constant 0.000000e+00 : f32
    %12 = vector.broadcast %cst_7 : f32 to vector<16x256xf32>
    %c2 = arith.constant 2 : index
    %13 = memref.load %arg4[%c2] : memref<3xf32, #tpu.memory_space<smem>>
    %14 = vector.broadcast %13 : f32 to vector<16x256xf32>
    %15 = arith.addf %12, %14 : vector<16x256xf32>
    %c0_8 = arith.constant 0 : index
    %c0_9 = arith.constant 0 : index
    %16 = memref.load %arg1[%c0_8, %c0_9] : memref<2x16xf32, #tpu.memory_space<smem>>
    %17 = vector.broadcast %16 : f32 to vector<16x256xf32>
    %18 = arith.mulf %1, %17 : vector<16x256xf32>
    %c1_10 = arith.constant 1 : index
    %c0_11 = arith.constant 0 : index
    %19 = memref.load %arg1[%c1_10, %c0_11] : memref<2x16xf32, #tpu.memory_space<smem>>
    %20 = vector.broadcast %19 : f32 to vector<16x256xf32>
    %21 = arith.mulf %3, %20 : vector<16x256xf32>
    %22 = arith.addf %18, %21 : vector<16x256xf32>
    %c0_12 = arith.constant 0 : index
    %23 = memref.load %arg2[%c0_12] : memref<16xf32, #tpu.memory_space<smem>>
    %24 = vector.broadcast %23 : f32 to vector<16x256xf32>
    %25 = arith.addf %22, %24 : vector<16x256xf32>
    %26 = math.tanh %25 : vector<16x256xf32>
    %c0_13 = arith.constant 0 : index
    %c0_14 = arith.constant 0 : index
    %27 = memref.load %arg3[%c0_13, %c0_14] : memref<16x3xf32, #tpu.memory_space<smem>>
    %28 = vector.broadcast %27 : f32 to vector<16x256xf32>
    %29 = arith.mulf %26, %28 : vector<16x256xf32>
    %30 = arith.addf %7, %29 : vector<16x256xf32>
    %c0_15 = arith.constant 0 : index
    %c1_16 = arith.constant 1 : index
    %31 = memref.load %arg3[%c0_15, %c1_16] : memref<16x3xf32, #tpu.memory_space<smem>>
    %32 = vector.broadcast %31 : f32 to vector<16x256xf32>
    %33 = arith.mulf %26, %32 : vector<16x256xf32>
    %34 = arith.addf %11, %33 : vector<16x256xf32>
    %c0_17 = arith.constant 0 : index
    %c2_18 = arith.constant 2 : index
    %35 = memref.load %arg3[%c0_17, %c2_18] : memref<16x3xf32, #tpu.memory_space<smem>>
    %36 = vector.broadcast %35 : f32 to vector<16x256xf32>
    %37 = arith.mulf %26, %36 : vector<16x256xf32>
    %38 = arith.addf %15, %37 : vector<16x256xf32>
    %c0_19 = arith.constant 0 : index
    %c1_20 = arith.constant 1 : index
    %39 = memref.load %arg1[%c0_19, %c1_20] : memref<2x16xf32, #tpu.memory_space<smem>>
    %40 = vector.broadcast %39 : f32 to vector<16x256xf32>
    %41 = arith.mulf %1, %40 : vector<16x256xf32>
    %c1_21 = arith.constant 1 : index
    %c1_22 = arith.constant 1 : index
    %42 = memref.load %arg1[%c1_21, %c1_22] : memref<2x16xf32, #tpu.memory_space<smem>>
    %43 = vector.broadcast %42 : f32 to vector<16x256xf32>
    %44 = arith.mulf %3, %43 : vector<16x256xf32>
    %45 = arith.addf %41, %44 : vector<16x256xf32>
    %c1_23 = arith.constant 1 : index
    %46 = memref.load %arg2[%c1_23] : memref<16xf32, #tpu.memory_space<smem>>
    %47 = vector.broadcast %46 : f32 to vector<16x256xf32>
    %48 = arith.addf %45, %47 : vector<16x256xf32>
    %49 = math.tanh %48 : vector<16x256xf32>
    %c1_24 = arith.constant 1 : index
    %c0_25 = arith.constant 0 : index
    %50 = memref.load %arg3[%c1_24, %c0_25] : memref<16x3xf32, #tpu.memory_space<smem>>
    %51 = vector.broadcast %50 : f32 to vector<16x256xf32>
    %52 = arith.mulf %49, %51 : vector<16x256xf32>
    %53 = arith.addf %30, %52 : vector<16x256xf32>
    %c1_26 = arith.constant 1 : index
    %c1_27 = arith.constant 1 : index
    %54 = memref.load %arg3[%c1_26, %c1_27] : memref<16x3xf32, #tpu.memory_space<smem>>
    %55 = vector.broadcast %54 : f32 to vector<16x256xf32>
    %56 = arith.mulf %49, %55 : vector<16x256xf32>
    %57 = arith.addf %34, %56 : vector<16x256xf32>
    %c1_28 = arith.constant 1 : index
    %c2_29 = arith.constant 2 : index
    %58 = memref.load %arg3[%c1_28, %c2_29] : memref<16x3xf32, #tpu.memory_space<smem>>
    %59 = vector.broadcast %58 : f32 to vector<16x256xf32>
    %60 = arith.mulf %49, %59 : vector<16x256xf32>
    %61 = arith.addf %38, %60 : vector<16x256xf32>
    %c0_30 = arith.constant 0 : index
    %c2_31 = arith.constant 2 : index
    %62 = memref.load %arg1[%c0_30, %c2_31] : memref<2x16xf32, #tpu.memory_space<smem>>
    %63 = vector.broadcast %62 : f32 to vector<16x256xf32>
    %64 = arith.mulf %1, %63 : vector<16x256xf32>
    %c1_32 = arith.constant 1 : index
    %c2_33 = arith.constant 2 : index
    %65 = memref.load %arg1[%c1_32, %c2_33] : memref<2x16xf32, #tpu.memory_space<smem>>
    %66 = vector.broadcast %65 : f32 to vector<16x256xf32>
    %67 = arith.mulf %3, %66 : vector<16x256xf32>
    %68 = arith.addf %64, %67 : vector<16x256xf32>
    %c2_34 = arith.constant 2 : index
    %69 = memref.load %arg2[%c2_34] : memref<16xf32, #tpu.memory_space<smem>>
    %70 = vector.broadcast %69 : f32 to vector<16x256xf32>
    %71 = arith.addf %68, %70 : vector<16x256xf32>
    %72 = math.tanh %71 : vector<16x256xf32>
    %c2_35 = arith.constant 2 : index
    %c0_36 = arith.constant 0 : index
    %73 = memref.load %arg3[%c2_35, %c0_36] : memref<16x3xf32, #tpu.memory_space<smem>>
    %74 = vector.broadcast %73 : f32 to vector<16x256xf32>
    %75 = arith.mulf %72, %74 : vector<16x256xf32>
    %76 = arith.addf %53, %75 : vector<16x256xf32>
    %c2_37 = arith.constant 2 : index
    %c1_38 = arith.constant 1 : index
    %77 = memref.load %arg3[%c2_37, %c1_38] : memref<16x3xf32, #tpu.memory_space<smem>>
    %78 = vector.broadcast %77 : f32 to vector<16x256xf32>
    %79 = arith.mulf %72, %78 : vector<16x256xf32>
    %80 = arith.addf %57, %79 : vector<16x256xf32>
    %c2_39 = arith.constant 2 : index
    %c2_40 = arith.constant 2 : index
    %81 = memref.load %arg3[%c2_39, %c2_40] : memref<16x3xf32, #tpu.memory_space<smem>>
    %82 = vector.broadcast %81 : f32 to vector<16x256xf32>
    %83 = arith.mulf %72, %82 : vector<16x256xf32>
    %84 = arith.addf %61, %83 : vector<16x256xf32>
    %c0_41 = arith.constant 0 : index
    %c3 = arith.constant 3 : index
    %85 = memref.load %arg1[%c0_41, %c3] : memref<2x16xf32, #tpu.memory_space<smem>>
    %86 = vector.broadcast %85 : f32 to vector<16x256xf32>
    %87 = arith.mulf %1, %86 : vector<16x256xf32>
    %c1_42 = arith.constant 1 : index
    %c3_43 = arith.constant 3 : index
    %88 = memref.load %arg1[%c1_42, %c3_43] : memref<2x16xf32, #tpu.memory_space<smem>>
    %89 = vector.broadcast %88 : f32 to vector<16x256xf32>
    %90 = arith.mulf %3, %89 : vector<16x256xf32>
    %91 = arith.addf %87, %90 : vector<16x256xf32>
    %c3_44 = arith.constant 3 : index
    %92 = memref.load %arg2[%c3_44] : memref<16xf32, #tpu.memory_space<smem>>
    %93 = vector.broadcast %92 : f32 to vector<16x256xf32>
    %94 = arith.addf %91, %93 : vector<16x256xf32>
    %95 = math.tanh %94 : vector<16x256xf32>
    %c3_45 = arith.constant 3 : index
    %c0_46 = arith.constant 0 : index
    %96 = memref.load %arg3[%c3_45, %c0_46] : memref<16x3xf32, #tpu.memory_space<smem>>
    %97 = vector.broadcast %96 : f32 to vector<16x256xf32>
    %98 = arith.mulf %95, %97 : vector<16x256xf32>
    %99 = arith.addf %76, %98 : vector<16x256xf32>
    %c3_47 = arith.constant 3 : index
    %c1_48 = arith.constant 1 : index
    %100 = memref.load %arg3[%c3_47, %c1_48] : memref<16x3xf32, #tpu.memory_space<smem>>
    %101 = vector.broadcast %100 : f32 to vector<16x256xf32>
    %102 = arith.mulf %95, %101 : vector<16x256xf32>
    %103 = arith.addf %80, %102 : vector<16x256xf32>
    %c3_49 = arith.constant 3 : index
    %c2_50 = arith.constant 2 : index
    %104 = memref.load %arg3[%c3_49, %c2_50] : memref<16x3xf32, #tpu.memory_space<smem>>
    %105 = vector.broadcast %104 : f32 to vector<16x256xf32>
    %106 = arith.mulf %95, %105 : vector<16x256xf32>
    %107 = arith.addf %84, %106 : vector<16x256xf32>
    %c0_51 = arith.constant 0 : index
    %c4 = arith.constant 4 : index
    %108 = memref.load %arg1[%c0_51, %c4] : memref<2x16xf32, #tpu.memory_space<smem>>
    %109 = vector.broadcast %108 : f32 to vector<16x256xf32>
    %110 = arith.mulf %1, %109 : vector<16x256xf32>
    %c1_52 = arith.constant 1 : index
    %c4_53 = arith.constant 4 : index
    %111 = memref.load %arg1[%c1_52, %c4_53] : memref<2x16xf32, #tpu.memory_space<smem>>
    %112 = vector.broadcast %111 : f32 to vector<16x256xf32>
    %113 = arith.mulf %3, %112 : vector<16x256xf32>
    %114 = arith.addf %110, %113 : vector<16x256xf32>
    %c4_54 = arith.constant 4 : index
    %115 = memref.load %arg2[%c4_54] : memref<16xf32, #tpu.memory_space<smem>>
    %116 = vector.broadcast %115 : f32 to vector<16x256xf32>
    %117 = arith.addf %114, %116 : vector<16x256xf32>
    %118 = math.tanh %117 : vector<16x256xf32>
    %c4_55 = arith.constant 4 : index
    %c0_56 = arith.constant 0 : index
    %119 = memref.load %arg3[%c4_55, %c0_56] : memref<16x3xf32, #tpu.memory_space<smem>>
    %120 = vector.broadcast %119 : f32 to vector<16x256xf32>
    %121 = arith.mulf %118, %120 : vector<16x256xf32>
    %122 = arith.addf %99, %121 : vector<16x256xf32>
    %c4_57 = arith.constant 4 : index
    %c1_58 = arith.constant 1 : index
    %123 = memref.load %arg3[%c4_57, %c1_58] : memref<16x3xf32, #tpu.memory_space<smem>>
    %124 = vector.broadcast %123 : f32 to vector<16x256xf32>
    %125 = arith.mulf %118, %124 : vector<16x256xf32>
    %126 = arith.addf %103, %125 : vector<16x256xf32>
    %c4_59 = arith.constant 4 : index
    %c2_60 = arith.constant 2 : index
    %127 = memref.load %arg3[%c4_59, %c2_60] : memref<16x3xf32, #tpu.memory_space<smem>>
    %128 = vector.broadcast %127 : f32 to vector<16x256xf32>
    %129 = arith.mulf %118, %128 : vector<16x256xf32>
    %130 = arith.addf %107, %129 : vector<16x256xf32>
    %c0_61 = arith.constant 0 : index
    %c5 = arith.constant 5 : index
    %131 = memref.load %arg1[%c0_61, %c5] : memref<2x16xf32, #tpu.memory_space<smem>>
    %132 = vector.broadcast %131 : f32 to vector<16x256xf32>
    %133 = arith.mulf %1, %132 : vector<16x256xf32>
    %c1_62 = arith.constant 1 : index
    %c5_63 = arith.constant 5 : index
    %134 = memref.load %arg1[%c1_62, %c5_63] : memref<2x16xf32, #tpu.memory_space<smem>>
    %135 = vector.broadcast %134 : f32 to vector<16x256xf32>
    %136 = arith.mulf %3, %135 : vector<16x256xf32>
    %137 = arith.addf %133, %136 : vector<16x256xf32>
    %c5_64 = arith.constant 5 : index
    %138 = memref.load %arg2[%c5_64] : memref<16xf32, #tpu.memory_space<smem>>
    %139 = vector.broadcast %138 : f32 to vector<16x256xf32>
    %140 = arith.addf %137, %139 : vector<16x256xf32>
    %141 = math.tanh %140 : vector<16x256xf32>
    %c5_65 = arith.constant 5 : index
    %c0_66 = arith.constant 0 : index
    %142 = memref.load %arg3[%c5_65, %c0_66] : memref<16x3xf32, #tpu.memory_space<smem>>
    %143 = vector.broadcast %142 : f32 to vector<16x256xf32>
    %144 = arith.mulf %141, %143 : vector<16x256xf32>
    %145 = arith.addf %122, %144 : vector<16x256xf32>
    %c5_67 = arith.constant 5 : index
    %c1_68 = arith.constant 1 : index
    %146 = memref.load %arg3[%c5_67, %c1_68] : memref<16x3xf32, #tpu.memory_space<smem>>
    %147 = vector.broadcast %146 : f32 to vector<16x256xf32>
    %148 = arith.mulf %141, %147 : vector<16x256xf32>
    %149 = arith.addf %126, %148 : vector<16x256xf32>
    %c5_69 = arith.constant 5 : index
    %c2_70 = arith.constant 2 : index
    %150 = memref.load %arg3[%c5_69, %c2_70] : memref<16x3xf32, #tpu.memory_space<smem>>
    %151 = vector.broadcast %150 : f32 to vector<16x256xf32>
    %152 = arith.mulf %141, %151 : vector<16x256xf32>
    %153 = arith.addf %130, %152 : vector<16x256xf32>
    %c0_71 = arith.constant 0 : index
    %c6 = arith.constant 6 : index
    %154 = memref.load %arg1[%c0_71, %c6] : memref<2x16xf32, #tpu.memory_space<smem>>
    %155 = vector.broadcast %154 : f32 to vector<16x256xf32>
    %156 = arith.mulf %1, %155 : vector<16x256xf32>
    %c1_72 = arith.constant 1 : index
    %c6_73 = arith.constant 6 : index
    %157 = memref.load %arg1[%c1_72, %c6_73] : memref<2x16xf32, #tpu.memory_space<smem>>
    %158 = vector.broadcast %157 : f32 to vector<16x256xf32>
    %159 = arith.mulf %3, %158 : vector<16x256xf32>
    %160 = arith.addf %156, %159 : vector<16x256xf32>
    %c6_74 = arith.constant 6 : index
    %161 = memref.load %arg2[%c6_74] : memref<16xf32, #tpu.memory_space<smem>>
    %162 = vector.broadcast %161 : f32 to vector<16x256xf32>
    %163 = arith.addf %160, %162 : vector<16x256xf32>
    %164 = math.tanh %163 : vector<16x256xf32>
    %c6_75 = arith.constant 6 : index
    %c0_76 = arith.constant 0 : index
    %165 = memref.load %arg3[%c6_75, %c0_76] : memref<16x3xf32, #tpu.memory_space<smem>>
    %166 = vector.broadcast %165 : f32 to vector<16x256xf32>
    %167 = arith.mulf %164, %166 : vector<16x256xf32>
    %168 = arith.addf %145, %167 : vector<16x256xf32>
    %c6_77 = arith.constant 6 : index
    %c1_78 = arith.constant 1 : index
    %169 = memref.load %arg3[%c6_77, %c1_78] : memref<16x3xf32, #tpu.memory_space<smem>>
    %170 = vector.broadcast %169 : f32 to vector<16x256xf32>
    %171 = arith.mulf %164, %170 : vector<16x256xf32>
    %172 = arith.addf %149, %171 : vector<16x256xf32>
    %c6_79 = arith.constant 6 : index
    %c2_80 = arith.constant 2 : index
    %173 = memref.load %arg3[%c6_79, %c2_80] : memref<16x3xf32, #tpu.memory_space<smem>>
    %174 = vector.broadcast %173 : f32 to vector<16x256xf32>
    %175 = arith.mulf %164, %174 : vector<16x256xf32>
    %176 = arith.addf %153, %175 : vector<16x256xf32>
    %c0_81 = arith.constant 0 : index
    %c7 = arith.constant 7 : index
    %177 = memref.load %arg1[%c0_81, %c7] : memref<2x16xf32, #tpu.memory_space<smem>>
    %178 = vector.broadcast %177 : f32 to vector<16x256xf32>
    %179 = arith.mulf %1, %178 : vector<16x256xf32>
    %c1_82 = arith.constant 1 : index
    %c7_83 = arith.constant 7 : index
    %180 = memref.load %arg1[%c1_82, %c7_83] : memref<2x16xf32, #tpu.memory_space<smem>>
    %181 = vector.broadcast %180 : f32 to vector<16x256xf32>
    %182 = arith.mulf %3, %181 : vector<16x256xf32>
    %183 = arith.addf %179, %182 : vector<16x256xf32>
    %c7_84 = arith.constant 7 : index
    %184 = memref.load %arg2[%c7_84] : memref<16xf32, #tpu.memory_space<smem>>
    %185 = vector.broadcast %184 : f32 to vector<16x256xf32>
    %186 = arith.addf %183, %185 : vector<16x256xf32>
    %187 = math.tanh %186 : vector<16x256xf32>
    %c7_85 = arith.constant 7 : index
    %c0_86 = arith.constant 0 : index
    %188 = memref.load %arg3[%c7_85, %c0_86] : memref<16x3xf32, #tpu.memory_space<smem>>
    %189 = vector.broadcast %188 : f32 to vector<16x256xf32>
    %190 = arith.mulf %187, %189 : vector<16x256xf32>
    %191 = arith.addf %168, %190 : vector<16x256xf32>
    %c7_87 = arith.constant 7 : index
    %c1_88 = arith.constant 1 : index
    %192 = memref.load %arg3[%c7_87, %c1_88] : memref<16x3xf32, #tpu.memory_space<smem>>
    %193 = vector.broadcast %192 : f32 to vector<16x256xf32>
    %194 = arith.mulf %187, %193 : vector<16x256xf32>
    %195 = arith.addf %172, %194 : vector<16x256xf32>
    %c7_89 = arith.constant 7 : index
    %c2_90 = arith.constant 2 : index
    %196 = memref.load %arg3[%c7_89, %c2_90] : memref<16x3xf32, #tpu.memory_space<smem>>
    %197 = vector.broadcast %196 : f32 to vector<16x256xf32>
    %198 = arith.mulf %187, %197 : vector<16x256xf32>
    %199 = arith.addf %176, %198 : vector<16x256xf32>
    %c0_91 = arith.constant 0 : index
    %c8 = arith.constant 8 : index
    %200 = memref.load %arg1[%c0_91, %c8] : memref<2x16xf32, #tpu.memory_space<smem>>
    %201 = vector.broadcast %200 : f32 to vector<16x256xf32>
    %202 = arith.mulf %1, %201 : vector<16x256xf32>
    %c1_92 = arith.constant 1 : index
    %c8_93 = arith.constant 8 : index
    %203 = memref.load %arg1[%c1_92, %c8_93] : memref<2x16xf32, #tpu.memory_space<smem>>
    %204 = vector.broadcast %203 : f32 to vector<16x256xf32>
    %205 = arith.mulf %3, %204 : vector<16x256xf32>
    %206 = arith.addf %202, %205 : vector<16x256xf32>
    %c8_94 = arith.constant 8 : index
    %207 = memref.load %arg2[%c8_94] : memref<16xf32, #tpu.memory_space<smem>>
    %208 = vector.broadcast %207 : f32 to vector<16x256xf32>
    %209 = arith.addf %206, %208 : vector<16x256xf32>
    %210 = math.tanh %209 : vector<16x256xf32>
    %c8_95 = arith.constant 8 : index
    %c0_96 = arith.constant 0 : index
    %211 = memref.load %arg3[%c8_95, %c0_96] : memref<16x3xf32, #tpu.memory_space<smem>>
    %212 = vector.broadcast %211 : f32 to vector<16x256xf32>
    %213 = arith.mulf %210, %212 : vector<16x256xf32>
    %214 = arith.addf %191, %213 : vector<16x256xf32>
    %c8_97 = arith.constant 8 : index
    %c1_98 = arith.constant 1 : index
    %215 = memref.load %arg3[%c8_97, %c1_98] : memref<16x3xf32, #tpu.memory_space<smem>>
    %216 = vector.broadcast %215 : f32 to vector<16x256xf32>
    %217 = arith.mulf %210, %216 : vector<16x256xf32>
    %218 = arith.addf %195, %217 : vector<16x256xf32>
    %c8_99 = arith.constant 8 : index
    %c2_100 = arith.constant 2 : index
    %219 = memref.load %arg3[%c8_99, %c2_100] : memref<16x3xf32, #tpu.memory_space<smem>>
    %220 = vector.broadcast %219 : f32 to vector<16x256xf32>
    %221 = arith.mulf %210, %220 : vector<16x256xf32>
    %222 = arith.addf %199, %221 : vector<16x256xf32>
    %c0_101 = arith.constant 0 : index
    %c9 = arith.constant 9 : index
    %223 = memref.load %arg1[%c0_101, %c9] : memref<2x16xf32, #tpu.memory_space<smem>>
    %224 = vector.broadcast %223 : f32 to vector<16x256xf32>
    %225 = arith.mulf %1, %224 : vector<16x256xf32>
    %c1_102 = arith.constant 1 : index
    %c9_103 = arith.constant 9 : index
    %226 = memref.load %arg1[%c1_102, %c9_103] : memref<2x16xf32, #tpu.memory_space<smem>>
    %227 = vector.broadcast %226 : f32 to vector<16x256xf32>
    %228 = arith.mulf %3, %227 : vector<16x256xf32>
    %229 = arith.addf %225, %228 : vector<16x256xf32>
    %c9_104 = arith.constant 9 : index
    %230 = memref.load %arg2[%c9_104] : memref<16xf32, #tpu.memory_space<smem>>
    %231 = vector.broadcast %230 : f32 to vector<16x256xf32>
    %232 = arith.addf %229, %231 : vector<16x256xf32>
    %233 = math.tanh %232 : vector<16x256xf32>
    %c9_105 = arith.constant 9 : index
    %c0_106 = arith.constant 0 : index
    %234 = memref.load %arg3[%c9_105, %c0_106] : memref<16x3xf32, #tpu.memory_space<smem>>
    %235 = vector.broadcast %234 : f32 to vector<16x256xf32>
    %236 = arith.mulf %233, %235 : vector<16x256xf32>
    %237 = arith.addf %214, %236 : vector<16x256xf32>
    %c9_107 = arith.constant 9 : index
    %c1_108 = arith.constant 1 : index
    %238 = memref.load %arg3[%c9_107, %c1_108] : memref<16x3xf32, #tpu.memory_space<smem>>
    %239 = vector.broadcast %238 : f32 to vector<16x256xf32>
    %240 = arith.mulf %233, %239 : vector<16x256xf32>
    %241 = arith.addf %218, %240 : vector<16x256xf32>
    %c9_109 = arith.constant 9 : index
    %c2_110 = arith.constant 2 : index
    %242 = memref.load %arg3[%c9_109, %c2_110] : memref<16x3xf32, #tpu.memory_space<smem>>
    %243 = vector.broadcast %242 : f32 to vector<16x256xf32>
    %244 = arith.mulf %233, %243 : vector<16x256xf32>
    %245 = arith.addf %222, %244 : vector<16x256xf32>
    %c0_111 = arith.constant 0 : index
    %c10 = arith.constant 10 : index
    %246 = memref.load %arg1[%c0_111, %c10] : memref<2x16xf32, #tpu.memory_space<smem>>
    %247 = vector.broadcast %246 : f32 to vector<16x256xf32>
    %248 = arith.mulf %1, %247 : vector<16x256xf32>
    %c1_112 = arith.constant 1 : index
    %c10_113 = arith.constant 10 : index
    %249 = memref.load %arg1[%c1_112, %c10_113] : memref<2x16xf32, #tpu.memory_space<smem>>
    %250 = vector.broadcast %249 : f32 to vector<16x256xf32>
    %251 = arith.mulf %3, %250 : vector<16x256xf32>
    %252 = arith.addf %248, %251 : vector<16x256xf32>
    %c10_114 = arith.constant 10 : index
    %253 = memref.load %arg2[%c10_114] : memref<16xf32, #tpu.memory_space<smem>>
    %254 = vector.broadcast %253 : f32 to vector<16x256xf32>
    %255 = arith.addf %252, %254 : vector<16x256xf32>
    %256 = math.tanh %255 : vector<16x256xf32>
    %c10_115 = arith.constant 10 : index
    %c0_116 = arith.constant 0 : index
    %257 = memref.load %arg3[%c10_115, %c0_116] : memref<16x3xf32, #tpu.memory_space<smem>>
    %258 = vector.broadcast %257 : f32 to vector<16x256xf32>
    %259 = arith.mulf %256, %258 : vector<16x256xf32>
    %260 = arith.addf %237, %259 : vector<16x256xf32>
    %c10_117 = arith.constant 10 : index
    %c1_118 = arith.constant 1 : index
    %261 = memref.load %arg3[%c10_117, %c1_118] : memref<16x3xf32, #tpu.memory_space<smem>>
    %262 = vector.broadcast %261 : f32 to vector<16x256xf32>
    %263 = arith.mulf %256, %262 : vector<16x256xf32>
    %264 = arith.addf %241, %263 : vector<16x256xf32>
    %c10_119 = arith.constant 10 : index
    %c2_120 = arith.constant 2 : index
    %265 = memref.load %arg3[%c10_119, %c2_120] : memref<16x3xf32, #tpu.memory_space<smem>>
    %266 = vector.broadcast %265 : f32 to vector<16x256xf32>
    %267 = arith.mulf %256, %266 : vector<16x256xf32>
    %268 = arith.addf %245, %267 : vector<16x256xf32>
    %c0_121 = arith.constant 0 : index
    %c11 = arith.constant 11 : index
    %269 = memref.load %arg1[%c0_121, %c11] : memref<2x16xf32, #tpu.memory_space<smem>>
    %270 = vector.broadcast %269 : f32 to vector<16x256xf32>
    %271 = arith.mulf %1, %270 : vector<16x256xf32>
    %c1_122 = arith.constant 1 : index
    %c11_123 = arith.constant 11 : index
    %272 = memref.load %arg1[%c1_122, %c11_123] : memref<2x16xf32, #tpu.memory_space<smem>>
    %273 = vector.broadcast %272 : f32 to vector<16x256xf32>
    %274 = arith.mulf %3, %273 : vector<16x256xf32>
    %275 = arith.addf %271, %274 : vector<16x256xf32>
    %c11_124 = arith.constant 11 : index
    %276 = memref.load %arg2[%c11_124] : memref<16xf32, #tpu.memory_space<smem>>
    %277 = vector.broadcast %276 : f32 to vector<16x256xf32>
    %278 = arith.addf %275, %277 : vector<16x256xf32>
    %279 = math.tanh %278 : vector<16x256xf32>
    %c11_125 = arith.constant 11 : index
    %c0_126 = arith.constant 0 : index
    %280 = memref.load %arg3[%c11_125, %c0_126] : memref<16x3xf32, #tpu.memory_space<smem>>
    %281 = vector.broadcast %280 : f32 to vector<16x256xf32>
    %282 = arith.mulf %279, %281 : vector<16x256xf32>
    %283 = arith.addf %260, %282 : vector<16x256xf32>
    %c11_127 = arith.constant 11 : index
    %c1_128 = arith.constant 1 : index
    %284 = memref.load %arg3[%c11_127, %c1_128] : memref<16x3xf32, #tpu.memory_space<smem>>
    %285 = vector.broadcast %284 : f32 to vector<16x256xf32>
    %286 = arith.mulf %279, %285 : vector<16x256xf32>
    %287 = arith.addf %264, %286 : vector<16x256xf32>
    %c11_129 = arith.constant 11 : index
    %c2_130 = arith.constant 2 : index
    %288 = memref.load %arg3[%c11_129, %c2_130] : memref<16x3xf32, #tpu.memory_space<smem>>
    %289 = vector.broadcast %288 : f32 to vector<16x256xf32>
    %290 = arith.mulf %279, %289 : vector<16x256xf32>
    %291 = arith.addf %268, %290 : vector<16x256xf32>
    %c0_131 = arith.constant 0 : index
    %c12 = arith.constant 12 : index
    %292 = memref.load %arg1[%c0_131, %c12] : memref<2x16xf32, #tpu.memory_space<smem>>
    %293 = vector.broadcast %292 : f32 to vector<16x256xf32>
    %294 = arith.mulf %1, %293 : vector<16x256xf32>
    %c1_132 = arith.constant 1 : index
    %c12_133 = arith.constant 12 : index
    %295 = memref.load %arg1[%c1_132, %c12_133] : memref<2x16xf32, #tpu.memory_space<smem>>
    %296 = vector.broadcast %295 : f32 to vector<16x256xf32>
    %297 = arith.mulf %3, %296 : vector<16x256xf32>
    %298 = arith.addf %294, %297 : vector<16x256xf32>
    %c12_134 = arith.constant 12 : index
    %299 = memref.load %arg2[%c12_134] : memref<16xf32, #tpu.memory_space<smem>>
    %300 = vector.broadcast %299 : f32 to vector<16x256xf32>
    %301 = arith.addf %298, %300 : vector<16x256xf32>
    %302 = math.tanh %301 : vector<16x256xf32>
    %c12_135 = arith.constant 12 : index
    %c0_136 = arith.constant 0 : index
    %303 = memref.load %arg3[%c12_135, %c0_136] : memref<16x3xf32, #tpu.memory_space<smem>>
    %304 = vector.broadcast %303 : f32 to vector<16x256xf32>
    %305 = arith.mulf %302, %304 : vector<16x256xf32>
    %306 = arith.addf %283, %305 : vector<16x256xf32>
    %c12_137 = arith.constant 12 : index
    %c1_138 = arith.constant 1 : index
    %307 = memref.load %arg3[%c12_137, %c1_138] : memref<16x3xf32, #tpu.memory_space<smem>>
    %308 = vector.broadcast %307 : f32 to vector<16x256xf32>
    %309 = arith.mulf %302, %308 : vector<16x256xf32>
    %310 = arith.addf %287, %309 : vector<16x256xf32>
    %c12_139 = arith.constant 12 : index
    %c2_140 = arith.constant 2 : index
    %311 = memref.load %arg3[%c12_139, %c2_140] : memref<16x3xf32, #tpu.memory_space<smem>>
    %312 = vector.broadcast %311 : f32 to vector<16x256xf32>
    %313 = arith.mulf %302, %312 : vector<16x256xf32>
    %314 = arith.addf %291, %313 : vector<16x256xf32>
    %c0_141 = arith.constant 0 : index
    %c13 = arith.constant 13 : index
    %315 = memref.load %arg1[%c0_141, %c13] : memref<2x16xf32, #tpu.memory_space<smem>>
    %316 = vector.broadcast %315 : f32 to vector<16x256xf32>
    %317 = arith.mulf %1, %316 : vector<16x256xf32>
    %c1_142 = arith.constant 1 : index
    %c13_143 = arith.constant 13 : index
    %318 = memref.load %arg1[%c1_142, %c13_143] : memref<2x16xf32, #tpu.memory_space<smem>>
    %319 = vector.broadcast %318 : f32 to vector<16x256xf32>
    %320 = arith.mulf %3, %319 : vector<16x256xf32>
    %321 = arith.addf %317, %320 : vector<16x256xf32>
    %c13_144 = arith.constant 13 : index
    %322 = memref.load %arg2[%c13_144] : memref<16xf32, #tpu.memory_space<smem>>
    %323 = vector.broadcast %322 : f32 to vector<16x256xf32>
    %324 = arith.addf %321, %323 : vector<16x256xf32>
    %325 = math.tanh %324 : vector<16x256xf32>
    %c13_145 = arith.constant 13 : index
    %c0_146 = arith.constant 0 : index
    %326 = memref.load %arg3[%c13_145, %c0_146] : memref<16x3xf32, #tpu.memory_space<smem>>
    %327 = vector.broadcast %326 : f32 to vector<16x256xf32>
    %328 = arith.mulf %325, %327 : vector<16x256xf32>
    %329 = arith.addf %306, %328 : vector<16x256xf32>
    %c13_147 = arith.constant 13 : index
    %c1_148 = arith.constant 1 : index
    %330 = memref.load %arg3[%c13_147, %c1_148] : memref<16x3xf32, #tpu.memory_space<smem>>
    %331 = vector.broadcast %330 : f32 to vector<16x256xf32>
    %332 = arith.mulf %325, %331 : vector<16x256xf32>
    %333 = arith.addf %310, %332 : vector<16x256xf32>
    %c13_149 = arith.constant 13 : index
    %c2_150 = arith.constant 2 : index
    %334 = memref.load %arg3[%c13_149, %c2_150] : memref<16x3xf32, #tpu.memory_space<smem>>
    %335 = vector.broadcast %334 : f32 to vector<16x256xf32>
    %336 = arith.mulf %325, %335 : vector<16x256xf32>
    %337 = arith.addf %314, %336 : vector<16x256xf32>
    %c0_151 = arith.constant 0 : index
    %c14 = arith.constant 14 : index
    %338 = memref.load %arg1[%c0_151, %c14] : memref<2x16xf32, #tpu.memory_space<smem>>
    %339 = vector.broadcast %338 : f32 to vector<16x256xf32>
    %340 = arith.mulf %1, %339 : vector<16x256xf32>
    %c1_152 = arith.constant 1 : index
    %c14_153 = arith.constant 14 : index
    %341 = memref.load %arg1[%c1_152, %c14_153] : memref<2x16xf32, #tpu.memory_space<smem>>
    %342 = vector.broadcast %341 : f32 to vector<16x256xf32>
    %343 = arith.mulf %3, %342 : vector<16x256xf32>
    %344 = arith.addf %340, %343 : vector<16x256xf32>
    %c14_154 = arith.constant 14 : index
    %345 = memref.load %arg2[%c14_154] : memref<16xf32, #tpu.memory_space<smem>>
    %346 = vector.broadcast %345 : f32 to vector<16x256xf32>
    %347 = arith.addf %344, %346 : vector<16x256xf32>
    %348 = math.tanh %347 : vector<16x256xf32>
    %c14_155 = arith.constant 14 : index
    %c0_156 = arith.constant 0 : index
    %349 = memref.load %arg3[%c14_155, %c0_156] : memref<16x3xf32, #tpu.memory_space<smem>>
    %350 = vector.broadcast %349 : f32 to vector<16x256xf32>
    %351 = arith.mulf %348, %350 : vector<16x256xf32>
    %352 = arith.addf %329, %351 : vector<16x256xf32>
    %c14_157 = arith.constant 14 : index
    %c1_158 = arith.constant 1 : index
    %353 = memref.load %arg3[%c14_157, %c1_158] : memref<16x3xf32, #tpu.memory_space<smem>>
    %354 = vector.broadcast %353 : f32 to vector<16x256xf32>
    %355 = arith.mulf %348, %354 : vector<16x256xf32>
    %356 = arith.addf %333, %355 : vector<16x256xf32>
    %c14_159 = arith.constant 14 : index
    %c2_160 = arith.constant 2 : index
    %357 = memref.load %arg3[%c14_159, %c2_160] : memref<16x3xf32, #tpu.memory_space<smem>>
    %358 = vector.broadcast %357 : f32 to vector<16x256xf32>
    %359 = arith.mulf %348, %358 : vector<16x256xf32>
    %360 = arith.addf %337, %359 : vector<16x256xf32>
    %c0_161 = arith.constant 0 : index
    %c15 = arith.constant 15 : index
    %361 = memref.load %arg1[%c0_161, %c15] : memref<2x16xf32, #tpu.memory_space<smem>>
    %362 = vector.broadcast %361 : f32 to vector<16x256xf32>
    %363 = arith.mulf %1, %362 : vector<16x256xf32>
    %c1_162 = arith.constant 1 : index
    %c15_163 = arith.constant 15 : index
    %364 = memref.load %arg1[%c1_162, %c15_163] : memref<2x16xf32, #tpu.memory_space<smem>>
    %365 = vector.broadcast %364 : f32 to vector<16x256xf32>
    %366 = arith.mulf %3, %365 : vector<16x256xf32>
    %367 = arith.addf %363, %366 : vector<16x256xf32>
    %c15_164 = arith.constant 15 : index
    %368 = memref.load %arg2[%c15_164] : memref<16xf32, #tpu.memory_space<smem>>
    %369 = vector.broadcast %368 : f32 to vector<16x256xf32>
    %370 = arith.addf %367, %369 : vector<16x256xf32>
    %371 = math.tanh %370 : vector<16x256xf32>
    %c15_165 = arith.constant 15 : index
    %c0_166 = arith.constant 0 : index
    %372 = memref.load %arg3[%c15_165, %c0_166] : memref<16x3xf32, #tpu.memory_space<smem>>
    %373 = vector.broadcast %372 : f32 to vector<16x256xf32>
    %374 = arith.mulf %371, %373 : vector<16x256xf32>
    %375 = arith.addf %352, %374 : vector<16x256xf32>
    %c15_167 = arith.constant 15 : index
    %c1_168 = arith.constant 1 : index
    %376 = memref.load %arg3[%c15_167, %c1_168] : memref<16x3xf32, #tpu.memory_space<smem>>
    %377 = vector.broadcast %376 : f32 to vector<16x256xf32>
    %378 = arith.mulf %371, %377 : vector<16x256xf32>
    %379 = arith.addf %356, %378 : vector<16x256xf32>
    %c15_169 = arith.constant 15 : index
    %c2_170 = arith.constant 2 : index
    %380 = memref.load %arg3[%c15_169, %c2_170] : memref<16x3xf32, #tpu.memory_space<smem>>
    %381 = vector.broadcast %380 : f32 to vector<16x256xf32>
    %382 = arith.mulf %371, %381 : vector<16x256xf32>
    %383 = arith.addf %360, %382 : vector<16x256xf32>
    %384 = math.tanh %375 : vector<16x256xf32>
    %cst_171 = arith.constant 2.000000e+00 : f32
    %385 = vector.broadcast %cst_171 : f32 to vector<16x256xf32>
    %386 = arith.mulf %384, %385 : vector<16x256xf32>
    %c0_172 = arith.constant 0 : index
    %c0_173 = arith.constant 0 : index
    %c0_174 = arith.constant 0 : index
    %c0_175 = arith.constant 0 : index
    %387 = vector.load %arg7[%c0_172, %c0_173, %c0_174, %c0_175] : memref<1x3x16x256xf32, #tpu.memory_space<vmem>>, vector<1x1x16x256xf32>
    %388 = vector.shape_cast %387 : vector<1x1x16x256xf32> to vector<16x256xf32>
    %389 = vector.shape_cast %386 : vector<16x256xf32> to vector<1x1x16x256xf32>
    tpu.vector_store %arg7[%c0_172, %c0_173, %c0_174, %c0_175], %389 {strides = array<i32>} : memref<1x3x16x256xf32, #tpu.memory_space<vmem>>, vector<1x1x16x256xf32>,
    %390 = math.tanh %379 : vector<16x256xf32>
    %cst_176 = arith.constant 2.000000e+00 : f32
    %391 = vector.broadcast %cst_176 : f32 to vector<16x256xf32>
    %392 = arith.mulf %390, %391 : vector<16x256xf32>
    %c0_177 = arith.constant 0 : index
    %c1_178 = arith.constant 1 : index
    %c0_179 = arith.constant 0 : index
    %c0_180 = arith.constant 0 : index
    %393 = vector.load %arg7[%c0_177, %c1_178, %c0_179, %c0_180] : memref<1x3x16x256xf32, #tpu.memory_space<vmem>>, vector<1x1x16x256xf32>
    %394 = vector.shape_cast %393 : vector<1x1x16x256xf32> to vector<16x256xf32>
    %395 = vector.shape_cast %392 : vector<16x256xf32> to vector<1x1x16x256xf32>
    tpu.vector_store %arg7[%c0_177, %c1_178, %c0_179, %c0_180], %395 {strides = array<i32>} : memref<1x3x16x256xf32, #tpu.memory_space<vmem>>, vector<1x1x16x256xf32>,
    %396 = math.tanh %383 : vector<16x256xf32>
    %cst_181 = arith.constant 2.000000e+00 : f32
    %397 = vector.broadcast %cst_181 : f32 to vector<16x256xf32>
    %398 = arith.mulf %396, %397 : vector<16x256xf32>
    %c0_182 = arith.constant 0 : index
    %c2_183 = arith.constant 2 : index
    %c0_184 = arith.constant 0 : index
    %c0_185 = arith.constant 0 : index
    %399 = vector.load %arg7[%c0_182, %c2_183, %c0_184, %c0_185] : memref<1x3x16x256xf32, #tpu.memory_space<vmem>>, vector<1x1x16x256xf32>
    %400 = vector.shape_cast %399 : vector<1x1x16x256xf32> to vector<16x256xf32>
    %401 = vector.shape_cast %398 : vector<16x256xf32> to vector<1x1x16x256xf32>
    tpu.vector_store %arg7[%c0_182, %c2_183, %c0_184, %c0_185], %401 {strides = array<i32>} : memref<1x3x16x256xf32, #tpu.memory_space<vmem>>, vector<1x1x16x256xf32>,
    return
  }
  func.func @transform_0(%arg0: i32) -> (i32, i32) {
    %c0_i32 = arith.constant 0 : i32
    %c0_i32_0 = arith.constant 0 : i32
    %c0_i32_1 = arith.constant 0 : i32
    return %c0_i32, %c0_i32_0 : i32, i32
  }
  func.func @transform_1(%arg0: i32) -> i32 {
    %c0_i32 = arith.constant 0 : i32
    %c0_i32_0 = arith.constant 0 : i32
    return %c0_i32 : i32
  }
  func.func @transform_2(%arg0: i32) -> (i32, i32) {
    %c0_i32 = arith.constant 0 : i32
    %c0_i32_0 = arith.constant 0 : i32
    %c0_i32_1 = arith.constant 0 : i32
    return %c0_i32, %c0_i32_0 : i32, i32
  }
  func.func @transform_3(%arg0: i32) -> i32 {
    %c0_i32 = arith.constant 0 : i32
    %c0_i32_0 = arith.constant 0 : i32
    return %c0_i32 : i32
  }
  func.func @transform_4(%arg0: i32) -> (i32, i32, i32) {
    %c0_i32 = arith.constant 0 : i32
    %c0_i32_0 = arith.constant 0 : i32
    %c0_i32_1 = arith.constant 0 : i32
    return %arg0, %c0_i32, %c0_i32_0 : i32, i32, i32
  }
  func.func @transform_5(%arg0: i32) -> (i32, i32, i32) {
    %c0_i32 = arith.constant 0 : i32
    %c0_i32_0 = arith.constant 0 : i32
    %c0_i32_1 = arith.constant 0 : i32
    return %arg0, %c0_i32, %c0_i32_0 : i32, i32, i32
  }
  func.func @transform_6(%arg0: i32) -> (i32, i32, i32, i32) {
    %c0_i32 = arith.constant 0 : i32
    %c0_i32_0 = arith.constant 0 : i32
    %c0_i32_1 = arith.constant 0 : i32
    %c0_i32_2 = arith.constant 0 : i32
    return %arg0, %c0_i32, %c0_i32_0, %c0_i32_1 : i32, i32, i32, i32
  }
}

module attributes {stable_mosaic.version = 11 : i64} {
  func.func @_extract_ratio_kernel(%arg0: i32, %arg1: memref<1x3x16x256xf32, #tpu.memory_space<vmem>>, %arg2: memref<1x16x256xf32, #tpu.memory_space<vmem>>, %arg3: memref<1x16x256xf32, #tpu.memory_space<vmem>>, %arg4: memref<1x16x256xf32, #tpu.memory_space<vmem>>) attributes {dimension_semantics = [#tpu.dimension_semantics<parallel>], iteration_bounds = array<i64: 2>, scalar_prefetch = 0 : i64, scratch_operands = 0 : i64, tpu.core_type = #tpu.core_type<tc>, window_params = [{transform_indices = @transform_0, window_bounds = array<i64: 1, 3, 16, 256>}, {transform_indices = @transform_1, window_bounds = array<i64: 1, 16, 256>}, {transform_indices = @transform_2, window_bounds = array<i64: 1, 16, 256>}, {transform_indices = @transform_3, window_bounds = array<i64: 1, 16, 256>}]} {
    %c0 = arith.constant 0 : index
    %c0_0 = arith.constant 0 : index
    %c0_1 = arith.constant 0 : index
    %c0_2 = arith.constant 0 : index
    %0 = vector.load %arg1[%c0, %c0_0, %c0_1, %c0_2] : memref<1x3x16x256xf32, #tpu.memory_space<vmem>>, vector<1x1x16x256xf32>
    %1 = vector.shape_cast %0 : vector<1x1x16x256xf32> to vector<16x256xf32>
    %c0_3 = arith.constant 0 : index
    %c1 = arith.constant 1 : index
    %c0_4 = arith.constant 0 : index
    %c0_5 = arith.constant 0 : index
    %2 = vector.load %arg1[%c0_3, %c1, %c0_4, %c0_5] : memref<1x3x16x256xf32, #tpu.memory_space<vmem>>, vector<1x1x16x256xf32>
    %3 = vector.shape_cast %2 : vector<1x1x16x256xf32> to vector<16x256xf32>
    %c0_6 = arith.constant 0 : index
    %c2 = arith.constant 2 : index
    %c0_7 = arith.constant 0 : index
    %c0_8 = arith.constant 0 : index
    %4 = vector.load %arg1[%c0_6, %c2, %c0_7, %c0_8] : memref<1x3x16x256xf32, #tpu.memory_space<vmem>>, vector<1x1x16x256xf32>
    %5 = vector.shape_cast %4 : vector<1x1x16x256xf32> to vector<16x256xf32>
    %c0_9 = arith.constant 0 : index
    %c0_10 = arith.constant 0 : index
    %c0_11 = arith.constant 0 : index
    %6 = vector.load %arg2[%c0_9, %c0_10, %c0_11] : memref<1x16x256xf32, #tpu.memory_space<vmem>>, vector<1x16x256xf32>
    %7 = vector.shape_cast %6 : vector<1x16x256xf32> to vector<16x256xf32>
    %c0_12 = arith.constant 0 : index
    %c0_13 = arith.constant 0 : index
    %c0_14 = arith.constant 0 : index
    %8 = vector.load %arg3[%c0_12, %c0_13, %c0_14] : memref<1x16x256xf32, #tpu.memory_space<vmem>>, vector<1x16x256xf32>
    %9 = vector.shape_cast %8 : vector<1x16x256xf32> to vector<16x256xf32>
    %10 = tpu.iota {dimensions = array<i32: 1>} : vector<16x256xi32>
    %11 = tpu.iota {dimensions = array<i32: 0>} : vector<16x256xi32>
    %c15_i32 = arith.constant 15 : i32
    %12 = vector.broadcast %c15_i32 : i32 to vector<16x256xi32>
    %13 = arith.andi %10, %12 : vector<16x256xi32>
    %c15_i32_15 = arith.constant 15 : i32
    %14 = vector.broadcast %c15_i32_15 : i32 to vector<16x256xi32>
    %15 = arith.cmpi slt, %13, %14 : vector<16x256xi32>
    %c0_i32 = arith.constant 0 : i32
    %16 = vector.broadcast %c0_i32 : i32 to vector<16x256xi32>
    %17 = arith.cmpi sgt, %13, %16 : vector<16x256xi32>
    %c240_i32 = arith.constant 240 : i32
    %18 = vector.broadcast %c240_i32 : i32 to vector<16x256xi32>
    %19 = arith.cmpi slt, %10, %18 : vector<16x256xi32>
    %c16_i32 = arith.constant 16 : i32
    %20 = vector.broadcast %c16_i32 : i32 to vector<16x256xi32>
    %21 = arith.cmpi sge, %10, %20 : vector<16x256xi32>
    %c15_i32_16 = arith.constant 15 : i32
    %22 = vector.broadcast %c15_i32_16 : i32 to vector<16x256xi32>
    %23 = arith.cmpi slt, %11, %22 : vector<16x256xi32>
    %c0_i32_17 = arith.constant 0 : i32
    %24 = vector.broadcast %c0_i32_17 : i32 to vector<16x256xi32>
    %25 = arith.cmpi sgt, %11, %24 : vector<16x256xi32>
    %c15_i32_18 = arith.constant 15 : i32
    %26 = tpu.dynamic_rotate %1 by %c15_i32_18 dim 0 : vector<16x256xf32>, i32 -> vector<16x256xf32>
    %27 = arith.subf %26, %1 : vector<16x256xf32>
    %c1_i32 = arith.constant 1 : i32
    %28 = tpu.dynamic_rotate %27 by %c1_i32 dim 0 : vector<16x256xf32>, i32 -> vector<16x256xf32>
    %29 = arith.select %23, %27, %28 : vector<16x256xi1>, vector<16x256xf32>
    %c240_i32_19 = arith.constant 240 : i32
    %30 = tpu.dynamic_rotate %1 by %c240_i32_19 dim 1 : vector<16x256xf32>, i32 -> vector<16x256xf32>
    %31 = arith.subf %30, %1 : vector<16x256xf32>
    %c16_i32_20 = arith.constant 16 : i32
    %32 = tpu.dynamic_rotate %31 by %c16_i32_20 dim 1 : vector<16x256xf32>, i32 -> vector<16x256xf32>
    %33 = arith.select %19, %31, %32 : vector<16x256xi1>, vector<16x256xf32>
    %c255_i32 = arith.constant 255 : i32
    %34 = tpu.dynamic_rotate %1 by %c255_i32 dim 1 : vector<16x256xf32>, i32 -> vector<16x256xf32>
    %35 = arith.subf %34, %1 : vector<16x256xf32>
    %c1_i32_21 = arith.constant 1 : i32
    %36 = tpu.dynamic_rotate %35 by %c1_i32_21 dim 1 : vector<16x256xf32>, i32 -> vector<16x256xf32>
    %37 = arith.select %15, %35, %36 : vector<16x256xi1>, vector<16x256xf32>
    %c15_i32_22 = arith.constant 15 : i32
    %38 = tpu.dynamic_rotate %3 by %c15_i32_22 dim 0 : vector<16x256xf32>, i32 -> vector<16x256xf32>
    %39 = arith.subf %38, %3 : vector<16x256xf32>
    %c1_i32_23 = arith.constant 1 : i32
    %40 = tpu.dynamic_rotate %39 by %c1_i32_23 dim 0 : vector<16x256xf32>, i32 -> vector<16x256xf32>
    %41 = arith.select %23, %39, %40 : vector<16x256xi1>, vector<16x256xf32>
    %c240_i32_24 = arith.constant 240 : i32
    %42 = tpu.dynamic_rotate %3 by %c240_i32_24 dim 1 : vector<16x256xf32>, i32 -> vector<16x256xf32>
    %43 = arith.subf %42, %3 : vector<16x256xf32>
    %c16_i32_25 = arith.constant 16 : i32
    %44 = tpu.dynamic_rotate %43 by %c16_i32_25 dim 1 : vector<16x256xf32>, i32 -> vector<16x256xf32>
    %45 = arith.select %19, %43, %44 : vector<16x256xi1>, vector<16x256xf32>
    %c255_i32_26 = arith.constant 255 : i32
    %46 = tpu.dynamic_rotate %3 by %c255_i32_26 dim 1 : vector<16x256xf32>, i32 -> vector<16x256xf32>
    %47 = arith.subf %46, %3 : vector<16x256xf32>
    %c1_i32_27 = arith.constant 1 : i32
    %48 = tpu.dynamic_rotate %47 by %c1_i32_27 dim 1 : vector<16x256xf32>, i32 -> vector<16x256xf32>
    %49 = arith.select %15, %47, %48 : vector<16x256xi1>, vector<16x256xf32>
    %c15_i32_28 = arith.constant 15 : i32
    %50 = tpu.dynamic_rotate %5 by %c15_i32_28 dim 0 : vector<16x256xf32>, i32 -> vector<16x256xf32>
    %51 = arith.subf %50, %5 : vector<16x256xf32>
    %c1_i32_29 = arith.constant 1 : i32
    %52 = tpu.dynamic_rotate %51 by %c1_i32_29 dim 0 : vector<16x256xf32>, i32 -> vector<16x256xf32>
    %53 = arith.select %23, %51, %52 : vector<16x256xi1>, vector<16x256xf32>
    %c240_i32_30 = arith.constant 240 : i32
    %54 = tpu.dynamic_rotate %5 by %c240_i32_30 dim 1 : vector<16x256xf32>, i32 -> vector<16x256xf32>
    %55 = arith.subf %54, %5 : vector<16x256xf32>
    %c16_i32_31 = arith.constant 16 : i32
    %56 = tpu.dynamic_rotate %55 by %c16_i32_31 dim 1 : vector<16x256xf32>, i32 -> vector<16x256xf32>
    %57 = arith.select %19, %55, %56 : vector<16x256xi1>, vector<16x256xf32>
    %c255_i32_32 = arith.constant 255 : i32
    %58 = tpu.dynamic_rotate %5 by %c255_i32_32 dim 1 : vector<16x256xf32>, i32 -> vector<16x256xf32>
    %59 = arith.subf %58, %5 : vector<16x256xf32>
    %c1_i32_33 = arith.constant 1 : i32
    %60 = tpu.dynamic_rotate %59 by %c1_i32_33 dim 1 : vector<16x256xf32>, i32 -> vector<16x256xf32>
    %61 = arith.select %15, %59, %60 : vector<16x256xi1>, vector<16x256xf32>
    %cst = arith.constant 1.000000e+00 : f32
    %62 = vector.broadcast %cst : f32 to vector<16x256xf32>
    %63 = arith.addf %29, %62 : vector<16x256xf32>
    %cst_34 = arith.constant 1.000000e+00 : f32
    %64 = vector.broadcast %cst_34 : f32 to vector<16x256xf32>
    %65 = arith.addf %45, %64 : vector<16x256xf32>
    %cst_35 = arith.constant 1.000000e+00 : f32
    %66 = vector.broadcast %cst_35 : f32 to vector<16x256xf32>
    %67 = arith.addf %61, %66 : vector<16x256xf32>
    %68 = arith.mulf %65, %67 : vector<16x256xf32>
    %69 = arith.mulf %49, %57 : vector<16x256xf32>
    %70 = arith.subf %68, %69 : vector<16x256xf32>
    %71 = arith.mulf %63, %70 : vector<16x256xf32>
    %72 = arith.mulf %41, %67 : vector<16x256xf32>
    %73 = arith.mulf %49, %53 : vector<16x256xf32>
    %74 = arith.subf %72, %73 : vector<16x256xf32>
    %75 = arith.mulf %33, %74 : vector<16x256xf32>
    %76 = arith.subf %71, %75 : vector<16x256xf32>
    %77 = arith.mulf %41, %57 : vector<16x256xf32>
    %78 = arith.mulf %65, %53 : vector<16x256xf32>
    %79 = arith.subf %77, %78 : vector<16x256xf32>
    %80 = arith.mulf %37, %79 : vector<16x256xf32>
    %81 = arith.addf %76, %80 : vector<16x256xf32>
    %82 = math.absf %81 : vector<16x256xf32>
    %cst_36 = arith.constant 0.333333343 : f32
    %cst_37 = arith.constant 3.000000e+00 : f32
    %83 = vector.broadcast %cst_36 : f32 to vector<16x256xf32>
    %84 = arith.maximumf %83, %82 : vector<16x256xf32>
    %85 = vector.broadcast %cst_37 : f32 to vector<16x256xf32>
    %86 = arith.minimumf %85, %84 : vector<16x256xf32>
    %c1_i32_38 = arith.constant 1 : i32
    %87 = tpu.dynamic_rotate %86 by %c1_i32_38 dim 0 : vector<16x256xf32>, i32 -> vector<16x256xf32>
    %cst_39 = arith.constant 0.000000e+00 : f32
    %88 = vector.broadcast %cst_39 : f32 to vector<16x256xf32>
    %89 = arith.select %25, %87, %88 : vector<16x256xi1>, vector<16x256xf32>
    %90 = arith.addf %89, %86 : vector<16x256xf32>
    %c15_i32_40 = arith.constant 15 : i32
    %91 = tpu.dynamic_rotate %86 by %c15_i32_40 dim 0 : vector<16x256xf32>, i32 -> vector<16x256xf32>
    %cst_41 = arith.constant 0.000000e+00 : f32
    %92 = vector.broadcast %cst_41 : f32 to vector<16x256xf32>
    %93 = arith.select %23, %91, %92 : vector<16x256xi1>, vector<16x256xf32>
    %94 = arith.addf %90, %93 : vector<16x256xf32>
    %c16_i32_42 = arith.constant 16 : i32
    %95 = tpu.dynamic_rotate %94 by %c16_i32_42 dim 1 : vector<16x256xf32>, i32 -> vector<16x256xf32>
    %cst_43 = arith.constant 0.000000e+00 : f32
    %96 = vector.broadcast %cst_43 : f32 to vector<16x256xf32>
    %97 = arith.select %21, %95, %96 : vector<16x256xi1>, vector<16x256xf32>
    %98 = arith.addf %97, %94 : vector<16x256xf32>
    %c240_i32_44 = arith.constant 240 : i32
    %99 = tpu.dynamic_rotate %94 by %c240_i32_44 dim 1 : vector<16x256xf32>, i32 -> vector<16x256xf32>
    %cst_45 = arith.constant 0.000000e+00 : f32
    %100 = vector.broadcast %cst_45 : f32 to vector<16x256xf32>
    %101 = arith.select %19, %99, %100 : vector<16x256xi1>, vector<16x256xf32>
    %102 = arith.addf %98, %101 : vector<16x256xf32>
    %c1_i32_46 = arith.constant 1 : i32
    %103 = tpu.dynamic_rotate %102 by %c1_i32_46 dim 1 : vector<16x256xf32>, i32 -> vector<16x256xf32>
    %cst_47 = arith.constant 0.000000e+00 : f32
    %104 = vector.broadcast %cst_47 : f32 to vector<16x256xf32>
    %105 = arith.select %17, %103, %104 : vector<16x256xi1>, vector<16x256xf32>
    %106 = arith.addf %105, %102 : vector<16x256xf32>
    %c255_i32_48 = arith.constant 255 : i32
    %107 = tpu.dynamic_rotate %102 by %c255_i32_48 dim 1 : vector<16x256xf32>, i32 -> vector<16x256xf32>
    %cst_49 = arith.constant 0.000000e+00 : f32
    %108 = vector.broadcast %cst_49 : f32 to vector<16x256xf32>
    %109 = arith.select %15, %107, %108 : vector<16x256xi1>, vector<16x256xf32>
    %110 = arith.addf %106, %109 : vector<16x256xf32>
    %cst_50 = arith.constant 0.0370370373 : f32
    %111 = vector.broadcast %cst_50 : f32 to vector<16x256xf32>
    %112 = arith.mulf %110, %111 : vector<16x256xf32>
    %cst_51 = arith.constant 5.000000e-01 : f32
    %113 = vector.broadcast %cst_51 : f32 to vector<16x256xf32>
    %114 = arith.cmpf ogt, %7, %113 : vector<16x256xf32>
    %115 = arith.extui %114 : vector<16x256xi1> to vector<16x256xi32>
    %116 = arith.sitofp %115 : vector<16x256xi32> to vector<16x256xf32>
    %cst_52 = arith.constant dense<0.000000e+00> : vector<16xf32>
    %117 = vector.multi_reduction <add>, %116, %cst_52 [1] : vector<16x256xf32> to vector<16xf32>
    %118 = vector.shape_cast %117 : vector<16xf32> to vector<16x1xf32>
    %cst_53 = arith.constant dense<0.000000e+00> : vector<1xf32>
    %119 = vector.multi_reduction <add>, %118, %cst_53 [0] : vector<16x1xf32> to vector<1xf32>
    %120 = vector.shape_cast %119 : vector<1xf32> to vector<1x1xf32>
    %cst_54 = arith.constant 5.000000e-01 : f32
    %121 = vector.broadcast %cst_54 : f32 to vector<16x256xf32>
    %122 = arith.cmpf ogt, %9, %121 : vector<16x256xf32>
    %123 = arith.extui %122 : vector<16x256xi1> to vector<16x256xi32>
    %124 = arith.sitofp %123 : vector<16x256xi32> to vector<16x256xf32>
    %cst_55 = arith.constant dense<0.000000e+00> : vector<16xf32>
    %125 = vector.multi_reduction <add>, %124, %cst_55 [1] : vector<16x256xf32> to vector<16xf32>
    %126 = vector.shape_cast %125 : vector<16xf32> to vector<16x1xf32>
    %cst_56 = arith.constant dense<0.000000e+00> : vector<1xf32>
    %127 = vector.multi_reduction <add>, %126, %cst_56 [0] : vector<16x1xf32> to vector<1xf32>
    %128 = vector.shape_cast %127 : vector<1xf32> to vector<1x1xf32>
    %129 = arith.divf %120, %128 : vector<1x1xf32>
    %130 = vector.broadcast %129 : vector<1x1xf32> to vector<16x256xf32>
    %131 = arith.mulf %112, %130 : vector<16x256xf32>
    %cst_57 = arith.constant 0.000000e+00 : f32
    %132 = vector.broadcast %cst_57 : f32 to vector<16x256xf32>
    %133 = arith.select %114, %131, %132 : vector<16x256xi1>, vector<16x256xf32>
    %c0_58 = arith.constant 0 : index
    %c0_59 = arith.constant 0 : index
    %c0_60 = arith.constant 0 : index
    %134 = vector.load %arg4[%c0_58, %c0_59, %c0_60] : memref<1x16x256xf32, #tpu.memory_space<vmem>>, vector<1x16x256xf32>
    %135 = vector.shape_cast %134 : vector<1x16x256xf32> to vector<16x256xf32>
    %136 = vector.shape_cast %133 : vector<16x256xf32> to vector<1x16x256xf32>
    tpu.vector_store %arg4[%c0_58, %c0_59, %c0_60], %136 {strides = array<i32>} : memref<1x16x256xf32, #tpu.memory_space<vmem>>, vector<1x16x256xf32>,
    return
  }
  func.func @transform_0(%arg0: i32) -> (i32, i32, i32, i32) {
    %c0_i32 = arith.constant 0 : i32
    %c0_i32_0 = arith.constant 0 : i32
    %c0_i32_1 = arith.constant 0 : i32
    %c0_i32_2 = arith.constant 0 : i32
    return %arg0, %c0_i32, %c0_i32_0, %c0_i32_1 : i32, i32, i32, i32
  }
  func.func @transform_1(%arg0: i32) -> (i32, i32, i32) {
    %c0_i32 = arith.constant 0 : i32
    %c0_i32_0 = arith.constant 0 : i32
    %c0_i32_1 = arith.constant 0 : i32
    return %arg0, %c0_i32, %c0_i32_0 : i32, i32, i32
  }
  func.func @transform_2(%arg0: i32) -> (i32, i32, i32) {
    %c0_i32 = arith.constant 0 : i32
    %c0_i32_0 = arith.constant 0 : i32
    %c0_i32_1 = arith.constant 0 : i32
    return %arg0, %c0_i32, %c0_i32_0 : i32, i32, i32
  }
  func.func @transform_3(%arg0: i32) -> (i32, i32, i32) {
    %c0_i32 = arith.constant 0 : i32
    %c0_i32_0 = arith.constant 0 : i32
    %c0_i32_1 = arith.constant 0 : i32
    return %arg0, %c0_i32, %c0_i32_0 : i32, i32, i32
  }
}

module attributes {stable_mosaic.version = 11 : i64} {
  func.func @_soft_mask_kernel(%arg0: i32, %arg1: memref<32x256xf32, #tpu.memory_space<vmem>>, %arg2: memref<32x256xf32, #tpu.memory_space<vmem>>, %arg3: memref<32x256xf32, #tpu.memory_space<vmem>>, %arg4: memref<32x256xf32, #tpu.memory_space<vmem>>) attributes {dimension_semantics = [#tpu.dimension_semantics<arbitrary>], iteration_bounds = array<i64: 1>, scalar_prefetch = 0 : i64, scratch_operands = 0 : i64, tpu.core_type = #tpu.core_type<tc>, window_params = [{pipeline_mode = #tpu.pipeline_mode<synchronous>, transform_indices = @transform_0, window_bounds = array<i64: 32, 256>}, {pipeline_mode = #tpu.pipeline_mode<synchronous>, transform_indices = @transform_1, window_bounds = array<i64: 32, 256>}, {pipeline_mode = #tpu.pipeline_mode<synchronous>, transform_indices = @transform_2, window_bounds = array<i64: 32, 256>}, {pipeline_mode = #tpu.pipeline_mode<synchronous>, transform_indices = @transform_3, window_bounds = array<i64: 32, 256>}]} {
    %c0 = arith.constant 0 : index
    %c0_0 = arith.constant 0 : index
    %0 = vector.load %arg1[%c0, %c0_0] : memref<32x256xf32, #tpu.memory_space<vmem>>, vector<32x256xf32>
    %c0_1 = arith.constant 0 : index
    %c0_2 = arith.constant 0 : index
    %1 = vector.load %arg2[%c0_1, %c0_2] : memref<32x256xf32, #tpu.memory_space<vmem>>, vector<32x256xf32>
    %cst = arith.constant 5.000000e-01 : f32
    %2 = vector.broadcast %cst : f32 to vector<32x256xf32>
    %3 = arith.subf %0, %2 : vector<32x256xf32>
    %cst_3 = arith.constant 5.000000e+00 : f32
    %4 = vector.broadcast %cst_3 : f32 to vector<32x256xf32>
    %5 = arith.mulf %3, %4 : vector<32x256xf32>
    %6 = arith.negf %5 : vector<32x256xf32>
    %7 = math.exp %6 : vector<32x256xf32>
    %cst_4 = arith.constant 1.000000e+00 : f32
    %8 = vector.broadcast %cst_4 : f32 to vector<32x256xf32>
    %9 = arith.addf %8, %7 : vector<32x256xf32>
    %10 = arith.divf %8, %9 : vector<32x256xf32>
    %cst_5 = arith.constant 5.000000e-01 : f32
    %11 = vector.broadcast %cst_5 : f32 to vector<32x256xf32>
    %12 = arith.cmpf ogt, %1, %11 : vector<32x256xf32>
    %cst_6 = arith.constant 0.000000e+00 : f32
    %13 = vector.broadcast %cst_6 : f32 to vector<32x256xf32>
    %14 = arith.select %12, %10, %13 : vector<32x256xi1>, vector<32x256xf32>
    %c0_7 = arith.constant 0 : index
    %c0_8 = arith.constant 0 : index
    %15 = vector.load %arg4[%c0_7, %c0_8] : memref<32x256xf32, #tpu.memory_space<vmem>>, vector<32x256xf32>
    tpu.vector_store %arg4[%c0_7, %c0_8], %14 {strides = array<i32>} : memref<32x256xf32, #tpu.memory_space<vmem>>, vector<32x256xf32>,
    %16 = arith.addf %14, %1 : vector<32x256xf32>
    %c0_9 = arith.constant 0 : index
    %c0_10 = arith.constant 0 : index
    %17 = vector.load %arg3[%c0_9, %c0_10] : memref<32x256xf32, #tpu.memory_space<vmem>>, vector<32x256xf32>
    tpu.vector_store %arg3[%c0_9, %c0_10], %16 {strides = array<i32>} : memref<32x256xf32, #tpu.memory_space<vmem>>, vector<32x256xf32>,
    return
  }
  func.func @transform_0(%arg0: i32) -> (i32, i32) {
    %c0_i32 = arith.constant 0 : i32
    %c0_i32_0 = arith.constant 0 : i32
    %c0_i32_1 = arith.constant 0 : i32
    return %c0_i32, %c0_i32_0 : i32, i32
  }
  func.func @transform_1(%arg0: i32) -> (i32, i32) {
    %c0_i32 = arith.constant 0 : i32
    %c0_i32_0 = arith.constant 0 : i32
    %c0_i32_1 = arith.constant 0 : i32
    return %c0_i32, %c0_i32_0 : i32, i32
  }
  func.func @transform_2(%arg0: i32) -> (i32, i32) {
    %c0_i32 = arith.constant 0 : i32
    %c0_i32_0 = arith.constant 0 : i32
    %c0_i32_1 = arith.constant 0 : i32
    return %c0_i32, %c0_i32_0 : i32, i32
  }
  func.func @transform_3(%arg0: i32) -> (i32, i32) {
    %c0_i32 = arith.constant 0 : i32
    %c0_i32_0 = arith.constant 0 : i32
    %c0_i32_1 = arith.constant 0 : i32
    return %c0_i32, %c0_i32_0 : i32, i32
  }
}

</mosaic_0001>

<llo_original>
// kernel: pre_register_forward.6
$region0: #{pre_register_forward.6}
  #allocation0 [shape = 'u32[]', space=smem, size = 0x4, offset = 0x4, fixed_abs, tag = 'smem constant byte address 0x4 - core index']
  #allocation1 [shape = 'u32[144,128]{1,0:T(1,128)}', space=vmem, size = 0x12000, scoped, tag = 'internal scratch']
  %s0 = inlined_call_operand.hbm [shape: f32[2,16], index: 0, kind: input, shape index: {}]
  %s1 = inlined_call_operand.hbm [shape: f32[16], index: 1, kind: input, shape index: {}]
  %s2 = inlined_call_operand.vmem [shape: f32[16,3], index: 2, kind: input, shape index: {}]
  %s3 = inlined_call_operand.hbm [shape: f32[3], index: 3, kind: input, shape index: {}]
  %s4 = inlined_call_operand.vmem [shape: f32[2,16,256], index: 4, kind: input, shape index: {}]
  %s5 = inlined_call_operand.vmem [shape: f32[2,16,256], index: 5, kind: input, shape index: {}]
  %s6 = inlined_call_operand.vmem [shape: f32[2,3,16,256], index: 6, kind: output, shape index: {}]
  %s7 = sld [smem:[#allocation0]]
  $region73: #{pre_register_forward.6} parent=0
    _
  %s9 = ssub.s32 1, %s7
  %s10 = scalar_select 0, %s9, %s7
  $region1: #{pre_register_forward.6} parent=0
    #allocation2 [shape = 'u8[1024]{0}', space=smem, size = 0x400, scoped, tag = 'input window, operand 0, single buffered']
    #allocation3 [shape = 's32[2]{0}', space=sflag, size = 0x8, scoped, tag = 'scoped memory for pre_register_forward.6']
    #allocation4 [shape = 's32[2]{0}', space=sflag, size = 0x8, scoped, tag = 'scoped memory for pre_register_forward.6']
    #allocation5 [shape = 'u8[512]{0}', space=smem, size = 0x200, scoped, tag = 'input window, operand 1, single buffered']
    #allocation6 [shape = 's32[1]{0}', space=sflag, size = 0x4, scoped, tag = 'scoped memory for pre_register_forward.6']
    #allocation7 [shape = 'u8[8192]{0}', space=smem, size = 0x2000, scoped, tag = 'input window, operand 2, single buffered']
    #allocation8 [shape = 'u8[512]{0}', space=smem, size = 0x200, scoped, tag = 'input window, operand 3, single buffered']
    %11 = vsyncpa [#allocation3], 0
    %12 = vsyncpa [#allocation6], 0
    %13 = vsyncpa [#allocation4], 0
    loop: start=0, step=1, limit=4
    $region2: #{pre_register_forward.6} parent=1 // loop_pre_header
      _
    $region3: #{pre_register_forward.6} parent=1 // loop_header
      %s15 = sphi 0, %s19
      %p16 = scmp.ge.s32.totalorder %s15, 4
      %s23 = sphi 0, %s23
      %s25 = sphi 0, %s23
      %s26 = sphi 0, %s25
      %s40 = sphi 0, %s26
      %s44 = sphi 0, %s44
      %s46 = sphi 0, %s44
      %s47 = sphi 0, %s46
      %s61 = sphi 0, %s47
      %s65 = sphi 0, %s65
      %s67 = sphi 0, %s65
      %s68 = sphi 0, %s67
      %s82 = sphi 0, %s68
      %s86 = sphi 0, %s86
      %s88 = sphi 0, %s86
      %s89 = sphi 0, %s88
      %s103 = sphi 0, %s89
      %s109 = sphi 0, %s111
      %s112 = sphi 0, %s109
      %s113 = sphi 0, %s112
      %s129 = sphi 0, %s113
      %s135 = sphi 0, %s137
      %s138 = sphi 0, %s135
      %s139 = sphi 0, %s138
      %s155 = sphi 0, %s139
      %s161 = sphi 0, %s163
      %s164 = sphi 0, %s161
      %s165 = sphi 0, %s164
      %s181 = sphi 0, %s165
    $region4: #{pre_register_forward.6} parent=1 // loop_header_branch
      %18 = sbr.rel (%p16) target = $region8
    $region5: #{pre_register_forward.6} parent=1 // loop_body
      %s20 = ssub.s32 %s15, 1
      %s21 = ssub.s32 %s15, 2
      %s22 = sadd.s32 %s15, 1
      %s24 = sadd.s32 %s23, 1
      %p27 = scmp.eq.s32.totalorder %s15, 1
      %p28 = scmp.ne.s32.totalorder %s23, %s25
      %p29 = scmp.eq.s32.totalorder %s15, 0
      %p30 = por %p28, %p29
      %p31 = scmp.ne.s32.totalorder %s23, %s25
      %p32 = scmp.eq.s32.totalorder %s20, 1
      %p33 = por %p31, %p32
      %p34 = scmp.ne.s32.totalorder %s25, %s26
      %p35 = scmp.eq.s32.totalorder %s20, 0
      %p36 = por %p34, %p35
      %p37 = scmp.ne.s32.totalorder %s25, %s26
      %p38 = scmp.eq.s32.totalorder %s21, 1
      %p39 = por %p37, %p38
      %p41 = scmp.ne.s32.totalorder %s26, %s40
      %p42 = scmp.eq.s32.totalorder %s21, 0
      %p43 = por %p41, %p42
      %s45 = sadd.s32 %s44, 1
      %p48 = scmp.eq.s32.totalorder %s15, 1
      %p49 = scmp.ne.s32.totalorder %s44, %s46
      %p50 = scmp.eq.s32.totalorder %s15, 0
      %p51 = por %p49, %p50
      %p52 = scmp.ne.s32.totalorder %s44, %s46
      %p53 = scmp.eq.s32.totalorder %s20, 1
      %p54 = por %p52, %p53
      %p55 = scmp.ne.s32.totalorder %s46, %s47
      %p56 = scmp.eq.s32.totalorder %s20, 0
      %p57 = por %p55, %p56
      %p58 = scmp.ne.s32.totalorder %s46, %s47
      %p59 = scmp.eq.s32.totalorder %s21, 1
      %p60 = por %p58, %p59
      %p62 = scmp.ne.s32.totalorder %s47, %s61
      %p63 = scmp.eq.s32.totalorder %s21, 0
      %p64 = por %p62, %p63
      %s66 = sadd.s32 %s65, 1
      %p69 = scmp.eq.s32.totalorder %s15, 1
      %p70 = scmp.ne.s32.totalorder %s65, %s67
      %p71 = scmp.eq.s32.totalorder %s15, 0
      %p72 = por %p70, %p71
      %p73 = scmp.ne.s32.totalorder %s65, %s67
      %p74 = scmp.eq.s32.totalorder %s20, 1
      %p75 = por %p73, %p74
      %p76 = scmp.ne.s32.totalorder %s67, %s68
      %p77 = scmp.eq.s32.totalorder %s20, 0
      %p78 = por %p76, %p77
      %p79 = scmp.ne.s32.totalorder %s67, %s68
      %p80 = scmp.eq.s32.totalorder %s21, 1
      %p81 = por %p79, %p80
      %p83 = scmp.ne.s32.totalorder %s68, %s82
      %p84 = scmp.eq.s32.totalorder %s21, 0
      %p85 = por %p83, %p84
      %s87 = sadd.s32 %s86, 1
      %p90 = scmp.eq.s32.totalorder %s15, 1
      %p91 = scmp.ne.s32.totalorder %s86, %s88
      %p92 = scmp.eq.s32.totalorder %s15, 0
      %p93 = por %p91, %p92
      %p94 = scmp.ne.s32.totalorder %s86, %s88
      %p95 = scmp.eq.s32.totalorder %s20, 1
      %p96 = por %p94, %p95
      %p97 = scmp.ne.s32.totalorder %s88, %s89
      %p98 = scmp.eq.s32.totalorder %s20, 0
      %p99 = por %p97, %p98
      %p100 = scmp.ne.s32.totalorder %s88, %s89
      %p101 = scmp.eq.s32.totalorder %s21, 1
      %p102 = por %p100, %p101
      %p104 = scmp.ne.s32.totalorder %s89, %s103
      %p105 = scmp.eq.s32.totalorder %s21, 0
      %p106 = por %p104, %p105
      %s107 = ssub.s32 %s15, %s22
      %p108 = scmp.eq.s32.totalorder %s107, 0
      %s110 = sadd.s32 %s109, 1
      %s111 = scalar_select %p108, %s109, %s110
      %p114 = pneg %p108
      %p115 = scmp.eq.s32.totalorder %s15, 1
      %p116 = por %p114, %p115
      %p117 = scmp.ne.s32.totalorder %s109, %s112
      %p118 = scmp.eq.s32.totalorder %s15, 0
      %p119 = por %p117, %p118
      %p120 = scmp.ne.s32.totalorder %s109, %s112
      %p121 = scmp.eq.s32.totalorder %s20, 1
      %p122 = por %p120, %p121
      %p123 = scmp.ne.s32.totalorder %s112, %s113
      %p124 = scmp.eq.s32.totalorder %s20, 0
      %p125 = por %p123, %p124
      %p126 = scmp.ne.s32.totalorder %s112, %s113
      %p127 = scmp.eq.s32.totalorder %s21, 1
      %p128 = por %p126, %p127
      %p130 = scmp.ne.s32.totalorder %s113, %s129
      %p131 = scmp.eq.s32.totalorder %s21, 0
      %p132 = por %p130, %p131
      %s133 = ssub.s32 %s15, %s22
      %p134 = scmp.eq.s32.totalorder %s133, 0
      %s136 = sadd.s32 %s135, 1
      %s137 = scalar_select %p134, %s135, %s136
      %p140 = pneg %p134
      %p141 = scmp.eq.s32.totalorder %s15, 1
      %p142 = por %p140, %p141
      %p143 = scmp.ne.s32.totalorder %s135, %s138
      %p144 = scmp.eq.s32.totalorder %s15, 0
      %p145 = por %p143, %p144
      %p146 = scmp.ne.s32.totalorder %s135, %s138
      %p147 = scmp.eq.s32.totalorder %s20, 1
      %p148 = por %p146, %p147
      %p149 = scmp.ne.s32.totalorder %s138, %s139
      %p150 = scmp.eq.s32.totalorder %s20, 0
      %p151 = por %p149, %p150
      %p152 = scmp.ne.s32.totalorder %s138, %s139
      %p153 = scmp.eq.s32.totalorder %s21, 1
      %p154 = por %p152, %p153
      %p156 = scmp.ne.s32.totalorder %s139, %s155
      %p157 = scmp.eq.s32.totalorder %s21, 0
      %p158 = por %p156, %p157
      %s159 = ssub.s32 %s15, %s22
      %p160 = scmp.eq.s32.totalorder %s159, 0
      %s162 = sadd.s32 %s161, 1
      %s163 = scalar_select %p160, %s161, %s162
      %p166 = pneg %p160
      %p167 = scmp.eq.s32.totalorder %s15, 1
      %p168 = por %p166, %p167
      %p169 = scmp.ne.s32.totalorder %s161, %s164
      %p170 = scmp.eq.s32.totalorder %s15, 0
      %p171 = por %p169, %p170
      %p172 = scmp.ne.s32.totalorder %s161, %s164
      %p173 = scmp.eq.s32.totalorder %s20, 1
      %p174 = por %p172, %p173
      %p175 = scmp.ne.s32.totalorder %s164, %s165
      %p176 = scmp.eq.s32.totalorder %s20, 0
      %p177 = por %p175, %p176
      %p178 = scmp.ne.s32.totalorder %s164, %s165
      %p179 = scmp.eq.s32.totalorder %s21, 1
      %p180 = por %p178, %p179
      %p182 = scmp.ne.s32.totalorder %s165, %s181
      %p183 = scmp.eq.s32.totalorder %s21, 0
      %p184 = por %p182, %p183
      %p185 = scmp.le.s32.totalorder 1, %s15
      %p186 = scmp.lt.s32.totalorder %s15, 3
      %p187 = pnand %p185, %p186
      %p188 = pneg %p187
      // Predicated region
      $region9: #{pre_register_forward.6} parent=5 // pred_check
        _
      $region10: #{pre_register_forward.6} parent=5 // pred_check_branch
        %190 = sbr.rel (%p187) target = $region12
      $region11: #{pre_register_forward.6} parent=5 // pred_region
        %s191 = ssub.s32 %s15, 1
        // Predicated region
        $region13: #{pre_register_forward.6} parent=11 // pred_check
          %p192 = pneg %p36
        $region14: #{pre_register_forward.6} parent=11 // pred_check_branch
          %194 = sbr.rel (%p192) target = $region16
        $region15: #{pre_register_forward.6} parent=11 // pred_region
          %s196 = ssub.s32 32, 32
          %197 = vsyncadd [#allocation3], %s196
          %200 = dma.hbm_to_smem %s0, 32, [#allocation2], [#allocation3]
        $region16: #{pre_register_forward.6} parent=11 // pred_fallthru
          _
        // Predicated region
        $region17: #{pre_register_forward.6} parent=11 // pred_check
          %p201 = pneg %p57
        $region18: #{pre_register_forward.6} parent=11 // pred_check_branch
          %203 = sbr.rel (%p201) target = $region20
        $region19: #{pre_register_forward.6} parent=11 // pred_region
          %s205 = ssub.s32 16, 16
          %206 = vsyncadd [#allocation6], %s205
          %209 = dma.hbm_to_smem %s1, 16, [#allocation5], [#allocation6]
        $region20: #{pre_register_forward.6} parent=11 // pred_fallthru
          _
        // Predicated region
        $region21: #{pre_register_forward.6} parent=11 // pred_check
          %p210 = pneg %p78
        $region22: #{pre_register_forward.6} parent=11 // pred_check_branch
          %212 = sbr.rel (%p210) target = $region24
        $region23: #{pre_register_forward.6} parent=11 // pred_region
          %s214 = ssub.s32 256, 256
          %215 = vsyncadd [#allocation4], %s214
          %s216 = sshll.u32 %s2, 4
          %s217 = int_to_ptr.vmem [resolvable:$true] %s216
          %222 = dma.vmem_to_smem %s217, 256, [#allocation7], [#allocation4], 128, 128, 8
        $region24: #{pre_register_forward.6} parent=11 // pred_fallthru
          _
        // Predicated region
        $region25: #{pre_register_forward.6} parent=11 // pred_check
          %p223 = pneg %p99
        $region26: #{pre_register_forward.6} parent=11 // pred_check_branch
          %225 = sbr.rel (%p223) target = $region28
        $region27: #{pre_register_forward.6} parent=11 // pred_region
          %s227 = ssub.s32 16, 16
          %228 = vsyncadd [#allocation6], %s227
          %231 = dma.hbm_to_smem %s3, 16, [#allocation8], [#allocation6]
        $region28: #{pre_register_forward.6} parent=11 // pred_fallthru
          _
      $region12: #{pre_register_forward.6} parent=5 // pred_fallthru
        _
      %p232 = scmp.lt.s32.totalorder %s15, 2
      // Predicated region
      $region29: #{pre_register_forward.6} parent=5 // pred_check
        %p233 = pneg %p232
      $region30: #{pre_register_forward.6} parent=5 // pred_check_branch
        %235 = sbr.rel (%p233) target = $region32
      $region31: #{pre_register_forward.6} parent=5 // pred_region
        // Predicated region
        $region33: #{pre_register_forward.6} parent=31 // pred_check
          %p236 = pneg %p119
        $region34: #{pre_register_forward.6} parent=31 // pred_check_branch
          %238 = sbr.rel (%p236) target = $region36
        $region35: #{pre_register_forward.6} parent=31 // pred_region
          %p239 = scmp.lt.s32.totalorder %s15, 1
          %s240 = scalar_select %p239, %s15, 1
          %s241 = smul.addr %s240, 4
          %s242 = smul.addr %s241, 8
          %s243 = scalar_lea.vmem %s4, %s242
        $region36: #{pre_register_forward.6} parent=31 // pred_fallthru
          _
        // Predicated region
        $region37: #{pre_register_forward.6} parent=31 // pred_check
          %p244 = pneg %p145
        $region38: #{pre_register_forward.6} parent=31 // pred_check_branch
          %246 = sbr.rel (%p244) target = $region40
        $region39: #{pre_register_forward.6} parent=31 // pred_region
          %p247 = scmp.lt.s32.totalorder %s15, 1
          %s248 = scalar_select %p247, %s15, 1
          %s249 = smul.addr %s248, 4
          %s250 = smul.addr %s249, 8
          %s251 = scalar_lea.vmem %s5, %s250
        $region40: #{pre_register_forward.6} parent=31 // pred_fallthru
          _
      $region32: #{pre_register_forward.6} parent=5 // pred_fallthru
        _
      %p252 = scmp.le.s32.totalorder 1, %s15
      %p253 = scmp.lt.s32.totalorder %s15, 3
      %p254 = pnand %p252, %p253
      %p255 = pneg %p254
      // Predicated region
      $region41: #{pre_register_forward.6} parent=5 // pred_check
        _
      $region42: #{pre_register_forward.6} parent=5 // pred_check_branch
        %257 = sbr.rel (%p254) target = $region44
      $region43: #{pre_register_forward.6} parent=5 // pred_region
        %s258 = ssub.s32 %s15, 1
        // Predicated region
        $region45: #{pre_register_forward.6} parent=43 // pred_check
          %p259 = pneg %p36
        $region46: #{pre_register_forward.6} parent=43 // pred_check_branch
          %261 = sbr.rel (%p259) target = $region48
        $region47: #{pre_register_forward.6} parent=43 // pred_region
          %262 = dma.done [#allocation3], 32
        $region48: #{pre_register_forward.6} parent=43 // pred_fallthru
          _
        // Predicated region
        $region49: #{pre_register_forward.6} parent=43 // pred_check
          %p263 = pneg %p57
        $region50: #{pre_register_forward.6} parent=43 // pred_check_branch
          %265 = sbr.rel (%p263) target = $region52
        $region51: #{pre_register_forward.6} parent=43 // pred_region
          %266 = dma.done [#allocation6], 16
        $region52: #{pre_register_forward.6} parent=43 // pred_fallthru
          _
        // Predicated region
        $region53: #{pre_register_forward.6} parent=43 // pred_check
          %p267 = pneg %p78
        $region54: #{pre_register_forward.6} parent=43 // pred_check_branch
          %269 = sbr.rel (%p267) target = $region56
        $region55: #{pre_register_forward.6} parent=43 // pred_region
          %270 = dma.done [#allocation4], 256
        $region56: #{pre_register_forward.6} parent=43 // pred_fallthru
          _
        // Predicated region
        $region57: #{pre_register_forward.6} parent=43 // pred_check
          %p271 = pneg %p99
        $region58: #{pre_register_forward.6} parent=43 // pred_check_branch
          %273 = sbr.rel (%p271) target = $region60
        $region59: #{pre_register_forward.6} parent=43 // pred_region
          %274 = dma.done [#allocation6], 16
        $region60: #{pre_register_forward.6} parent=43 // pred_fallthru
          _
        %275 = sfence
        %p276 = pneg %p36
        %p277 = pneg %p33
        %p278 = pneg %p57
        %p279 = pneg %p54
        %p280 = pneg %p78
        %p281 = pneg %p75
        %p282 = pneg %p99
        %p283 = pneg %p96
        %p284 = scmp.lt.s32.totalorder %s20, 1
        %s285 = scalar_select %p284, %s20, 1
        %s286 = smul.addr %s285, 4
        %s287 = smul.addr %s286, 8
        %s288 = scalar_lea.vmem %s4, %s287
        %p289 = pneg %p125
        %p290 = pneg %p122
        %p291 = scmp.lt.s32.totalorder %s20, 1
        %s292 = scalar_select %p291, %s20, 1
        %s293 = smul.addr %s292, 4
        %s294 = smul.addr %s293, 8
        %s295 = scalar_lea.vmem %s5, %s294
        %p296 = pneg %p151
        %p297 = pneg %p148
        %p298 = pneg %p177
        %p299 = pneg %p174
        %p300 = scmp.lt.s32.totalorder %s20, 1
        %s301 = scalar_select %p300, %s20, 1
        %s302 = smul.addr %s301, 12
        %s303 = smul.addr %s302, 8
        %s304 = scalar_lea.vmem %s6, %s303
        %p305 = scmp.lt.s32.totalorder %s20, 1
        %s306 = scalar_select %p305, %s20, 1
        %s307 = smul.addr %s306, 4
        %s308 = smul.addr %s307, 8
        %s309 = scalar_lea.vmem %s4, %s308
        %p310 = scmp.lt.s32.totalorder %s20, 1
        %s311 = scalar_select %p310, %s20, 1
        %s312 = smul.addr %s311, 4
        %s313 = smul.addr %s312, 8
        %s314 = scalar_lea.vmem %s5, %s313
        %p315 = scmp.lt.s32.totalorder %s20, 1
        %s316 = scalar_select %p315, %s20, 1
        %s317 = smul.addr %s316, 12
        %s318 = smul.addr %s317, 8
        %s319 = scalar_lea.vmem %s6, %s318
        %v320 = vld [vmem:[%s309] sm:$0xff]
        %v321 = vld [vmem:[%s309 + $0x8] sm:$0xff]
        %v322 = vld [vmem:[%s309 + $0x10] sm:$0xff]
        %v323 = vld [vmem:[%s309 + $0x18] sm:$0xff]
        %v324 = vld [vmem:[%s314] sm:$0xff]
        %v325 = vld [vmem:[%s314 + $0x8] sm:$0xff]
        %v326 = vld [vmem:[%s314 + $0x10] sm:$0xff]
        %v327 = vld [vmem:[%s314 + $0x18] sm:$0xff]
        %s328 = sld [smem:[#allocation8]]
        %v329 = vstv %s328
        %v330 = vadd.f32 %v329, 0.0
        %s331 = sld [smem:[#allocation8 + $0x1]]
        %v332 = vstv %s331
        %v333 = vadd.f32 %v332, 0.0
        %s334 = sld [smem:[#allocation8 + $0x2]]
        %v335 = vstv %s334
        %v336 = vadd.f32 %v335, 0.0
        %s337 = sld [smem:[#allocation2]]
        %v338 = vstv %s337
        %v339 = vmul.f32 %v320, %v338
        %v340 = vmul.f32 %v321, %v338
        %v341 = vmul.f32 %v322, %v338
        %v342 = vmul.f32 %v323, %v338
        %s343 = sld [smem:[#allocation2 + $0x80]]
        %v344 = vstv %s343
        %v345 = vmul.f32 %v324, %v344
        %v346 = vmul.f32 %v325, %v344
        %v347 = vmul.f32 %v326, %v344
        %v348 = vmul.f32 %v327, %v344
        %v349 = vadd.f32 %v339, %v345
        %v350 = vadd.f32 %v340, %v346
        %v351 = vadd.f32 %v341, %v347
        %v352 = vadd.f32 %v342, %v348
        %s353 = sld [smem:[#allocation5]]
        %v354 = vstv %s353
        %v355 = vadd.f32 %v349, %v354
        %v356 = vadd.f32 %v350, %v354
        %v357 = vadd.f32 %v351, %v354
        %v358 = vadd.f32 %v352, %v354
        %v359 = vtanh.pop %v355
        %v360 = vtanh.pop %v356
        %v361 = vtanh.pop %v357
        %v362 = vtanh.pop %v358
        %s363 = sld [smem:[#allocation7]]
        %v364 = vstv %s363
        %v365 = vmul.f32 %v359, %v364
        %v366 = vmul.f32 %v360, %v364
        %v367 = vmul.f32 %v361, %v364
        %v368 = vmul.f32 %v362, %v364
        %v369 = vadd.f32 %v330, %v365
        %v370 = vadd.f32 %v330, %v366
        %v371 = vadd.f32 %v330, %v367
        %v372 = vadd.f32 %v330, %v368
        %s373 = sld [smem:[#allocation7 + $0x1]]
        %v374 = vstv %s373
        %v375 = vmul.f32 %v359, %v374
        %v376 = vmul.f32 %v360, %v374
        %v377 = vmul.f32 %v361, %v374
        %v378 = vmul.f32 %v362, %v374
        %v379 = vadd.f32 %v333, %v375
        %v380 = vadd.f32 %v333, %v376
        %v381 = vadd.f32 %v333, %v377
        %v382 = vadd.f32 %v333, %v378
        %s383 = sld [smem:[#allocation7 + $0x2]]
        %v384 = vstv %s383
        %v385 = vmul.f32 %v359, %v384
        %v386 = vmul.f32 %v360, %v384
        %v387 = vmul.f32 %v361, %v384
        %v388 = vmul.f32 %v362, %v384
        %v389 = vadd.f32 %v336, %v385
        %v390 = vadd.f32 %v336, %v386
        %v391 = vadd.f32 %v336, %v387
        %v392 = vadd.f32 %v336, %v388
        %s393 = sld [smem:[#allocation2 + $0x1]]
        %v394 = vstv %s393
        %v395 = vmul.f32 %v320, %v394
        %v396 = vmul.f32 %v321, %v394
        %v397 = vmul.f32 %v322, %v394
        %v398 = vmul.f32 %v323, %v394
        %s399 = sld [smem:[#allocation2 + $0x81]]
        %v400 = vstv %s399
        %v401 = vmul.f32 %v324, %v400
        %v402 = vmul.f32 %v325, %v400
        %v403 = vmul.f32 %v326, %v400
        %v404 = vmul.f32 %v327, %v400
        %v405 = vadd.f32 %v395, %v401
        %v406 = vadd.f32 %v396, %v402
        %v407 = vadd.f32 %v397, %v403
        %v408 = vadd.f32 %v398, %v404
        %s409 = sld [smem:[#allocation5 + $0x1]]
        %v410 = vstv %s409
        %v411 = vadd.f32 %v405, %v410
        %v412 = vadd.f32 %v406, %v410
        %v413 = vadd.f32 %v407, %v410
        %v414 = vadd.f32 %v408, %v410
        %v415 = vtanh.pop %v411
        %v416 = vtanh.pop %v412
        %v417 = vtanh.pop %v413
        %v418 = vtanh.pop %v414
        %s419 = sld [smem:[#allocation7 + $0x80]]
        %v420 = vstv %s419
        %v421 = vmul.f32 %v415, %v420
        %v422 = vmul.f32 %v416, %v420
        %v423 = vmul.f32 %v417, %v420
        %v424 = vmul.f32 %v418, %v420
        %v425 = vadd.f32 %v369, %v421
        %v426 = vadd.f32 %v370, %v422
        %v427 = vadd.f32 %v371, %v423
        %v428 = vadd.f32 %v372, %v424
        %s429 = sld [smem:[#allocation7 + $0x81]]
        %v430 = vstv %s429
        %v431 = vmul.f32 %v415, %v430
        %v432 = vmul.f32 %v416, %v430
        %v433 = vmul.f32 %v417, %v430
        %v434 = vmul.f32 %v418, %v430
        %v435 = vadd.f32 %v379, %v431
        %v436 = vadd.f32 %v380, %v432
        %v437 = vadd.f32 %v381, %v433
        %v438 = vadd.f32 %v382, %v434
        %s439 = sld [smem:[#allocation7 + $0x82]]
        %v440 = vstv %s439
        %v441 = vmul.f32 %v415, %v440
        %v442 = vmul.f32 %v416, %v440
        %v443 = vmul.f32 %v417, %v440
        %v444 = vmul.f32 %v418, %v440
        %v445 = vadd.f32 %v389, %v441
        %v446 = vadd.f32 %v390, %v442
        %v447 = vadd.f32 %v391, %v443
        %v448 = vadd.f32 %v392, %v444
        %s449 = sld [smem:[#allocation2 + $0x2]]
        %v450 = vstv %s449
        %v451 = vmul.f32 %v320, %v450
        %v452 = vmul.f32 %v321, %v450
        %v453 = vmul.f32 %v322, %v450
        %v454 = vmul.f32 %v323, %v450
        %s455 = sld [smem:[#allocation2 + $0x82]]
        %v456 = vstv %s455
        %v457 = vmul.f32 %v324, %v456
        %v458 = vmul.f32 %v325, %v456
        %v459 = vmul.f32 %v326, %v456
        %v460 = vmul.f32 %v327, %v456
        %v461 = vadd.f32 %v451, %v457
        %v462 = vadd.f32 %v452, %v458
        %v463 = vadd.f32 %v453, %v459
        %v464 = vadd.f32 %v454, %v460
        %s465 = sld [smem:[#allocation5 + $0x2]]
        %v466 = vstv %s465
        %v467 = vadd.f32 %v461, %v466
        %v468 = vadd.f32 %v462, %v466
        %v469 = vadd.f32 %v463, %v466
        %v470 = vadd.f32 %v464, %v466
        %v471 = vtanh.pop %v467
        %v472 = vtanh.pop %v468
        %v473 = vtanh.pop %v469
        %v474 = vtanh.pop %v470
        %s475 = sld [smem:[#allocation7 + $0x100]]
        %v476 = vstv %s475
        %v477 = vmul.f32 %v471, %v476
        %v478 = vmul.f32 %v472, %v476
        %v479 = vmul.f32 %v473, %v476
        %v480 = vmul.f32 %v474, %v476
        %v481 = vadd.f32 %v425, %v477
        %v482 = vadd.f32 %v426, %v478
        %v483 = vadd.f32 %v427, %v479
        %v484 = vadd.f32 %v428, %v480
        %s485 = sld [smem:[#allocation7 + $0x101]]
        %v486 = vstv %s485
        %v487 = vmul.f32 %v471, %v486
        %v488 = vmul.f32 %v472, %v486
        %v489 = vmul.f32 %v473, %v486
        %v490 = vmul.f32 %v474, %v486
        %v491 = vadd.f32 %v435, %v487
        %v492 = vadd.f32 %v436, %v488
        %v493 = vadd.f32 %v437, %v489
        %v494 = vadd.f32 %v438, %v490
        %s495 = sld [smem:[#allocation7 + $0x102]]
        %v496 = vstv %s495
        %v497 = vmul.f32 %v471, %v496
        %v498 = vmul.f32 %v472, %v496
        %v499 = vmul.f32 %v473, %v496
        %v500 = vmul.f32 %v474, %v496
        %v501 = vadd.f32 %v445, %v497
        %v502 = vadd.f32 %v446, %v498
        %v503 = vadd.f32 %v447, %v499
        %v504 = vadd.f32 %v448, %v500
        %s505 = sld [smem:[#allocation2 + $0x3]]
        %v506 = vstv %s505
        %v507 = vmul.f32 %v320, %v506
        %v508 = vmul.f32 %v321, %v506
        %v509 = vmul.f32 %v322, %v506
        %v510 = vmul.f32 %v323, %v506
        %s511 = sld [smem:[#allocation2 + $0x83]]
        %v512 = vstv %s511
        %v513 = vmul.f32 %v324, %v512
        %v514 = vmul.f32 %v325, %v512
        %v515 = vmul.f32 %v326, %v512
        %v516 = vmul.f32 %v327, %v512
        %v517 = vadd.f32 %v507, %v513
        %v518 = vadd.f32 %v508, %v514
        %v519 = vadd.f32 %v509, %v515
        %v520 = vadd.f32 %v510, %v516
        %s521 = sld [smem:[#allocation5 + $0x3]]
        %v522 = vstv %s521
        %v523 = vadd.f32 %v517, %v522
        %v524 = vadd.f32 %v518, %v522
        %v525 = vadd.f32 %v519, %v522
        %v526 = vadd.f32 %v520, %v522
        %v527 = vtanh.pop %v523
        %v528 = vtanh.pop %v524
        %v529 = vtanh.pop %v525
        %v530 = vtanh.pop %v526
        %s531 = sld [smem:[#allocation7 + $0x180]]
        %v532 = vstv %s531
        %v533 = vmul.f32 %v527, %v532
        %v534 = vmul.f32 %v528, %v532
        %v535 = vmul.f32 %v529, %v532
        %v536 = vmul.f32 %v530, %v532
        %v537 = vadd.f32 %v481, %v533
        %v538 = vadd.f32 %v482, %v534
        %v539 = vadd.f32 %v483, %v535
        %v540 = vadd.f32 %v484, %v536
        %s541 = sld [smem:[#allocation7 + $0x181]]
        %v542 = vstv %s541
        %v543 = vmul.f32 %v527, %v542
        %v544 = vmul.f32 %v528, %v542
        %v545 = vmul.f32 %v529, %v542
        %v546 = vmul.f32 %v530, %v542
        %v547 = vadd.f32 %v491, %v543
        %v548 = vadd.f32 %v492, %v544
        %v549 = vadd.f32 %v493, %v545
        %v550 = vadd.f32 %v494, %v546
        %s551 = sld [smem:[#allocation7 + $0x182]]
        %v552 = vstv %s551
        %v553 = vmul.f32 %v527, %v552
        %v554 = vmul.f32 %v528, %v552
        %v555 = vmul.f32 %v529, %v552
        %v556 = vmul.f32 %v530, %v552
        %v557 = vadd.f32 %v501, %v553
        %v558 = vadd.f32 %v502, %v554
        %v559 = vadd.f32 %v503, %v555
        %v560 = vadd.f32 %v504, %v556
        %s561 = sld [smem:[#allocation2 + $0x4]]
        %v562 = vstv %s561
        %v563 = vmul.f32 %v320, %v562
        %v564 = vmul.f32 %v321, %v562
        %v565 = vmul.f32 %v322, %v562
        %v566 = vmul.f32 %v323, %v562
        %s567 = sld [smem:[#allocation2 + $0x84]]
        %v568 = vstv %s567
        %v569 = vmul.f32 %v324, %v568
        %v570 = vmul.f32 %v325, %v568
        %v571 = vmul.f32 %v326, %v568
        %v572 = vmul.f32 %v327, %v568
        %v573 = vadd.f32 %v563, %v569
        %v574 = vadd.f32 %v564, %v570
        %v575 = vadd.f32 %v565, %v571
        %v576 = vadd.f32 %v566, %v572
        %s577 = sld [smem:[#allocation5 + $0x4]]
        %v578 = vstv %s577
        %v579 = vadd.f32 %v573, %v578
        %v580 = vadd.f32 %v574, %v578
        %v581 = vadd.f32 %v575, %v578
        %v582 = vadd.f32 %v576, %v578
        %v583 = vtanh.pop %v579
        %v584 = vtanh.pop %v580
        %v585 = vtanh.pop %v581
        %v586 = vtanh.pop %v582
        %s587 = sld [smem:[#allocation7 + $0x200]]
        %v588 = vstv %s587
        %v589 = vmul.f32 %v583, %v588
        %v590 = vmul.f32 %v584, %v588
        %v591 = vmul.f32 %v585, %v588
        %v592 = vmul.f32 %v586, %v588
        %v593 = vadd.f32 %v537, %v589
        %v594 = vadd.f32 %v538, %v590
        %v595 = vadd.f32 %v539, %v591
        %v596 = vadd.f32 %v540, %v592
        %s597 = sld [smem:[#allocation7 + $0x201]]
        %v598 = vstv %s597
        %v599 = vmul.f32 %v583, %v598
        %v600 = vmul.f32 %v584, %v598
        %v601 = vmul.f32 %v585, %v598
        %v602 = vmul.f32 %v586, %v598
        %v603 = vadd.f32 %v547, %v599
        %v604 = vadd.f32 %v548, %v600
        %v605 = vadd.f32 %v549, %v601
        %v606 = vadd.f32 %v550, %v602
        %s607 = sld [smem:[#allocation7 + $0x202]]
        %v608 = vstv %s607
        %v609 = vmul.f32 %v583, %v608
        %v610 = vmul.f32 %v584, %v608
        %v611 = vmul.f32 %v585, %v608
        %v612 = vmul.f32 %v586, %v608
        %v613 = vadd.f32 %v557, %v609
        %v614 = vadd.f32 %v558, %v610
        %v615 = vadd.f32 %v559, %v611
        %v616 = vadd.f32 %v560, %v612
        %s617 = sld [smem:[#allocation2 + $0x5]]
        %v618 = vstv %s617
        %v619 = vmul.f32 %v320, %v618
        %v620 = vmul.f32 %v321, %v618
        %v621 = vmul.f32 %v322, %v618
        %v622 = vmul.f32 %v323, %v618
        %s623 = sld [smem:[#allocation2 + $0x85]]
        %v624 = vstv %s623
        %v625 = vmul.f32 %v324, %v624
        %v626 = vmul.f32 %v325, %v624
        %v627 = vmul.f32 %v326, %v624
        %v628 = vmul.f32 %v327, %v624
        %v629 = vadd.f32 %v619, %v625
        %v630 = vadd.f32 %v620, %v626
        %v631 = vadd.f32 %v621, %v627
        %v632 = vadd.f32 %v622, %v628
        %s633 = sld [smem:[#allocation5 + $0x5]]
        %v634 = vstv %s633
        %v635 = vadd.f32 %v629, %v634
        %v636 = vadd.f32 %v630, %v634
        %v637 = vadd.f32 %v631, %v634
        %v638 = vadd.f32 %v632, %v634
        %v639 = vtanh.pop %v635
        %v640 = vtanh.pop %v636
        %v641 = vtanh.pop %v637
        %v642 = vtanh.pop %v638
        %s643 = sld [smem:[#allocation7 + $0x280]]
        %v644 = vstv %s643
        %v645 = vmul.f32 %v639, %v644
        %v646 = vmul.f32 %v640, %v644
        %v647 = vmul.f32 %v641, %v644
        %v648 = vmul.f32 %v642, %v644
        %v649 = vadd.f32 %v593, %v645
        %v650 = vadd.f32 %v594, %v646
        %v651 = vadd.f32 %v595, %v647
        %v652 = vadd.f32 %v596, %v648
        %s653 = sld [smem:[#allocation7 + $0x281]]
        %v654 = vstv %s653
        %v655 = vmul.f32 %v639, %v654
        %v656 = vmul.f32 %v640, %v654
        %v657 = vmul.f32 %v641, %v654
        %v658 = vmul.f32 %v642, %v654
        %v659 = vadd.f32 %v603, %v655
        %v660 = vadd.f32 %v604, %v656
        %v661 = vadd.f32 %v605, %v657
        %v662 = vadd.f32 %v606, %v658
        %s663 = sld [smem:[#allocation7 + $0x282]]
        %v664 = vstv %s663
        %v665 = vmul.f32 %v639, %v664
        %v666 = vmul.f32 %v640, %v664
        %v667 = vmul.f32 %v641, %v664
        %v668 = vmul.f32 %v642, %v664
        %v669 = vadd.f32 %v613, %v665
        %v670 = vadd.f32 %v614, %v666
        %v671 = vadd.f32 %v615, %v667
        %v672 = vadd.f32 %v616, %v668
        %s673 = sld [smem:[#allocation2 + $0x6]]
        %v674 = vstv %s673
        %v675 = vmul.f32 %v320, %v674
        %v676 = vmul.f32 %v321, %v674
        %v677 = vmul.f32 %v322, %v674
        %v678 = vmul.f32 %v323, %v674
        %s679 = sld [smem:[#allocation2 + $0x86]]
        %v680 = vstv %s679
        %v681 = vmul.f32 %v324, %v680
        %v682 = vmul.f32 %v325, %v680
        %v683 = vmul.f32 %v326, %v680
        %v684 = vmul.f32 %v327, %v680
        %v685 = vadd.f32 %v675, %v681
        %v686 = vadd.f32 %v676, %v682
        %v687 = vadd.f32 %v677, %v683
        %v688 = vadd.f32 %v678, %v684
        %s689 = sld [smem:[#allocation5 + $0x6]]
        %v690 = vstv %s689
        %v691 = vadd.f32 %v685, %v690
        %v692 = vadd.f32 %v686, %v690
        %v693 = vadd.f32 %v687, %v690
        %v694 = vadd.f32 %v688, %v690
        %v695 = vtanh.pop %v691
        %v696 = vtanh.pop %v692
        %v697 = vtanh.pop %v693
        %v698 = vtanh.pop %v694
        %s699 = sld [smem:[#allocation7 + $0x300]]
        %v700 = vstv %s699
        %v701 = vmul.f32 %v695, %v700
        %v702 = vmul.f32 %v696, %v700
        %v703 = vmul.f32 %v697, %v700
        %v704 = vmul.f32 %v698, %v700
        %v705 = vadd.f32 %v649, %v701
        %v706 = vadd.f32 %v650, %v702
        %v707 = vadd.f32 %v651, %v703
        %v708 = vadd.f32 %v652, %v704
        %s709 = sld [smem:[#allocation7 + $0x301]]
        %v710 = vstv %s709
        %v711 = vmul.f32 %v695, %v710
        %v712 = vmul.f32 %v696, %v710
        %v713 = vmul.f32 %v697, %v710
        %v714 = vmul.f32 %v698, %v710
        %v715 = vadd.f32 %v659, %v711
        %v716 = vadd.f32 %v660, %v712
        %v717 = vadd.f32 %v661, %v713
        %v718 = vadd.f32 %v662, %v714
        %s719 = sld [smem:[#allocation7 + $0x302]]
        %v720 = vstv %s719
        %v721 = vmul.f32 %v695, %v720
        %v722 = vmul.f32 %v696, %v720
        %v723 = vmul.f32 %v697, %v720
        %v724 = vmul.f32 %v698, %v720
        %v725 = vadd.f32 %v669, %v721
        %v726 = vadd.f32 %v670, %v722
        %v727 = vadd.f32 %v671, %v723
        %v728 = vadd.f32 %v672, %v724
        %s729 = sld [smem:[#allocation2 + $0x7]]
        %v730 = vstv %s729
        %v731 = vmul.f32 %v320, %v730
        %v732 = vmul.f32 %v321, %v730
        %v733 = vmul.f32 %v322, %v730
        %v734 = vmul.f32 %v323, %v730
        %s735 = sld [smem:[#allocation2 + $0x87]]
        %v736 = vstv %s735
        %v737 = vmul.f32 %v324, %v736
        %v738 = vmul.f32 %v325, %v736
        %v739 = vmul.f32 %v326, %v736
        %v740 = vmul.f32 %v327, %v736
        %v741 = vadd.f32 %v731, %v737
        %v742 = vadd.f32 %v732, %v738
        %v743 = vadd.f32 %v733, %v739
        %v744 = vadd.f32 %v734, %v740
        %s745 = sld [smem:[#allocation5 + $0x7]]
        %v746 = vstv %s745
        %v747 = vadd.f32 %v741, %v746
        %v748 = vadd.f32 %v742, %v746
        %v749 = vadd.f32 %v743, %v746
        %v750 = vadd.f32 %v744, %v746
        %v751 = vtanh.pop %v747
        %v752 = vtanh.pop %v748
        %v753 = vtanh.pop %v749
        %v754 = vtanh.pop %v750
        %s755 = sld [smem:[#allocation7 + $0x380]]
        %v756 = vstv %s755
        %v757 = vmul.f32 %v751, %v756
        %v758 = vmul.f32 %v752, %v756
        %v759 = vmul.f32 %v753, %v756
        %v760 = vmul.f32 %v754, %v756
        %v761 = vadd.f32 %v705, %v757
        %v762 = vadd.f32 %v706, %v758
        %v763 = vadd.f32 %v707, %v759
        %v764 = vadd.f32 %v708, %v760
        %s765 = sld [smem:[#allocation7 + $0x381]]
        %v766 = vstv %s765
        %v767 = vmul.f32 %v751, %v766
        %v768 = vmul.f32 %v752, %v766
        %v769 = vmul.f32 %v753, %v766
        %v770 = vmul.f32 %v754, %v766
        %v771 = vadd.f32 %v715, %v767
        %v772 = vadd.f32 %v716, %v768
        %v773 = vadd.f32 %v717, %v769
        %v774 = vadd.f32 %v718, %v770
        %s775 = sld [smem:[#allocation7 + $0x382]]
        %v776 = vstv %s775
        %v777 = vmul.f32 %v751, %v776
        %v778 = vmul.f32 %v752, %v776
        %v779 = vmul.f32 %v753, %v776
        %v780 = vmul.f32 %v754, %v776
        %v781 = vadd.f32 %v725, %v777
        %v782 = vadd.f32 %v726, %v778
        %v783 = vadd.f32 %v727, %v779
        %v784 = vadd.f32 %v728, %v780
        %s785 = sld [smem:[#allocation2 + $0x8]]
        %v786 = vstv %s785
        %v787 = vmul.f32 %v320, %v786
        %v788 = vmul.f32 %v321, %v786
        %v789 = vmul.f32 %v322, %v786
        %v790 = vmul.f32 %v323, %v786
        %s791 = sld [smem:[#allocation2 + $0x88]]
        %v792 = vstv %s791
        %v793 = vmul.f32 %v324, %v792
        %v794 = vmul.f32 %v325, %v792
        %v795 = vmul.f32 %v326, %v792
        %v796 = vmul.f32 %v327, %v792
        %v797 = vadd.f32 %v787, %v793
        %v798 = vadd.f32 %v788, %v794
        %v799 = vadd.f32 %v789, %v795
        %v800 = vadd.f32 %v790, %v796
        %s801 = sld [smem:[#allocation5 + $0x8]]
        %v802 = vstv %s801
        %v803 = vadd.f32 %v797, %v802
        %v804 = vadd.f32 %v798, %v802
        %v805 = vadd.f32 %v799, %v802
        %v806 = vadd.f32 %v800, %v802
        %v807 = vtanh.pop %v803
        %v808 = vtanh.pop %v804
        %v809 = vtanh.pop %v805
        %v810 = vtanh.pop %v806
        %s811 = sld [smem:[#allocation7 + $0x400]]
        %v812 = vstv %s811
        %v813 = vmul.f32 %v807, %v812
        %v814 = vmul.f32 %v808, %v812
        %v815 = vmul.f32 %v809, %v812
        %v816 = vmul.f32 %v810, %v812
        %v817 = vadd.f32 %v761, %v813
        %v818 = vadd.f32 %v762, %v814
        %v819 = vadd.f32 %v763, %v815
        %v820 = vadd.f32 %v764, %v816
        %s821 = sld [smem:[#allocation7 + $0x401]]
        %v822 = vstv %s821
        %v823 = vmul.f32 %v807, %v822
        %v824 = vmul.f32 %v808, %v822
        %v825 = vmul.f32 %v809, %v822
        %v826 = vmul.f32 %v810, %v822
        %v827 = vadd.f32 %v771, %v823
        %v828 = vadd.f32 %v772, %v824
        %v829 = vadd.f32 %v773, %v825
        %v830 = vadd.f32 %v774, %v826
        %s831 = sld [smem:[#allocation7 + $0x402]]
        %v832 = vstv %s831
        %v833 = vmul.f32 %v807, %v832
        %v834 = vmul.f32 %v808, %v832
        %v835 = vmul.f32 %v809, %v832
        %v836 = vmul.f32 %v810, %v832
        %v837 = vadd.f32 %v781, %v833
        %v838 = vadd.f32 %v782, %v834
        %v839 = vadd.f32 %v783, %v835
        %v840 = vadd.f32 %v784, %v836
        %s841 = sld [smem:[#allocation2 + $0x9]]
        %v842 = vstv %s841
        %v843 = vmul.f32 %v320, %v842
        %v844 = vmul.f32 %v321, %v842
        %v845 = vmul.f32 %v322, %v842
        %v846 = vmul.f32 %v323, %v842
        %s847 = sld [smem:[#allocation2 + $0x89]]
        %v848 = vstv %s847
        %v849 = vmul.f32 %v324, %v848
        %v850 = vmul.f32 %v325, %v848
        %v851 = vmul.f32 %v326, %v848
        %v852 = vmul.f32 %v327, %v848
        %v853 = vadd.f32 %v843, %v849
        %v854 = vadd.f32 %v844, %v850
        %v855 = vadd.f32 %v845, %v851
        %v856 = vadd.f32 %v846, %v852
        %s857 = sld [smem:[#allocation5 + $0x9]]
        %v858 = vstv %s857
        %v859 = vadd.f32 %v853, %v858
        %v860 = vadd.f32 %v854, %v858
        %v861 = vadd.f32 %v855, %v858
        %v862 = vadd.f32 %v856, %v858
        %v863 = vtanh.pop %v859
        %v864 = vtanh.pop %v860
        %v865 = vtanh.pop %v861
        %v866 = vtanh.pop %v862
        %s867 = sld [smem:[#allocation7 + $0x480]]
        %v868 = vstv %s867
        %v869 = vmul.f32 %v863, %v868
        %v870 = vmul.f32 %v864, %v868
        %v871 = vmul.f32 %v865, %v868
        %v872 = vmul.f32 %v866, %v868
        %v873 = vadd.f32 %v817, %v869
        %v874 = vadd.f32 %v818, %v870
        %v875 = vadd.f32 %v819, %v871
        %v876 = vadd.f32 %v820, %v872
        %s877 = sld [smem:[#allocation7 + $0x481]]
        %v878 = vstv %s877
        %v879 = vmul.f32 %v863, %v878
        %v880 = vmul.f32 %v864, %v878
        %v881 = vmul.f32 %v865, %v878
        %v882 = vmul.f32 %v866, %v878
        %v883 = vadd.f32 %v827, %v879
        %v884 = vadd.f32 %v828, %v880
        %v885 = vadd.f32 %v829, %v881
        %v886 = vadd.f32 %v830, %v882
        %s887 = sld [smem:[#allocation7 + $0x482]]
        %v888 = vstv %s887
        %v889 = vmul.f32 %v863, %v888
        %v890 = vmul.f32 %v864, %v888
        %v891 = vmul.f32 %v865, %v888
        %v892 = vmul.f32 %v866, %v888
        %v893 = vadd.f32 %v837, %v889
        %v894 = vadd.f32 %v838, %v890
        %v895 = vadd.f32 %v839, %v891
        %v896 = vadd.f32 %v840, %v892
        %s897 = sld [smem:[#allocation2 + $0xa]]
        %v898 = vstv %s897
        %v899 = vmul.f32 %v320, %v898
        %v900 = vmul.f32 %v321, %v898
        %v901 = vmul.f32 %v322, %v898
        %v902 = vmul.f32 %v323, %v898
        %s903 = sld [smem:[#allocation2 + $0x8a]]
        %v904 = vstv %s903
        %v905 = vmul.f32 %v324, %v904
        %v906 = vmul.f32 %v325, %v904
        %v907 = vmul.f32 %v326, %v904
        %v908 = vmul.f32 %v327, %v904
        %v909 = vadd.f32 %v899, %v905
        %v910 = vadd.f32 %v900, %v906
        %v911 = vadd.f32 %v901, %v907
        %v912 = vadd.f32 %v902, %v908
        %s913 = sld [smem:[#allocation5 + $0xa]]
        %v914 = vstv %s913
        %v915 = vadd.f32 %v909, %v914
        %v916 = vadd.f32 %v910, %v914
        %v917 = vadd.f32 %v911, %v914
        %v918 = vadd.f32 %v912, %v914
        %v919 = vtanh.pop %v915
        %v920 = vtanh.pop %v916
        %v921 = vtanh.pop %v917
        %v922 = vtanh.pop %v918
        %s923 = sld [smem:[#allocation7 + $0x500]]
        %v924 = vstv %s923
        %v925 = vmul.f32 %v919, %v924
        %v926 = vmul.f32 %v920, %v924
        %v927 = vmul.f32 %v921, %v924
        %v928 = vmul.f32 %v922, %v924
        %v929 = vadd.f32 %v873, %v925
        %v930 = vadd.f32 %v874, %v926
        %v931 = vadd.f32 %v875, %v927
        %v932 = vadd.f32 %v876, %v928
        %s933 = sld [smem:[#allocation7 + $0x501]]
        %v934 = vstv %s933
        %v935 = vmul.f32 %v919, %v934
        %v936 = vmul.f32 %v920, %v934
        %v937 = vmul.f32 %v921, %v934
        %v938 = vmul.f32 %v922, %v934
        %v939 = vadd.f32 %v883, %v935
        %v940 = vadd.f32 %v884, %v936
        %v941 = vadd.f32 %v885, %v937
        %v942 = vadd.f32 %v886, %v938
        %s943 = sld [smem:[#allocation7 + $0x502]]
        %v944 = vstv %s943
        %v945 = vmul.f32 %v919, %v944
        %v946 = vmul.f32 %v920, %v944
        %v947 = vmul.f32 %v921, %v944
        %v948 = vmul.f32 %v922, %v944
        %v949 = vadd.f32 %v893, %v945
        %v950 = vadd.f32 %v894, %v946
        %v951 = vadd.f32 %v895, %v947
        %v952 = vadd.f32 %v896, %v948
        %s953 = sld [smem:[#allocation2 + $0xb]]
        %v954 = vstv %s953
        %v955 = vmul.f32 %v320, %v954
        %v956 = vmul.f32 %v321, %v954
        %v957 = vmul.f32 %v322, %v954
        %v958 = vmul.f32 %v323, %v954
        %s959 = sld [smem:[#allocation2 + $0x8b]]
        %v960 = vstv %s959
        %v961 = vmul.f32 %v324, %v960
        %v962 = vmul.f32 %v325, %v960
        %v963 = vmul.f32 %v326, %v960
        %v964 = vmul.f32 %v327, %v960
        %v965 = vadd.f32 %v955, %v961
        %v966 = vadd.f32 %v956, %v962
        %v967 = vadd.f32 %v957, %v963
        %v968 = vadd.f32 %v958, %v964
        %s969 = sld [smem:[#allocation5 + $0xb]]
        %v970 = vstv %s969
        %v971 = vadd.f32 %v965, %v970
        %v972 = vadd.f32 %v966, %v970
        %v973 = vadd.f32 %v967, %v970
        %v974 = vadd.f32 %v968, %v970
        %v975 = vtanh.pop %v971
        %v976 = vtanh.pop %v972
        %v977 = vtanh.pop %v973
        %v978 = vtanh.pop %v974
        %s979 = sld [smem:[#allocation7 + $0x580]]
        %v980 = vstv %s979
        %v981 = vmul.f32 %v975, %v980
        %v982 = vmul.f32 %v976, %v980
        %v983 = vmul.f32 %v977, %v980
        %v984 = vmul.f32 %v978, %v980
        %v985 = vadd.f32 %v929, %v981
        %v986 = vadd.f32 %v930, %v982
        %v987 = vadd.f32 %v931, %v983
        %v988 = vadd.f32 %v932, %v984
        %s989 = sld [smem:[#allocation7 + $0x581]]
        %v990 = vstv %s989
        %v991 = vmul.f32 %v975, %v990
        %v992 = vmul.f32 %v976, %v990
        %v993 = vmul.f32 %v977, %v990
        %v994 = vmul.f32 %v978, %v990
        %v995 = vadd.f32 %v939, %v991
        %v996 = vadd.f32 %v940, %v992
        %v997 = vadd.f32 %v941, %v993
        %v998 = vadd.f32 %v942, %v994
        %s999 = sld [smem:[#allocation7 + $0x582]]
        %v1000 = vstv %s999
        %v1001 = vmul.f32 %v975, %v1000
        %v1002 = vmul.f32 %v976, %v1000
        %v1003 = vmul.f32 %v977, %v1000
        %v1004 = vmul.f32 %v978, %v1000
        %v1005 = vadd.f32 %v949, %v1001
        %v1006 = vadd.f32 %v950, %v1002
        %v1007 = vadd.f32 %v951, %v1003
        %v1008 = vadd.f32 %v952, %v1004
        %s1009 = sld [smem:[#allocation2 + $0xc]]
        %v1010 = vstv %s1009
        %v1011 = vmul.f32 %v320, %v1010
        %v1012 = vmul.f32 %v321, %v1010
        %v1013 = vmul.f32 %v322, %v1010
        %v1014 = vmul.f32 %v323, %v1010
        %s1015 = sld [smem:[#allocation2 + $0x8c]]
        %v1016 = vstv %s1015
        %v1017 = vmul.f32 %v324, %v1016
        %v1018 = vmul.f32 %v325, %v1016
        %v1019 = vmul.f32 %v326, %v1016
        %v1020 = vmul.f32 %v327, %v1016
        %v1021 = vadd.f32 %v1011, %v1017
        %v1022 = vadd.f32 %v1012, %v1018
        %v1023 = vadd.f32 %v1013, %v1019
        %v1024 = vadd.f32 %v1014, %v1020
        %s1025 = sld [smem:[#allocation5 + $0xc]]
        %v1026 = vstv %s1025
        %v1027 = vadd.f32 %v1021, %v1026
        %v1028 = vadd.f32 %v1022, %v1026
        %v1029 = vadd.f32 %v1023, %v1026
        %v1030 = vadd.f32 %v1024, %v1026
        %v1031 = vtanh.pop %v1027
        %v1032 = vtanh.pop %v1028
        %v1033 = vtanh.pop %v1029
        %v1034 = vtanh.pop %v1030
        %s1035 = sld [smem:[#allocation7 + $0x600]]
        %v1036 = vstv %s1035
        %v1037 = vmul.f32 %v1031, %v1036
        %v1038 = vmul.f32 %v1032, %v1036
        %v1039 = vmul.f32 %v1033, %v1036
        %v1040 = vmul.f32 %v1034, %v1036
        %v1041 = vadd.f32 %v985, %v1037
        %v1042 = vadd.f32 %v986, %v1038
        %v1043 = vadd.f32 %v987, %v1039
        %v1044 = vadd.f32 %v988, %v1040
        %s1045 = sld [smem:[#allocation7 + $0x601]]
        %v1046 = vstv %s1045
        %v1047 = vmul.f32 %v1031, %v1046
        %v1048 = vmul.f32 %v1032, %v1046
        %v1049 = vmul.f32 %v1033, %v1046
        %v1050 = vmul.f32 %v1034, %v1046
        %v1051 = vadd.f32 %v995, %v1047
        %v1052 = vadd.f32 %v996, %v1048
        %v1053 = vadd.f32 %v997, %v1049
        %v1054 = vadd.f32 %v998, %v1050
        %s1055 = sld [smem:[#allocation7 + $0x602]]
        %v1056 = vstv %s1055
        %v1057 = vmul.f32 %v1031, %v1056
        %v1058 = vmul.f32 %v1032, %v1056
        %v1059 = vmul.f32 %v1033, %v1056
        %v1060 = vmul.f32 %v1034, %v1056
        %v1061 = vadd.f32 %v1005, %v1057
        %v1062 = vadd.f32 %v1006, %v1058
        %v1063 = vadd.f32 %v1007, %v1059
        %v1064 = vadd.f32 %v1008, %v1060
        %s1065 = sld [smem:[#allocation2 + $0xd]]
        %v1066 = vstv %s1065
        %v1067 = vmul.f32 %v320, %v1066
        %v1068 = vmul.f32 %v321, %v1066
        %v1069 = vmul.f32 %v322, %v1066
        %v1070 = vmul.f32 %v323, %v1066
        %s1071 = sld [smem:[#allocation2 + $0x8d]]
        %v1072 = vstv %s1071
        %v1073 = vmul.f32 %v324, %v1072
        %v1074 = vmul.f32 %v325, %v1072
        %v1075 = vmul.f32 %v326, %v1072
        %v1076 = vmul.f32 %v327, %v1072
        %v1077 = vadd.f32 %v1067, %v1073
        %v1078 = vadd.f32 %v1068, %v1074
        %v1079 = vadd.f32 %v1069, %v1075
        %v1080 = vadd.f32 %v1070, %v1076
        %s1081 = sld [smem:[#allocation5 + $0xd]]
        %v1082 = vstv %s1081
        %v1083 = vadd.f32 %v1077, %v1082
        %v1084 = vadd.f32 %v1078, %v1082
        %v1085 = vadd.f32 %v1079, %v1082
        %v1086 = vadd.f32 %v1080, %v1082
        %v1087 = vtanh.pop %v1083
        %v1088 = vtanh.pop %v1084
        %v1089 = vtanh.pop %v1085
        %v1090 = vtanh.pop %v1086
        %s1091 = sld [smem:[#allocation7 + $0x680]]
        %v1092 = vstv %s1091
        %v1093 = vmul.f32 %v1087, %v1092
        %v1094 = vmul.f32 %v1088, %v1092
        %v1095 = vmul.f32 %v1089, %v1092
        %v1096 = vmul.f32 %v1090, %v1092
        %v1097 = vadd.f32 %v1041, %v1093
        %v1098 = vadd.f32 %v1042, %v1094
        %v1099 = vadd.f32 %v1043, %v1095
        %v1100 = vadd.f32 %v1044, %v1096
        %s1101 = sld [smem:[#allocation7 + $0x681]]
        %v1102 = vstv %s1101
        %v1103 = vmul.f32 %v1087, %v1102
        %v1104 = vmul.f32 %v1088, %v1102
        %v1105 = vmul.f32 %v1089, %v1102
        %v1106 = vmul.f32 %v1090, %v1102
        %v1107 = vadd.f32 %v1051, %v1103
        %v1108 = vadd.f32 %v1052, %v1104
        %v1109 = vadd.f32 %v1053, %v1105
        %v1110 = vadd.f32 %v1054, %v1106
        %s1111 = sld [smem:[#allocation7 + $0x682]]
        %v1112 = vstv %s1111
        %v1113 = vmul.f32 %v1087, %v1112
        %v1114 = vmul.f32 %v1088, %v1112
        %v1115 = vmul.f32 %v1089, %v1112
        %v1116 = vmul.f32 %v1090, %v1112
        %v1117 = vadd.f32 %v1061, %v1113
        %v1118 = vadd.f32 %v1062, %v1114
        %v1119 = vadd.f32 %v1063, %v1115
        %v1120 = vadd.f32 %v1064, %v1116
        %s1121 = sld [smem:[#allocation2 + $0xe]]
        %v1122 = vstv %s1121
        %v1123 = vmul.f32 %v320, %v1122
        %v1124 = vmul.f32 %v321, %v1122
        %v1125 = vmul.f32 %v322, %v1122
        %v1126 = vmul.f32 %v323, %v1122
        %s1127 = sld [smem:[#allocation2 + $0x8e]]
        %v1128 = vstv %s1127
        %v1129 = vmul.f32 %v324, %v1128
        %v1130 = vmul.f32 %v325, %v1128
        %v1131 = vmul.f32 %v326, %v1128
        %v1132 = vmul.f32 %v327, %v1128
        %v1133 = vadd.f32 %v1123, %v1129
        %v1134 = vadd.f32 %v1124, %v1130
        %v1135 = vadd.f32 %v1125, %v1131
        %v1136 = vadd.f32 %v1126, %v1132
        %s1137 = sld [smem:[#allocation5 + $0xe]]
        %v1138 = vstv %s1137
        %v1139 = vadd.f32 %v1133, %v1138
        %v1140 = vadd.f32 %v1134, %v1138
        %v1141 = vadd.f32 %v1135, %v1138
        %v1142 = vadd.f32 %v1136, %v1138
        %v1143 = vtanh.pop %v1139
        %v1144 = vtanh.pop %v1140
        %v1145 = vtanh.pop %v1141
        %v1146 = vtanh.pop %v1142
        %s1147 = sld [smem:[#allocation7 + $0x700]]
        %v1148 = vstv %s1147
        %v1149 = vmul.f32 %v1143, %v1148
        %v1150 = vmul.f32 %v1144, %v1148
        %v1151 = vmul.f32 %v1145, %v1148
        %v1152 = vmul.f32 %v1146, %v1148
        %v1153 = vadd.f32 %v1097, %v1149
        %v1154 = vadd.f32 %v1098, %v1150
        %v1155 = vadd.f32 %v1099, %v1151
        %v1156 = vadd.f32 %v1100, %v1152
        %s1157 = sld [smem:[#allocation7 + $0x701]]
        %v1158 = vstv %s1157
        %v1159 = vmul.f32 %v1143, %v1158
        %v1160 = vmul.f32 %v1144, %v1158
        %v1161 = vmul.f32 %v1145, %v1158
        %v1162 = vmul.f32 %v1146, %v1158
        %v1163 = vadd.f32 %v1107, %v1159
        %v1164 = vadd.f32 %v1108, %v1160
        %v1165 = vadd.f32 %v1109, %v1161
        %v1166 = vadd.f32 %v1110, %v1162
        %s1167 = sld [smem:[#allocation7 + $0x702]]
        %v1168 = vstv %s1167
        %v1169 = vmul.f32 %v1143, %v1168
        %v1170 = vmul.f32 %v1144, %v1168
        %v1171 = vmul.f32 %v1145, %v1168
        %v1172 = vmul.f32 %v1146, %v1168
        %v1173 = vadd.f32 %v1117, %v1169
        %v1174 = vadd.f32 %v1118, %v1170
        %v1175 = vadd.f32 %v1119, %v1171
        %v1176 = vadd.f32 %v1120, %v1172
        %s1177 = sld [smem:[#allocation2 + $0xf]]
        %v1178 = vstv %s1177
        %v1179 = vmul.f32 %v320, %v1178
        %v1180 = vmul.f32 %v321, %v1178
        %v1181 = vmul.f32 %v322, %v1178
        %v1182 = vmul.f32 %v323, %v1178
        %s1183 = sld [smem:[#allocation2 + $0x8f]]
        %v1184 = vstv %s1183
        %v1185 = vmul.f32 %v324, %v1184
        %v1186 = vmul.f32 %v325, %v1184
        %v1187 = vmul.f32 %v326, %v1184
        %v1188 = vmul.f32 %v327, %v1184
        %v1189 = vadd.f32 %v1179, %v1185
        %v1190 = vadd.f32 %v1180, %v1186
        %v1191 = vadd.f32 %v1181, %v1187
        %v1192 = vadd.f32 %v1182, %v1188
        %s1193 = sld [smem:[#allocation5 + $0xf]]
        %v1194 = vstv %s1193
        %v1195 = vadd.f32 %v1189, %v1194
        %v1196 = vadd.f32 %v1190, %v1194
        %v1197 = vadd.f32 %v1191, %v1194
        %v1198 = vadd.f32 %v1192, %v1194
        %v1199 = vtanh.pop %v1195
        %v1200 = vtanh.pop %v1196
        %v1201 = vtanh.pop %v1197
        %v1202 = vtanh.pop %v1198
        %s1203 = sld [smem:[#allocation7 + $0x780]]
        %v1204 = vstv %s1203
        %v1205 = vmul.f32 %v1199, %v1204
        %v1206 = vmul.f32 %v1200, %v1204
        %v1207 = vmul.f32 %v1201, %v1204
        %v1208 = vmul.f32 %v1202, %v1204
        %v1209 = vadd.f32 %v1153, %v1205
        %v1210 = vadd.f32 %v1154, %v1206
        %v1211 = vadd.f32 %v1155, %v1207
        %v1212 = vadd.f32 %v1156, %v1208
        %s1213 = sld [smem:[#allocation7 + $0x781]]
        %v1214 = vstv %s1213
        %v1215 = vmul.f32 %v1199, %v1214
        %v1216 = vmul.f32 %v1200, %v1214
        %v1217 = vmul.f32 %v1201, %v1214
        %v1218 = vmul.f32 %v1202, %v1214
        %v1219 = vadd.f32 %v1163, %v1215
        %v1220 = vadd.f32 %v1164, %v1216
        %v1221 = vadd.f32 %v1165, %v1217
        %v1222 = vadd.f32 %v1166, %v1218
        %s1223 = sld [smem:[#allocation7 + $0x782]]
        %v1224 = vstv %s1223
        %v1225 = vmul.f32 %v1199, %v1224
        %v1226 = vmul.f32 %v1200, %v1224
        %v1227 = vmul.f32 %v1201, %v1224
        %v1228 = vmul.f32 %v1202, %v1224
        %v1229 = vadd.f32 %v1173, %v1225
        %v1230 = vadd.f32 %v1174, %v1226
        %v1231 = vadd.f32 %v1175, %v1227
        %v1232 = vadd.f32 %v1176, %v1228
        %v1233 = vtanh.pop %v1209
        %v1234 = vtanh.pop %v1210
        %v1235 = vtanh.pop %v1211
        %v1236 = vtanh.pop %v1212
        %v1237 = vmul.f32 %v1233, 2.0
        %v1238 = vmul.f32 %v1234, 2.0
        %v1239 = vmul.f32 %v1235, 2.0
        %v1240 = vmul.f32 %v1236, 2.0
        %1241 = vst [vmem:[%s319] sm:$0xff] %v1237
        %1242 = vst [vmem:[%s319 + $0x8] sm:$0xff] %v1238
        %1243 = vst [vmem:[%s319 + $0x10] sm:$0xff] %v1239
        %1244 = vst [vmem:[%s319 + $0x18] sm:$0xff] %v1240
        %v1245 = vtanh.pop %v1219
        %v1246 = vtanh.pop %v1220
        %v1247 = vtanh.pop %v1221
        %v1248 = vtanh.pop %v1222
        %v1249 = vmul.f32 %v1245, 2.0
        %v1250 = vmul.f32 %v1246, 2.0
        %v1251 = vmul.f32 %v1247, 2.0
        %v1252 = vmul.f32 %v1248, 2.0
        %s1253 = scalar_lea.vmem %s319, 32
        %1254 = vst [vmem:[%s1253] sm:$0xff] %v1249
        %1255 = vst [vmem:[%s1253 + $0x8] sm:$0xff] %v1250
        %1256 = vst [vmem:[%s1253 + $0x10] sm:$0xff] %v1251
        %1257 = vst [vmem:[%s1253 + $0x18] sm:$0xff] %v1252
        %v1258 = vtanh.pop %v1229
        %v1259 = vtanh.pop %v1230
        %v1260 = vtanh.pop %v1231
        %v1261 = vtanh.pop %v1232
        %v1262 = vmul.f32 %v1258, 2.0
        %v1263 = vmul.f32 %v1259, 2.0
        %v1264 = vmul.f32 %v1260, 2.0
        %v1265 = vmul.f32 %v1261, 2.0
        %s1266 = scalar_lea.vmem %s319, 64
        %1267 = vst [vmem:[%s1266] sm:$0xff] %v1262
        %1268 = vst [vmem:[%s1266 + $0x8] sm:$0xff] %v1263
        %1269 = vst [vmem:[%s1266 + $0x10] sm:$0xff] %v1264
        %1270 = vst [vmem:[%s1266 + $0x18] sm:$0xff] %v1265
        %p1271 = scmp.lt.s32.totalorder %s20, 1
        %s1272 = scalar_select %p1271, %s20, 1
        %s1273 = smul.addr %s1272, 12
        %s1274 = smul.addr %s1273, 8
        %s1275 = scalar_lea.vmem %s6, %s1274
        // Predicated region
        $region61: #{pre_register_forward.6} parent=43 // pred_check
          %p1276 = pneg %p174
        $region62: #{pre_register_forward.6} parent=43 // pred_check_branch
          %1278 = sbr.rel (%p1276) target = $region64
        $region63: #{pre_register_forward.6} parent=43 // pred_region
          _
        $region64: #{pre_register_forward.6} parent=43 // pred_fallthru
          _
      $region44: #{pre_register_forward.6} parent=5 // pred_fallthru
        _
      %p1279 = scmp.le.s32.totalorder 2, %s15
      // Predicated region
      $region65: #{pre_register_forward.6} parent=5 // pred_check
        %p1280 = pneg %p1279
      $region66: #{pre_register_forward.6} parent=5 // pred_check_branch
        %1282 = sbr.rel (%p1280) target = $region68
      $region67: #{pre_register_forward.6} parent=5 // pred_region
        %s1283 = ssub.s32 %s15, 2
        // Predicated region
        $region69: #{pre_register_forward.6} parent=67 // pred_check
          %p1284 = pneg %p180
        $region70: #{pre_register_forward.6} parent=67 // pred_check_branch
          %1286 = sbr.rel (%p1284) target = $region72
        $region71: #{pre_register_forward.6} parent=67 // pred_region
          %p1287 = scmp.lt.s32.totalorder %s21, 1
          %s1288 = scalar_select %p1287, %s21, 1
          %s1289 = smul.addr %s1288, 12
          %s1290 = smul.addr %s1289, 8
          %s1291 = scalar_lea.vmem %s6, %s1290
        $region72: #{pre_register_forward.6} parent=67 // pred_fallthru
          _
      $region68: #{pre_register_forward.6} parent=5 // pred_fallthru
        _
    $region6: #{pre_register_forward.6} parent=1 // loop_footer
      %s19 = sadd.s32 1, %s15
    $region7: #{pre_register_forward.6} parent=1 // loop_footer_branch
      %14 = sbr.rel target = $region3
    $region8: #{pre_register_forward.6} parent=1 // loop_exit
      _
    %1292 = vsyncpa [#allocation3], 1
    %s1293 = scalar_lea.sflag [#allocation3], 1
    %1294 = vsyncpa %s1293, 1
    %1295 = vsyncpa [#allocation6], 1
    %1296 = vsyncpa [#allocation4], 1
    %s1297 = scalar_lea.sflag [#allocation4], 1
    %1298 = vsyncpa %s1297, 1

// kernel: pre_register_forward.8
$region0: #{pre_register_forward.8}
  #allocation0 [shape = 'u32[]', space=smem, size = 0x4, offset = 0x4, fixed_abs, tag = 'smem constant byte address 0x4 - core index']
  #allocation1 [shape = 'u32[144,128]{1,0:T(1,128)}', space=vmem, size = 0x12000, scoped, tag = 'internal scratch']
  %s0 = inlined_call_operand.vmem [shape: f32[2,16], index: 0, kind: input, shape index: {}]
  %s1 = inlined_call_operand.vmem [shape: f32[16], index: 1, kind: input, shape index: {}]
  %s2 = inlined_call_operand.vmem [shape: f32[16,3], index: 2, kind: input, shape index: {}]
  %s3 = inlined_call_operand.vmem [shape: f32[3], index: 3, kind: input, shape index: {}]
  %s4 = inlined_call_operand.vmem [shape: f32[2,16,256], index: 4, kind: input, shape index: {}]
  %s5 = inlined_call_operand.vmem [shape: f32[2,16,256], index: 5, kind: input, shape index: {}]
  %s6 = inlined_call_operand.vmem [shape: f32[2,3,16,256], index: 6, kind: output, shape index: {}]
  %s7 = sld [smem:[#allocation0]]
  $region73: #{pre_register_forward.8} parent=0
    _
  %s9 = ssub.s32 1, %s7
  %s10 = scalar_select 0, %s9, %s7
  $region1: #{pre_register_forward.8} parent=0
    #allocation2 [shape = 'u8[1024]{0}', space=smem, size = 0x400, scoped, tag = 'input window, operand 0, single buffered']
    #allocation3 [shape = 's32[2]{0}', space=sflag, size = 0x8, scoped, tag = 'scoped memory for pre_register_forward.8']
    #allocation4 [shape = 'u8[512]{0}', space=smem, size = 0x200, scoped, tag = 'input window, operand 1, single buffered']
    #allocation5 [shape = 's32[1]{0}', space=sflag, size = 0x4, scoped, tag = 'scoped memory for pre_register_forward.8']
    #allocation6 [shape = 'u8[8192]{0}', space=smem, size = 0x2000, scoped, tag = 'input window, operand 2, single buffered']
    #allocation7 [shape = 'u8[512]{0}', space=smem, size = 0x200, scoped, tag = 'input window, operand 3, single buffered']
    #allocation8 [shape = 's32[1]{0}', space=sflag, size = 0x4, scoped, tag = 'scoped memory for pre_register_forward.8']
    %11 = vsyncpa [#allocation3], 0
    %12 = vsyncpa [#allocation5], 0
    %13 = vsyncpa [#allocation8], 0
    loop: start=0, step=1, limit=4
    $region2: #{pre_register_forward.8} parent=1 // loop_pre_header
      _
    $region3: #{pre_register_forward.8} parent=1 // loop_header
      %s15 = sphi 0, %s19
      %p16 = scmp.ge.s32.totalorder %s15, 4
      %s23 = sphi 0, %s23
      %s25 = sphi 0, %s23
      %s26 = sphi 0, %s25
      %s40 = sphi 0, %s26
      %s44 = sphi 0, %s44
      %s46 = sphi 0, %s44
      %s47 = sphi 0, %s46
      %s61 = sphi 0, %s47
      %s65 = sphi 0, %s65
      %s67 = sphi 0, %s65
      %s68 = sphi 0, %s67
      %s82 = sphi 0, %s68
      %s86 = sphi 0, %s86
      %s88 = sphi 0, %s86
      %s89 = sphi 0, %s88
      %s103 = sphi 0, %s89
      %s109 = sphi 0, %s111
      %s112 = sphi 0, %s109
      %s113 = sphi 0, %s112
      %s129 = sphi 0, %s113
      %s135 = sphi 0, %s137
      %s138 = sphi 0, %s135
      %s139 = sphi 0, %s138
      %s155 = sphi 0, %s139
      %s161 = sphi 0, %s163
      %s164 = sphi 0, %s161
      %s165 = sphi 0, %s164
      %s181 = sphi 0, %s165
    $region4: #{pre_register_forward.8} parent=1 // loop_header_branch
      %18 = sbr.rel (%p16) target = $region8
    $region5: #{pre_register_forward.8} parent=1 // loop_body
      %s20 = ssub.s32 %s15, 1
      %s21 = ssub.s32 %s15, 2
      %s22 = sadd.s32 %s15, 1
      %s24 = sadd.s32 %s23, 1
      %p27 = scmp.eq.s32.totalorder %s15, 1
      %p28 = scmp.ne.s32.totalorder %s23, %s25
      %p29 = scmp.eq.s32.totalorder %s15, 0
      %p30 = por %p28, %p29
      %p31 = scmp.ne.s32.totalorder %s23, %s25
      %p32 = scmp.eq.s32.totalorder %s20, 1
      %p33 = por %p31, %p32
      %p34 = scmp.ne.s32.totalorder %s25, %s26
      %p35 = scmp.eq.s32.totalorder %s20, 0
      %p36 = por %p34, %p35
      %p37 = scmp.ne.s32.totalorder %s25, %s26
      %p38 = scmp.eq.s32.totalorder %s21, 1
      %p39 = por %p37, %p38
      %p41 = scmp.ne.s32.totalorder %s26, %s40
      %p42 = scmp.eq.s32.totalorder %s21, 0
      %p43 = por %p41, %p42
      %s45 = sadd.s32 %s44, 1
      %p48 = scmp.eq.s32.totalorder %s15, 1
      %p49 = scmp.ne.s32.totalorder %s44, %s46
      %p50 = scmp.eq.s32.totalorder %s15, 0
      %p51 = por %p49, %p50
      %p52 = scmp.ne.s32.totalorder %s44, %s46
      %p53 = scmp.eq.s32.totalorder %s20, 1
      %p54 = por %p52, %p53
      %p55 = scmp.ne.s32.totalorder %s46, %s47
      %p56 = scmp.eq.s32.totalorder %s20, 0
      %p57 = por %p55, %p56
      %p58 = scmp.ne.s32.totalorder %s46, %s47
      %p59 = scmp.eq.s32.totalorder %s21, 1
      %p60 = por %p58, %p59
      %p62 = scmp.ne.s32.totalorder %s47, %s61
      %p63 = scmp.eq.s32.totalorder %s21, 0
      %p64 = por %p62, %p63
      %s66 = sadd.s32 %s65, 1
      %p69 = scmp.eq.s32.totalorder %s15, 1
      %p70 = scmp.ne.s32.totalorder %s65, %s67
      %p71 = scmp.eq.s32.totalorder %s15, 0
      %p72 = por %p70, %p71
      %p73 = scmp.ne.s32.totalorder %s65, %s67
      %p74 = scmp.eq.s32.totalorder %s20, 1
      %p75 = por %p73, %p74
      %p76 = scmp.ne.s32.totalorder %s67, %s68
      %p77 = scmp.eq.s32.totalorder %s20, 0
      %p78 = por %p76, %p77
      %p79 = scmp.ne.s32.totalorder %s67, %s68
      %p80 = scmp.eq.s32.totalorder %s21, 1
      %p81 = por %p79, %p80
      %p83 = scmp.ne.s32.totalorder %s68, %s82
      %p84 = scmp.eq.s32.totalorder %s21, 0
      %p85 = por %p83, %p84
      %s87 = sadd.s32 %s86, 1
      %p90 = scmp.eq.s32.totalorder %s15, 1
      %p91 = scmp.ne.s32.totalorder %s86, %s88
      %p92 = scmp.eq.s32.totalorder %s15, 0
      %p93 = por %p91, %p92
      %p94 = scmp.ne.s32.totalorder %s86, %s88
      %p95 = scmp.eq.s32.totalorder %s20, 1
      %p96 = por %p94, %p95
      %p97 = scmp.ne.s32.totalorder %s88, %s89
      %p98 = scmp.eq.s32.totalorder %s20, 0
      %p99 = por %p97, %p98
      %p100 = scmp.ne.s32.totalorder %s88, %s89
      %p101 = scmp.eq.s32.totalorder %s21, 1
      %p102 = por %p100, %p101
      %p104 = scmp.ne.s32.totalorder %s89, %s103
      %p105 = scmp.eq.s32.totalorder %s21, 0
      %p106 = por %p104, %p105
      %s107 = ssub.s32 %s15, %s22
      %p108 = scmp.eq.s32.totalorder %s107, 0
      %s110 = sadd.s32 %s109, 1
      %s111 = scalar_select %p108, %s109, %s110
      %p114 = pneg %p108
      %p115 = scmp.eq.s32.totalorder %s15, 1
      %p116 = por %p114, %p115
      %p117 = scmp.ne.s32.totalorder %s109, %s112
      %p118 = scmp.eq.s32.totalorder %s15, 0
      %p119 = por %p117, %p118
      %p120 = scmp.ne.s32.totalorder %s109, %s112
      %p121 = scmp.eq.s32.totalorder %s20, 1
      %p122 = por %p120, %p121
      %p123 = scmp.ne.s32.totalorder %s112, %s113
      %p124 = scmp.eq.s32.totalorder %s20, 0
      %p125 = por %p123, %p124
      %p126 = scmp.ne.s32.totalorder %s112, %s113
      %p127 = scmp.eq.s32.totalorder %s21, 1
      %p128 = por %p126, %p127
      %p130 = scmp.ne.s32.totalorder %s113, %s129
      %p131 = scmp.eq.s32.totalorder %s21, 0
      %p132 = por %p130, %p131
      %s133 = ssub.s32 %s15, %s22
      %p134 = scmp.eq.s32.totalorder %s133, 0
      %s136 = sadd.s32 %s135, 1
      %s137 = scalar_select %p134, %s135, %s136
      %p140 = pneg %p134
      %p141 = scmp.eq.s32.totalorder %s15, 1
      %p142 = por %p140, %p141
      %p143 = scmp.ne.s32.totalorder %s135, %s138
      %p144 = scmp.eq.s32.totalorder %s15, 0
      %p145 = por %p143, %p144
      %p146 = scmp.ne.s32.totalorder %s135, %s138
      %p147 = scmp.eq.s32.totalorder %s20, 1
      %p148 = por %p146, %p147
      %p149 = scmp.ne.s32.totalorder %s138, %s139
      %p150 = scmp.eq.s32.totalorder %s20, 0
      %p151 = por %p149, %p150
      %p152 = scmp.ne.s32.totalorder %s138, %s139
      %p153 = scmp.eq.s32.totalorder %s21, 1
      %p154 = por %p152, %p153
      %p156 = scmp.ne.s32.totalorder %s139, %s155
      %p157 = scmp.eq.s32.totalorder %s21, 0
      %p158 = por %p156, %p157
      %s159 = ssub.s32 %s15, %s22
      %p160 = scmp.eq.s32.totalorder %s159, 0
      %s162 = sadd.s32 %s161, 1
      %s163 = scalar_select %p160, %s161, %s162
      %p166 = pneg %p160
      %p167 = scmp.eq.s32.totalorder %s15, 1
      %p168 = por %p166, %p167
      %p169 = scmp.ne.s32.totalorder %s161, %s164
      %p170 = scmp.eq.s32.totalorder %s15, 0
      %p171 = por %p169, %p170
      %p172 = scmp.ne.s32.totalorder %s161, %s164
      %p173 = scmp.eq.s32.totalorder %s20, 1
      %p174 = por %p172, %p173
      %p175 = scmp.ne.s32.totalorder %s164, %s165
      %p176 = scmp.eq.s32.totalorder %s20, 0
      %p177 = por %p175, %p176
      %p178 = scmp.ne.s32.totalorder %s164, %s165
      %p179 = scmp.eq.s32.totalorder %s21, 1
      %p180 = por %p178, %p179
      %p182 = scmp.ne.s32.totalorder %s165, %s181
      %p183 = scmp.eq.s32.totalorder %s21, 0
      %p184 = por %p182, %p183
      %p185 = scmp.le.s32.totalorder 1, %s15
      %p186 = scmp.lt.s32.totalorder %s15, 3
      %p187 = pnand %p185, %p186
      %p188 = pneg %p187
      // Predicated region
      $region9: #{pre_register_forward.8} parent=5 // pred_check
        _
      $region10: #{pre_register_forward.8} parent=5 // pred_check_branch
        %190 = sbr.rel (%p187) target = $region12
      $region11: #{pre_register_forward.8} parent=5 // pred_region
        %s191 = ssub.s32 %s15, 1
        // Predicated region
        $region13: #{pre_register_forward.8} parent=11 // pred_check
          %p192 = pneg %p36
        $region14: #{pre_register_forward.8} parent=11 // pred_check_branch
          %194 = sbr.rel (%p192) target = $region16
        $region15: #{pre_register_forward.8} parent=11 // pred_region
          %s196 = ssub.s32 32, 32
          %197 = vsyncadd [#allocation3], %s196
          %s199 = sshll.u32 %s0, 4
          %s200 = int_to_ptr.vmem [resolvable:$true] %s199
          %202 = dma.vmem_to_smem %s200, 32, [#allocation2], [#allocation3]
        $region16: #{pre_register_forward.8} parent=11 // pred_fallthru
          _
        // Predicated region
        $region17: #{pre_register_forward.8} parent=11 // pred_check
          %p203 = pneg %p57
        $region18: #{pre_register_forward.8} parent=11 // pred_check_branch
          %205 = sbr.rel (%p203) target = $region20
        $region19: #{pre_register_forward.8} parent=11 // pred_region
          %s207 = ssub.s32 16, 16
          %208 = vsyncadd [#allocation5], %s207
          %s210 = sshll.u32 %s1, 4
          %s211 = int_to_ptr.vmem [resolvable:$true] %s210
          %213 = dma.vmem_to_smem %s211, 16, [#allocation4], [#allocation5]
        $region20: #{pre_register_forward.8} parent=11 // pred_fallthru
          _
        // Predicated region
        $region21: #{pre_register_forward.8} parent=11 // pred_check
          %p214 = pneg %p78
        $region22: #{pre_register_forward.8} parent=11 // pred_check_branch
          %216 = sbr.rel (%p214) target = $region24
        $region23: #{pre_register_forward.8} parent=11 // pred_region
          %s218 = ssub.s32 256, 256
          %219 = vsyncadd [#allocation5], %s218
          %s220 = sshll.u32 %s2, 4
          %s221 = int_to_ptr.vmem [resolvable:$true] %s220
          %226 = dma.vmem_to_smem %s221, 256, [#allocation6], [#allocation5], 128, 128, 8
        $region24: #{pre_register_forward.8} parent=11 // pred_fallthru
          _
        // Predicated region
        $region25: #{pre_register_forward.8} parent=11 // pred_check
          %p227 = pneg %p99
        $region26: #{pre_register_forward.8} parent=11 // pred_check_branch
          %229 = sbr.rel (%p227) target = $region28
        $region27: #{pre_register_forward.8} parent=11 // pred_region
          %s231 = ssub.s32 16, 16
          %232 = vsyncadd [#allocation8], %s231
          %s234 = sshll.u32 %s3, 4
          %s235 = int_to_ptr.vmem [resolvable:$true] %s234
          %237 = dma.vmem_to_smem %s235, 16, [#allocation7], [#allocation8]
        $region28: #{pre_register_forward.8} parent=11 // pred_fallthru
          _
      $region12: #{pre_register_forward.8} parent=5 // pred_fallthru
        _
      %p238 = scmp.lt.s32.totalorder %s15, 2
      // Predicated region
      $region29: #{pre_register_forward.8} parent=5 // pred_check
        %p239 = pneg %p238
      $region30: #{pre_register_forward.8} parent=5 // pred_check_branch
        %241 = sbr.rel (%p239) target = $region32
      $region31: #{pre_register_forward.8} parent=5 // pred_region
        // Predicated region
        $region33: #{pre_register_forward.8} parent=31 // pred_check
          %p242 = pneg %p119
        $region34: #{pre_register_forward.8} parent=31 // pred_check_branch
          %244 = sbr.rel (%p242) target = $region36
        $region35: #{pre_register_forward.8} parent=31 // pred_region
          %p245 = scmp.lt.s32.totalorder %s15, 1
          %s246 = scalar_select %p245, %s15, 1
          %s247 = smul.addr %s246, 4
          %s248 = smul.addr %s247, 8
          %s249 = scalar_lea.vmem %s4, %s248
        $region36: #{pre_register_forward.8} parent=31 // pred_fallthru
          _
        // Predicated region
        $region37: #{pre_register_forward.8} parent=31 // pred_check
          %p250 = pneg %p145
        $region38: #{pre_register_forward.8} parent=31 // pred_check_branch
          %252 = sbr.rel (%p250) target = $region40
        $region39: #{pre_register_forward.8} parent=31 // pred_region
          %p253 = scmp.lt.s32.totalorder %s15, 1
          %s254 = scalar_select %p253, %s15, 1
          %s255 = smul.addr %s254, 4
          %s256 = smul.addr %s255, 8
          %s257 = scalar_lea.vmem %s5, %s256
        $region40: #{pre_register_forward.8} parent=31 // pred_fallthru
          _
      $region32: #{pre_register_forward.8} parent=5 // pred_fallthru
        _
      %p258 = scmp.le.s32.totalorder 1, %s15
      %p259 = scmp.lt.s32.totalorder %s15, 3
      %p260 = pnand %p258, %p259
      %p261 = pneg %p260
      // Predicated region
      $region41: #{pre_register_forward.8} parent=5 // pred_check
        _
      $region42: #{pre_register_forward.8} parent=5 // pred_check_branch
        %263 = sbr.rel (%p260) target = $region44
      $region43: #{pre_register_forward.8} parent=5 // pred_region
        %s264 = ssub.s32 %s15, 1
        // Predicated region
        $region45: #{pre_register_forward.8} parent=43 // pred_check
          %p265 = pneg %p36
        $region46: #{pre_register_forward.8} parent=43 // pred_check_branch
          %267 = sbr.rel (%p265) target = $region48
        $region47: #{pre_register_forward.8} parent=43 // pred_region
          %268 = dma.done [#allocation3], 32
        $region48: #{pre_register_forward.8} parent=43 // pred_fallthru
          _
        // Predicated region
        $region49: #{pre_register_forward.8} parent=43 // pred_check
          %p269 = pneg %p57
        $region50: #{pre_register_forward.8} parent=43 // pred_check_branch
          %271 = sbr.rel (%p269) target = $region52
        $region51: #{pre_register_forward.8} parent=43 // pred_region
          %272 = dma.done [#allocation5], 16
        $region52: #{pre_register_forward.8} parent=43 // pred_fallthru
          _
        // Predicated region
        $region53: #{pre_register_forward.8} parent=43 // pred_check
          %p273 = pneg %p78
        $region54: #{pre_register_forward.8} parent=43 // pred_check_branch
          %275 = sbr.rel (%p273) target = $region56
        $region55: #{pre_register_forward.8} parent=43 // pred_region
          %276 = dma.done [#allocation5], 256
        $region56: #{pre_register_forward.8} parent=43 // pred_fallthru
          _
        // Predicated region
        $region57: #{pre_register_forward.8} parent=43 // pred_check
          %p277 = pneg %p99
        $region58: #{pre_register_forward.8} parent=43 // pred_check_branch
          %279 = sbr.rel (%p277) target = $region60
        $region59: #{pre_register_forward.8} parent=43 // pred_region
          %280 = dma.done [#allocation8], 16
        $region60: #{pre_register_forward.8} parent=43 // pred_fallthru
          _
        %281 = sfence
        %p282 = pneg %p36
        %p283 = pneg %p33
        %p284 = pneg %p57
        %p285 = pneg %p54
        %p286 = pneg %p78
        %p287 = pneg %p75
        %p288 = pneg %p99
        %p289 = pneg %p96
        %p290 = scmp.lt.s32.totalorder %s20, 1
        %s291 = scalar_select %p290, %s20, 1
        %s292 = smul.addr %s291, 4
        %s293 = smul.addr %s292, 8
        %s294 = scalar_lea.vmem %s4, %s293
        %p295 = pneg %p125
        %p296 = pneg %p122
        %p297 = scmp.lt.s32.totalorder %s20, 1
        %s298 = scalar_select %p297, %s20, 1
        %s299 = smul.addr %s298, 4
        %s300 = smul.addr %s299, 8
        %s301 = scalar_lea.vmem %s5, %s300
        %p302 = pneg %p151
        %p303 = pneg %p148
        %p304 = pneg %p177
        %p305 = pneg %p174
        %p306 = scmp.lt.s32.totalorder %s20, 1
        %s307 = scalar_select %p306, %s20, 1
        %s308 = smul.addr %s307, 12
        %s309 = smul.addr %s308, 8
        %s310 = scalar_lea.vmem %s6, %s309
        %p311 = scmp.lt.s32.totalorder %s20, 1
        %s312 = scalar_select %p311, %s20, 1
        %s313 = smul.addr %s312, 4
        %s314 = smul.addr %s313, 8
        %s315 = scalar_lea.vmem %s4, %s314
        %p316 = scmp.lt.s32.totalorder %s20, 1
        %s317 = scalar_select %p316, %s20, 1
        %s318 = smul.addr %s317, 4
        %s319 = smul.addr %s318, 8
        %s320 = scalar_lea.vmem %s5, %s319
        %p321 = scmp.lt.s32.totalorder %s20, 1
        %s322 = scalar_select %p321, %s20, 1
        %s323 = smul.addr %s322, 12
        %s324 = smul.addr %s323, 8
        %s325 = scalar_lea.vmem %s6, %s324
        %v326 = vld [vmem:[%s315] sm:$0xff]
        %v327 = vld [vmem:[%s315 + $0x8] sm:$0xff]
        %v328 = vld [vmem:[%s315 + $0x10] sm:$0xff]
        %v329 = vld [vmem:[%s315 + $0x18] sm:$0xff]
        %v330 = vld [vmem:[%s320] sm:$0xff]
        %v331 = vld [vmem:[%s320 + $0x8] sm:$0xff]
        %v332 = vld [vmem:[%s320 + $0x10] sm:$0xff]
        %v333 = vld [vmem:[%s320 + $0x18] sm:$0xff]
        %s334 = sld [smem:[#allocation7]]
        %v335 = vstv %s334
        %v336 = vadd.f32 %v335, 0.0
        %s337 = sld [smem:[#allocation7 + $0x1]]
        %v338 = vstv %s337
        %v339 = vadd.f32 %v338, 0.0
        %s340 = sld [smem:[#allocation7 + $0x2]]
        %v341 = vstv %s340
        %v342 = vadd.f32 %v341, 0.0
        %s343 = sld [smem:[#allocation2]]
        %v344 = vstv %s343
        %v345 = vmul.f32 %v326, %v344
        %v346 = vmul.f32 %v327, %v344
        %v347 = vmul.f32 %v328, %v344
        %v348 = vmul.f32 %v329, %v344
        %s349 = sld [smem:[#allocation2 + $0x80]]
        %v350 = vstv %s349
        %v351 = vmul.f32 %v330, %v350
        %v352 = vmul.f32 %v331, %v350
        %v353 = vmul.f32 %v332, %v350
        %v354 = vmul.f32 %v333, %v350
        %v355 = vadd.f32 %v345, %v351
        %v356 = vadd.f32 %v346, %v352
        %v357 = vadd.f32 %v347, %v353
        %v358 = vadd.f32 %v348, %v354
        %s359 = sld [smem:[#allocation4]]
        %v360 = vstv %s359
        %v361 = vadd.f32 %v355, %v360
        %v362 = vadd.f32 %v356, %v360
        %v363 = vadd.f32 %v357, %v360
        %v364 = vadd.f32 %v358, %v360
        %v365 = vtanh.pop %v361
        %v366 = vtanh.pop %v362
        %v367 = vtanh.pop %v363
        %v368 = vtanh.pop %v364
        %s369 = sld [smem:[#allocation6]]
        %v370 = vstv %s369
        %v371 = vmul.f32 %v365, %v370
        %v372 = vmul.f32 %v366, %v370
        %v373 = vmul.f32 %v367, %v370
        %v374 = vmul.f32 %v368, %v370
        %v375 = vadd.f32 %v336, %v371
        %v376 = vadd.f32 %v336, %v372
        %v377 = vadd.f32 %v336, %v373
        %v378 = vadd.f32 %v336, %v374
        %s379 = sld [smem:[#allocation6 + $0x1]]
        %v380 = vstv %s379
        %v381 = vmul.f32 %v365, %v380
        %v382 = vmul.f32 %v366, %v380
        %v383 = vmul.f32 %v367, %v380
        %v384 = vmul.f32 %v368, %v380
        %v385 = vadd.f32 %v339, %v381
        %v386 = vadd.f32 %v339, %v382
        %v387 = vadd.f32 %v339, %v383
        %v388 = vadd.f32 %v339, %v384
        %s389 = sld [smem:[#allocation6 + $0x2]]
        %v390 = vstv %s389
        %v391 = vmul.f32 %v365, %v390
        %v392 = vmul.f32 %v366, %v390
        %v393 = vmul.f32 %v367, %v390
        %v394 = vmul.f32 %v368, %v390
        %v395 = vadd.f32 %v342, %v391
        %v396 = vadd.f32 %v342, %v392
        %v397 = vadd.f32 %v342, %v393
        %v398 = vadd.f32 %v342, %v394
        %s399 = sld [smem:[#allocation2 + $0x1]]
        %v400 = vstv %s399
        %v401 = vmul.f32 %v326, %v400
        %v402 = vmul.f32 %v327, %v400
        %v403 = vmul.f32 %v328, %v400
        %v404 = vmul.f32 %v329, %v400
        %s405 = sld [smem:[#allocation2 + $0x81]]
        %v406 = vstv %s405
        %v407 = vmul.f32 %v330, %v406
        %v408 = vmul.f32 %v331, %v406
        %v409 = vmul.f32 %v332, %v406
        %v410 = vmul.f32 %v333, %v406
        %v411 = vadd.f32 %v401, %v407
        %v412 = vadd.f32 %v402, %v408
        %v413 = vadd.f32 %v403, %v409
        %v414 = vadd.f32 %v404, %v410
        %s415 = sld [smem:[#allocation4 + $0x1]]
        %v416 = vstv %s415
        %v417 = vadd.f32 %v411, %v416
        %v418 = vadd.f32 %v412, %v416
        %v419 = vadd.f32 %v413, %v416
        %v420 = vadd.f32 %v414, %v416
        %v421 = vtanh.pop %v417
        %v422 = vtanh.pop %v418
        %v423 = vtanh.pop %v419
        %v424 = vtanh.pop %v420
        %s425 = sld [smem:[#allocation6 + $0x80]]
        %v426 = vstv %s425
        %v427 = vmul.f32 %v421, %v426
        %v428 = vmul.f32 %v422, %v426
        %v429 = vmul.f32 %v423, %v426
        %v430 = vmul.f32 %v424, %v426
        %v431 = vadd.f32 %v375, %v427
        %v432 = vadd.f32 %v376, %v428
        %v433 = vadd.f32 %v377, %v429
        %v434 = vadd.f32 %v378, %v430
        %s435 = sld [smem:[#allocation6 + $0x81]]
        %v436 = vstv %s435
        %v437 = vmul.f32 %v421, %v436
        %v438 = vmul.f32 %v422, %v436
        %v439 = vmul.f32 %v423, %v436
        %v440 = vmul.f32 %v424, %v436
        %v441 = vadd.f32 %v385, %v437
        %v442 = vadd.f32 %v386, %v438
        %v443 = vadd.f32 %v387, %v439
        %v444 = vadd.f32 %v388, %v440
        %s445 = sld [smem:[#allocation6 + $0x82]]
        %v446 = vstv %s445
        %v447 = vmul.f32 %v421, %v446
        %v448 = vmul.f32 %v422, %v446
        %v449 = vmul.f32 %v423, %v446
        %v450 = vmul.f32 %v424, %v446
        %v451 = vadd.f32 %v395, %v447
        %v452 = vadd.f32 %v396, %v448
        %v453 = vadd.f32 %v397, %v449
        %v454 = vadd.f32 %v398, %v450
        %s455 = sld [smem:[#allocation2 + $0x2]]
        %v456 = vstv %s455
        %v457 = vmul.f32 %v326, %v456
        %v458 = vmul.f32 %v327, %v456
        %v459 = vmul.f32 %v328, %v456
        %v460 = vmul.f32 %v329, %v456
        %s461 = sld [smem:[#allocation2 + $0x82]]
        %v462 = vstv %s461
        %v463 = vmul.f32 %v330, %v462
        %v464 = vmul.f32 %v331, %v462
        %v465 = vmul.f32 %v332, %v462
        %v466 = vmul.f32 %v333, %v462
        %v467 = vadd.f32 %v457, %v463
        %v468 = vadd.f32 %v458, %v464
        %v469 = vadd.f32 %v459, %v465
        %v470 = vadd.f32 %v460, %v466
        %s471 = sld [smem:[#allocation4 + $0x2]]
        %v472 = vstv %s471
        %v473 = vadd.f32 %v467, %v472
        %v474 = vadd.f32 %v468, %v472
        %v475 = vadd.f32 %v469, %v472
        %v476 = vadd.f32 %v470, %v472
        %v477 = vtanh.pop %v473
        %v478 = vtanh.pop %v474
        %v479 = vtanh.pop %v475
        %v480 = vtanh.pop %v476
        %s481 = sld [smem:[#allocation6 + $0x100]]
        %v482 = vstv %s481
        %v483 = vmul.f32 %v477, %v482
        %v484 = vmul.f32 %v478, %v482
        %v485 = vmul.f32 %v479, %v482
        %v486 = vmul.f32 %v480, %v482
        %v487 = vadd.f32 %v431, %v483
        %v488 = vadd.f32 %v432, %v484
        %v489 = vadd.f32 %v433, %v485
        %v490 = vadd.f32 %v434, %v486
        %s491 = sld [smem:[#allocation6 + $0x101]]
        %v492 = vstv %s491
        %v493 = vmul.f32 %v477, %v492
        %v494 = vmul.f32 %v478, %v492
        %v495 = vmul.f32 %v479, %v492
        %v496 = vmul.f32 %v480, %v492
        %v497 = vadd.f32 %v441, %v493
        %v498 = vadd.f32 %v442, %v494
        %v499 = vadd.f32 %v443, %v495
        %v500 = vadd.f32 %v444, %v496
        %s501 = sld [smem:[#allocation6 + $0x102]]
        %v502 = vstv %s501
        %v503 = vmul.f32 %v477, %v502
        %v504 = vmul.f32 %v478, %v502
        %v505 = vmul.f32 %v479, %v502
        %v506 = vmul.f32 %v480, %v502
        %v507 = vadd.f32 %v451, %v503
        %v508 = vadd.f32 %v452, %v504
        %v509 = vadd.f32 %v453, %v505
        %v510 = vadd.f32 %v454, %v506
        %s511 = sld [smem:[#allocation2 + $0x3]]
        %v512 = vstv %s511
        %v513 = vmul.f32 %v326, %v512
        %v514 = vmul.f32 %v327, %v512
        %v515 = vmul.f32 %v328, %v512
        %v516 = vmul.f32 %v329, %v512
        %s517 = sld [smem:[#allocation2 + $0x83]]
        %v518 = vstv %s517
        %v519 = vmul.f32 %v330, %v518
        %v520 = vmul.f32 %v331, %v518
        %v521 = vmul.f32 %v332, %v518
        %v522 = vmul.f32 %v333, %v518
        %v523 = vadd.f32 %v513, %v519
        %v524 = vadd.f32 %v514, %v520
        %v525 = vadd.f32 %v515, %v521
        %v526 = vadd.f32 %v516, %v522
        %s527 = sld [smem:[#allocation4 + $0x3]]
        %v528 = vstv %s527
        %v529 = vadd.f32 %v523, %v528
        %v530 = vadd.f32 %v524, %v528
        %v531 = vadd.f32 %v525, %v528
        %v532 = vadd.f32 %v526, %v528
        %v533 = vtanh.pop %v529
        %v534 = vtanh.pop %v530
        %v535 = vtanh.pop %v531
        %v536 = vtanh.pop %v532
        %s537 = sld [smem:[#allocation6 + $0x180]]
        %v538 = vstv %s537
        %v539 = vmul.f32 %v533, %v538
        %v540 = vmul.f32 %v534, %v538
        %v541 = vmul.f32 %v535, %v538
        %v542 = vmul.f32 %v536, %v538
        %v543 = vadd.f32 %v487, %v539
        %v544 = vadd.f32 %v488, %v540
        %v545 = vadd.f32 %v489, %v541
        %v546 = vadd.f32 %v490, %v542
        %s547 = sld [smem:[#allocation6 + $0x181]]
        %v548 = vstv %s547
        %v549 = vmul.f32 %v533, %v548
        %v550 = vmul.f32 %v534, %v548
        %v551 = vmul.f32 %v535, %v548
        %v552 = vmul.f32 %v536, %v548
        %v553 = vadd.f32 %v497, %v549
        %v554 = vadd.f32 %v498, %v550
        %v555 = vadd.f32 %v499, %v551
        %v556 = vadd.f32 %v500, %v552
        %s557 = sld [smem:[#allocation6 + $0x182]]
        %v558 = vstv %s557
        %v559 = vmul.f32 %v533, %v558
        %v560 = vmul.f32 %v534, %v558
        %v561 = vmul.f32 %v535, %v558
        %v562 = vmul.f32 %v536, %v558
        %v563 = vadd.f32 %v507, %v559
        %v564 = vadd.f32 %v508, %v560
        %v565 = vadd.f32 %v509, %v561
        %v566 = vadd.f32 %v510, %v562
        %s567 = sld [smem:[#allocation2 + $0x4]]
        %v568 = vstv %s567
        %v569 = vmul.f32 %v326, %v568
        %v570 = vmul.f32 %v327, %v568
        %v571 = vmul.f32 %v328, %v568
        %v572 = vmul.f32 %v329, %v568
        %s573 = sld [smem:[#allocation2 + $0x84]]
        %v574 = vstv %s573
        %v575 = vmul.f32 %v330, %v574
        %v576 = vmul.f32 %v331, %v574
        %v577 = vmul.f32 %v332, %v574
        %v578 = vmul.f32 %v333, %v574
        %v579 = vadd.f32 %v569, %v575
        %v580 = vadd.f32 %v570, %v576
        %v581 = vadd.f32 %v571, %v577
        %v582 = vadd.f32 %v572, %v578
        %s583 = sld [smem:[#allocation4 + $0x4]]
        %v584 = vstv %s583
        %v585 = vadd.f32 %v579, %v584
        %v586 = vadd.f32 %v580, %v584
        %v587 = vadd.f32 %v581, %v584
        %v588 = vadd.f32 %v582, %v584
        %v589 = vtanh.pop %v585
        %v590 = vtanh.pop %v586
        %v591 = vtanh.pop %v587
        %v592 = vtanh.pop %v588
        %s593 = sld [smem:[#allocation6 + $0x200]]
        %v594 = vstv %s593
        %v595 = vmul.f32 %v589, %v594
        %v596 = vmul.f32 %v590, %v594
        %v597 = vmul.f32 %v591, %v594
        %v598 = vmul.f32 %v592, %v594
        %v599 = vadd.f32 %v543, %v595
        %v600 = vadd.f32 %v544, %v596
        %v601 = vadd.f32 %v545, %v597
        %v602 = vadd.f32 %v546, %v598
        %s603 = sld [smem:[#allocation6 + $0x201]]
        %v604 = vstv %s603
        %v605 = vmul.f32 %v589, %v604
        %v606 = vmul.f32 %v590, %v604
        %v607 = vmul.f32 %v591, %v604
        %v608 = vmul.f32 %v592, %v604
        %v609 = vadd.f32 %v553, %v605
        %v610 = vadd.f32 %v554, %v606
        %v611 = vadd.f32 %v555, %v607
        %v612 = vadd.f32 %v556, %v608
        %s613 = sld [smem:[#allocation6 + $0x202]]
        %v614 = vstv %s613
        %v615 = vmul.f32 %v589, %v614
        %v616 = vmul.f32 %v590, %v614
        %v617 = vmul.f32 %v591, %v614
        %v618 = vmul.f32 %v592, %v614
        %v619 = vadd.f32 %v563, %v615
        %v620 = vadd.f32 %v564, %v616
        %v621 = vadd.f32 %v565, %v617
        %v622 = vadd.f32 %v566, %v618
        %s623 = sld [smem:[#allocation2 + $0x5]]
        %v624 = vstv %s623
        %v625 = vmul.f32 %v326, %v624
        %v626 = vmul.f32 %v327, %v624
        %v627 = vmul.f32 %v328, %v624
        %v628 = vmul.f32 %v329, %v624
        %s629 = sld [smem:[#allocation2 + $0x85]]
        %v630 = vstv %s629
        %v631 = vmul.f32 %v330, %v630
        %v632 = vmul.f32 %v331, %v630
        %v633 = vmul.f32 %v332, %v630
        %v634 = vmul.f32 %v333, %v630
        %v635 = vadd.f32 %v625, %v631
        %v636 = vadd.f32 %v626, %v632
        %v637 = vadd.f32 %v627, %v633
        %v638 = vadd.f32 %v628, %v634
        %s639 = sld [smem:[#allocation4 + $0x5]]
        %v640 = vstv %s639
        %v641 = vadd.f32 %v635, %v640
        %v642 = vadd.f32 %v636, %v640
        %v643 = vadd.f32 %v637, %v640
        %v644 = vadd.f32 %v638, %v640
        %v645 = vtanh.pop %v641
        %v646 = vtanh.pop %v642
        %v647 = vtanh.pop %v643
        %v648 = vtanh.pop %v644
        %s649 = sld [smem:[#allocation6 + $0x280]]
        %v650 = vstv %s649
        %v651 = vmul.f32 %v645, %v650
        %v652 = vmul.f32 %v646, %v650
        %v653 = vmul.f32 %v647, %v650
        %v654 = vmul.f32 %v648, %v650
        %v655 = vadd.f32 %v599, %v651
        %v656 = vadd.f32 %v600, %v652
        %v657 = vadd.f32 %v601, %v653
        %v658 = vadd.f32 %v602, %v654
        %s659 = sld [smem:[#allocation6 + $0x281]]
        %v660 = vstv %s659
        %v661 = vmul.f32 %v645, %v660
        %v662 = vmul.f32 %v646, %v660
        %v663 = vmul.f32 %v647, %v660
        %v664 = vmul.f32 %v648, %v660
        %v665 = vadd.f32 %v609, %v661
        %v666 = vadd.f32 %v610, %v662
        %v667 = vadd.f32 %v611, %v663
        %v668 = vadd.f32 %v612, %v664
        %s669 = sld [smem:[#allocation6 + $0x282]]
        %v670 = vstv %s669
        %v671 = vmul.f32 %v645, %v670
        %v672 = vmul.f32 %v646, %v670
        %v673 = vmul.f32 %v647, %v670
        %v674 = vmul.f32 %v648, %v670
        %v675 = vadd.f32 %v619, %v671
        %v676 = vadd.f32 %v620, %v672
        %v677 = vadd.f32 %v621, %v673
        %v678 = vadd.f32 %v622, %v674
        %s679 = sld [smem:[#allocation2 + $0x6]]
        %v680 = vstv %s679
        %v681 = vmul.f32 %v326, %v680
        %v682 = vmul.f32 %v327, %v680
        %v683 = vmul.f32 %v328, %v680
        %v684 = vmul.f32 %v329, %v680
        %s685 = sld [smem:[#allocation2 + $0x86]]
        %v686 = vstv %s685
        %v687 = vmul.f32 %v330, %v686
        %v688 = vmul.f32 %v331, %v686
        %v689 = vmul.f32 %v332, %v686
        %v690 = vmul.f32 %v333, %v686
        %v691 = vadd.f32 %v681, %v687
        %v692 = vadd.f32 %v682, %v688
        %v693 = vadd.f32 %v683, %v689
        %v694 = vadd.f32 %v684, %v690
        %s695 = sld [smem:[#allocation4 + $0x6]]
        %v696 = vstv %s695
        %v697 = vadd.f32 %v691, %v696
        %v698 = vadd.f32 %v692, %v696
        %v699 = vadd.f32 %v693, %v696
        %v700 = vadd.f32 %v694, %v696
        %v701 = vtanh.pop %v697
        %v702 = vtanh.pop %v698
        %v703 = vtanh.pop %v699
        %v704 = vtanh.pop %v700
        %s705 = sld [smem:[#allocation6 + $0x300]]
        %v706 = vstv %s705
        %v707 = vmul.f32 %v701, %v706
        %v708 = vmul.f32 %v702, %v706
        %v709 = vmul.f32 %v703, %v706
        %v710 = vmul.f32 %v704, %v706
        %v711 = vadd.f32 %v655, %v707
        %v712 = vadd.f32 %v656, %v708
        %v713 = vadd.f32 %v657, %v709
        %v714 = vadd.f32 %v658, %v710
        %s715 = sld [smem:[#allocation6 + $0x301]]
        %v716 = vstv %s715
        %v717 = vmul.f32 %v701, %v716
        %v718 = vmul.f32 %v702, %v716
        %v719 = vmul.f32 %v703, %v716
        %v720 = vmul.f32 %v704, %v716
        %v721 = vadd.f32 %v665, %v717
        %v722 = vadd.f32 %v666, %v718
        %v723 = vadd.f32 %v667, %v719
        %v724 = vadd.f32 %v668, %v720
        %s725 = sld [smem:[#allocation6 + $0x302]]
        %v726 = vstv %s725
        %v727 = vmul.f32 %v701, %v726
        %v728 = vmul.f32 %v702, %v726
        %v729 = vmul.f32 %v703, %v726
        %v730 = vmul.f32 %v704, %v726
        %v731 = vadd.f32 %v675, %v727
        %v732 = vadd.f32 %v676, %v728
        %v733 = vadd.f32 %v677, %v729
        %v734 = vadd.f32 %v678, %v730
        %s735 = sld [smem:[#allocation2 + $0x7]]
        %v736 = vstv %s735
        %v737 = vmul.f32 %v326, %v736
        %v738 = vmul.f32 %v327, %v736
        %v739 = vmul.f32 %v328, %v736
        %v740 = vmul.f32 %v329, %v736
        %s741 = sld [smem:[#allocation2 + $0x87]]
        %v742 = vstv %s741
        %v743 = vmul.f32 %v330, %v742
        %v744 = vmul.f32 %v331, %v742
        %v745 = vmul.f32 %v332, %v742
        %v746 = vmul.f32 %v333, %v742
        %v747 = vadd.f32 %v737, %v743
        %v748 = vadd.f32 %v738, %v744
        %v749 = vadd.f32 %v739, %v745
        %v750 = vadd.f32 %v740, %v746
        %s751 = sld [smem:[#allocation4 + $0x7]]
        %v752 = vstv %s751
        %v753 = vadd.f32 %v747, %v752
        %v754 = vadd.f32 %v748, %v752
        %v755 = vadd.f32 %v749, %v752
        %v756 = vadd.f32 %v750, %v752
        %v757 = vtanh.pop %v753
        %v758 = vtanh.pop %v754
        %v759 = vtanh.pop %v755
        %v760 = vtanh.pop %v756
        %s761 = sld [smem:[#allocation6 + $0x380]]
        %v762 = vstv %s761
        %v763 = vmul.f32 %v757, %v762
        %v764 = vmul.f32 %v758, %v762
        %v765 = vmul.f32 %v759, %v762
        %v766 = vmul.f32 %v760, %v762
        %v767 = vadd.f32 %v711, %v763
        %v768 = vadd.f32 %v712, %v764
        %v769 = vadd.f32 %v713, %v765
        %v770 = vadd.f32 %v714, %v766
        %s771 = sld [smem:[#allocation6 + $0x381]]
        %v772 = vstv %s771
        %v773 = vmul.f32 %v757, %v772
        %v774 = vmul.f32 %v758, %v772
        %v775 = vmul.f32 %v759, %v772
        %v776 = vmul.f32 %v760, %v772
        %v777 = vadd.f32 %v721, %v773
        %v778 = vadd.f32 %v722, %v774
        %v779 = vadd.f32 %v723, %v775
        %v780 = vadd.f32 %v724, %v776
        %s781 = sld [smem:[#allocation6 + $0x382]]
        %v782 = vstv %s781
        %v783 = vmul.f32 %v757, %v782
        %v784 = vmul.f32 %v758, %v782
        %v785 = vmul.f32 %v759, %v782
        %v786 = vmul.f32 %v760, %v782
        %v787 = vadd.f32 %v731, %v783
        %v788 = vadd.f32 %v732, %v784
        %v789 = vadd.f32 %v733, %v785
        %v790 = vadd.f32 %v734, %v786
        %s791 = sld [smem:[#allocation2 + $0x8]]
        %v792 = vstv %s791
        %v793 = vmul.f32 %v326, %v792
        %v794 = vmul.f32 %v327, %v792
        %v795 = vmul.f32 %v328, %v792
        %v796 = vmul.f32 %v329, %v792
        %s797 = sld [smem:[#allocation2 + $0x88]]
        %v798 = vstv %s797
        %v799 = vmul.f32 %v330, %v798
        %v800 = vmul.f32 %v331, %v798
        %v801 = vmul.f32 %v332, %v798
        %v802 = vmul.f32 %v333, %v798
        %v803 = vadd.f32 %v793, %v799
        %v804 = vadd.f32 %v794, %v800
        %v805 = vadd.f32 %v795, %v801
        %v806 = vadd.f32 %v796, %v802
        %s807 = sld [smem:[#allocation4 + $0x8]]
        %v808 = vstv %s807
        %v809 = vadd.f32 %v803, %v808
        %v810 = vadd.f32 %v804, %v808
        %v811 = vadd.f32 %v805, %v808
        %v812 = vadd.f32 %v806, %v808
        %v813 = vtanh.pop %v809
        %v814 = vtanh.pop %v810
        %v815 = vtanh.pop %v811
        %v816 = vtanh.pop %v812
        %s817 = sld [smem:[#allocation6 + $0x400]]
        %v818 = vstv %s817
        %v819 = vmul.f32 %v813, %v818
        %v820 = vmul.f32 %v814, %v818
        %v821 = vmul.f32 %v815, %v818
        %v822 = vmul.f32 %v816, %v818
        %v823 = vadd.f32 %v767, %v819
        %v824 = vadd.f32 %v768, %v820
        %v825 = vadd.f32 %v769, %v821
        %v826 = vadd.f32 %v770, %v822
        %s827 = sld [smem:[#allocation6 + $0x401]]
        %v828 = vstv %s827
        %v829 = vmul.f32 %v813, %v828
        %v830 = vmul.f32 %v814, %v828
        %v831 = vmul.f32 %v815, %v828
        %v832 = vmul.f32 %v816, %v828
        %v833 = vadd.f32 %v777, %v829
        %v834 = vadd.f32 %v778, %v830
        %v835 = vadd.f32 %v779, %v831
        %v836 = vadd.f32 %v780, %v832
        %s837 = sld [smem:[#allocation6 + $0x402]]
        %v838 = vstv %s837
        %v839 = vmul.f32 %v813, %v838
        %v840 = vmul.f32 %v814, %v838
        %v841 = vmul.f32 %v815, %v838
        %v842 = vmul.f32 %v816, %v838
        %v843 = vadd.f32 %v787, %v839
        %v844 = vadd.f32 %v788, %v840
        %v845 = vadd.f32 %v789, %v841
        %v846 = vadd.f32 %v790, %v842
        %s847 = sld [smem:[#allocation2 + $0x9]]
        %v848 = vstv %s847
        %v849 = vmul.f32 %v326, %v848
        %v850 = vmul.f32 %v327, %v848
        %v851 = vmul.f32 %v328, %v848
        %v852 = vmul.f32 %v329, %v848
        %s853 = sld [smem:[#allocation2 + $0x89]]
        %v854 = vstv %s853
        %v855 = vmul.f32 %v330, %v854
        %v856 = vmul.f32 %v331, %v854
        %v857 = vmul.f32 %v332, %v854
        %v858 = vmul.f32 %v333, %v854
        %v859 = vadd.f32 %v849, %v855
        %v860 = vadd.f32 %v850, %v856
        %v861 = vadd.f32 %v851, %v857
        %v862 = vadd.f32 %v852, %v858
        %s863 = sld [smem:[#allocation4 + $0x9]]
        %v864 = vstv %s863
        %v865 = vadd.f32 %v859, %v864
        %v866 = vadd.f32 %v860, %v864
        %v867 = vadd.f32 %v861, %v864
        %v868 = vadd.f32 %v862, %v864
        %v869 = vtanh.pop %v865
        %v870 = vtanh.pop %v866
        %v871 = vtanh.pop %v867
        %v872 = vtanh.pop %v868
        %s873 = sld [smem:[#allocation6 + $0x480]]
        %v874 = vstv %s873
        %v875 = vmul.f32 %v869, %v874
        %v876 = vmul.f32 %v870, %v874
        %v877 = vmul.f32 %v871, %v874
        %v878 = vmul.f32 %v872, %v874
        %v879 = vadd.f32 %v823, %v875
        %v880 = vadd.f32 %v824, %v876
        %v881 = vadd.f32 %v825, %v877
        %v882 = vadd.f32 %v826, %v878
        %s883 = sld [smem:[#allocation6 + $0x481]]
        %v884 = vstv %s883
        %v885 = vmul.f32 %v869, %v884
        %v886 = vmul.f32 %v870, %v884
        %v887 = vmul.f32 %v871, %v884
        %v888 = vmul.f32 %v872, %v884
        %v889 = vadd.f32 %v833, %v885
        %v890 = vadd.f32 %v834, %v886
        %v891 = vadd.f32 %v835, %v887
        %v892 = vadd.f32 %v836, %v888
        %s893 = sld [smem:[#allocation6 + $0x482]]
        %v894 = vstv %s893
        %v895 = vmul.f32 %v869, %v894
        %v896 = vmul.f32 %v870, %v894
        %v897 = vmul.f32 %v871, %v894
        %v898 = vmul.f32 %v872, %v894
        %v899 = vadd.f32 %v843, %v895
        %v900 = vadd.f32 %v844, %v896
        %v901 = vadd.f32 %v845, %v897
        %v902 = vadd.f32 %v846, %v898
        %s903 = sld [smem:[#allocation2 + $0xa]]
        %v904 = vstv %s903
        %v905 = vmul.f32 %v326, %v904
        %v906 = vmul.f32 %v327, %v904
        %v907 = vmul.f32 %v328, %v904
        %v908 = vmul.f32 %v329, %v904
        %s909 = sld [smem:[#allocation2 + $0x8a]]
        %v910 = vstv %s909
        %v911 = vmul.f32 %v330, %v910
        %v912 = vmul.f32 %v331, %v910
        %v913 = vmul.f32 %v332, %v910
        %v914 = vmul.f32 %v333, %v910
        %v915 = vadd.f32 %v905, %v911
        %v916 = vadd.f32 %v906, %v912
        %v917 = vadd.f32 %v907, %v913
        %v918 = vadd.f32 %v908, %v914
        %s919 = sld [smem:[#allocation4 + $0xa]]
        %v920 = vstv %s919
        %v921 = vadd.f32 %v915, %v920
        %v922 = vadd.f32 %v916, %v920
        %v923 = vadd.f32 %v917, %v920
        %v924 = vadd.f32 %v918, %v920
        %v925 = vtanh.pop %v921
        %v926 = vtanh.pop %v922
        %v927 = vtanh.pop %v923
        %v928 = vtanh.pop %v924
        %s929 = sld [smem:[#allocation6 + $0x500]]
        %v930 = vstv %s929
        %v931 = vmul.f32 %v925, %v930
        %v932 = vmul.f32 %v926, %v930
        %v933 = vmul.f32 %v927, %v930
        %v934 = vmul.f32 %v928, %v930
        %v935 = vadd.f32 %v879, %v931
        %v936 = vadd.f32 %v880, %v932
        %v937 = vadd.f32 %v881, %v933
        %v938 = vadd.f32 %v882, %v934
        %s939 = sld [smem:[#allocation6 + $0x501]]
        %v940 = vstv %s939
        %v941 = vmul.f32 %v925, %v940
        %v942 = vmul.f32 %v926, %v940
        %v943 = vmul.f32 %v927, %v940
        %v944 = vmul.f32 %v928, %v940
        %v945 = vadd.f32 %v889, %v941
        %v946 = vadd.f32 %v890, %v942
        %v947 = vadd.f32 %v891, %v943
        %v948 = vadd.f32 %v892, %v944
        %s949 = sld [smem:[#allocation6 + $0x502]]
        %v950 = vstv %s949
        %v951 = vmul.f32 %v925, %v950
        %v952 = vmul.f32 %v926, %v950
        %v953 = vmul.f32 %v927, %v950
        %v954 = vmul.f32 %v928, %v950
        %v955 = vadd.f32 %v899, %v951
        %v956 = vadd.f32 %v900, %v952
        %v957 = vadd.f32 %v901, %v953
        %v958 = vadd.f32 %v902, %v954
        %s959 = sld [smem:[#allocation2 + $0xb]]
        %v960 = vstv %s959
        %v961 = vmul.f32 %v326, %v960
        %v962 = vmul.f32 %v327, %v960
        %v963 = vmul.f32 %v328, %v960
        %v964 = vmul.f32 %v329, %v960
        %s965 = sld [smem:[#allocation2 + $0x8b]]
        %v966 = vstv %s965
        %v967 = vmul.f32 %v330, %v966
        %v968 = vmul.f32 %v331, %v966
        %v969 = vmul.f32 %v332, %v966
        %v970 = vmul.f32 %v333, %v966
        %v971 = vadd.f32 %v961, %v967
        %v972 = vadd.f32 %v962, %v968
        %v973 = vadd.f32 %v963, %v969
        %v974 = vadd.f32 %v964, %v970
        %s975 = sld [smem:[#allocation4 + $0xb]]
        %v976 = vstv %s975
        %v977 = vadd.f32 %v971, %v976
        %v978 = vadd.f32 %v972, %v976
        %v979 = vadd.f32 %v973, %v976
        %v980 = vadd.f32 %v974, %v976
        %v981 = vtanh.pop %v977
        %v982 = vtanh.pop %v978
        %v983 = vtanh.pop %v979
        %v984 = vtanh.pop %v980
        %s985 = sld [smem:[#allocation6 + $0x580]]
        %v986 = vstv %s985
        %v987 = vmul.f32 %v981, %v986
        %v988 = vmul.f32 %v982, %v986
        %v989 = vmul.f32 %v983, %v986
        %v990 = vmul.f32 %v984, %v986
        %v991 = vadd.f32 %v935, %v987
        %v992 = vadd.f32 %v936, %v988
        %v993 = vadd.f32 %v937, %v989
        %v994 = vadd.f32 %v938, %v990
        %s995 = sld [smem:[#allocation6 + $0x581]]
        %v996 = vstv %s995
        %v997 = vmul.f32 %v981, %v996
        %v998 = vmul.f32 %v982, %v996
        %v999 = vmul.f32 %v983, %v996
        %v1000 = vmul.f32 %v984, %v996
        %v1001 = vadd.f32 %v945, %v997
        %v1002 = vadd.f32 %v946, %v998
        %v1003 = vadd.f32 %v947, %v999
        %v1004 = vadd.f32 %v948, %v1000
        %s1005 = sld [smem:[#allocation6 + $0x582]]
        %v1006 = vstv %s1005
        %v1007 = vmul.f32 %v981, %v1006
        %v1008 = vmul.f32 %v982, %v1006
        %v1009 = vmul.f32 %v983, %v1006
        %v1010 = vmul.f32 %v984, %v1006
        %v1011 = vadd.f32 %v955, %v1007
        %v1012 = vadd.f32 %v956, %v1008
        %v1013 = vadd.f32 %v957, %v1009
        %v1014 = vadd.f32 %v958, %v1010
        %s1015 = sld [smem:[#allocation2 + $0xc]]
        %v1016 = vstv %s1015
        %v1017 = vmul.f32 %v326, %v1016
        %v1018 = vmul.f32 %v327, %v1016
        %v1019 = vmul.f32 %v328, %v1016
        %v1020 = vmul.f32 %v329, %v1016
        %s1021 = sld [smem:[#allocation2 + $0x8c]]
        %v1022 = vstv %s1021
        %v1023 = vmul.f32 %v330, %v1022
        %v1024 = vmul.f32 %v331, %v1022
        %v1025 = vmul.f32 %v332, %v1022
        %v1026 = vmul.f32 %v333, %v1022
        %v1027 = vadd.f32 %v1017, %v1023
        %v1028 = vadd.f32 %v1018, %v1024
        %v1029 = vadd.f32 %v1019, %v1025
        %v1030 = vadd.f32 %v1020, %v1026
        %s1031 = sld [smem:[#allocation4 + $0xc]]
        %v1032 = vstv %s1031
        %v1033 = vadd.f32 %v1027, %v1032
        %v1034 = vadd.f32 %v1028, %v1032
        %v1035 = vadd.f32 %v1029, %v1032
        %v1036 = vadd.f32 %v1030, %v1032
        %v1037 = vtanh.pop %v1033
        %v1038 = vtanh.pop %v1034
        %v1039 = vtanh.pop %v1035
        %v1040 = vtanh.pop %v1036
        %s1041 = sld [smem:[#allocation6 + $0x600]]
        %v1042 = vstv %s1041
        %v1043 = vmul.f32 %v1037, %v1042
        %v1044 = vmul.f32 %v1038, %v1042
        %v1045 = vmul.f32 %v1039, %v1042
        %v1046 = vmul.f32 %v1040, %v1042
        %v1047 = vadd.f32 %v991, %v1043
        %v1048 = vadd.f32 %v992, %v1044
        %v1049 = vadd.f32 %v993, %v1045
        %v1050 = vadd.f32 %v994, %v1046
        %s1051 = sld [smem:[#allocation6 + $0x601]]
        %v1052 = vstv %s1051
        %v1053 = vmul.f32 %v1037, %v1052
        %v1054 = vmul.f32 %v1038, %v1052
        %v1055 = vmul.f32 %v1039, %v1052
        %v1056 = vmul.f32 %v1040, %v1052
        %v1057 = vadd.f32 %v1001, %v1053
        %v1058 = vadd.f32 %v1002, %v1054
        %v1059 = vadd.f32 %v1003, %v1055
        %v1060 = vadd.f32 %v1004, %v1056
        %s1061 = sld [smem:[#allocation6 + $0x602]]
        %v1062 = vstv %s1061
        %v1063 = vmul.f32 %v1037, %v1062
        %v1064 = vmul.f32 %v1038, %v1062
        %v1065 = vmul.f32 %v1039, %v1062
        %v1066 = vmul.f32 %v1040, %v1062
        %v1067 = vadd.f32 %v1011, %v1063
        %v1068 = vadd.f32 %v1012, %v1064
        %v1069 = vadd.f32 %v1013, %v1065
        %v1070 = vadd.f32 %v1014, %v1066
        %s1071 = sld [smem:[#allocation2 + $0xd]]
        %v1072 = vstv %s1071
        %v1073 = vmul.f32 %v326, %v1072
        %v1074 = vmul.f32 %v327, %v1072
        %v1075 = vmul.f32 %v328, %v1072
        %v1076 = vmul.f32 %v329, %v1072
        %s1077 = sld [smem:[#allocation2 + $0x8d]]
        %v1078 = vstv %s1077
        %v1079 = vmul.f32 %v330, %v1078
        %v1080 = vmul.f32 %v331, %v1078
        %v1081 = vmul.f32 %v332, %v1078
        %v1082 = vmul.f32 %v333, %v1078
        %v1083 = vadd.f32 %v1073, %v1079
        %v1084 = vadd.f32 %v1074, %v1080
        %v1085 = vadd.f32 %v1075, %v1081
        %v1086 = vadd.f32 %v1076, %v1082
        %s1087 = sld [smem:[#allocation4 + $0xd]]
        %v1088 = vstv %s1087
        %v1089 = vadd.f32 %v1083, %v1088
        %v1090 = vadd.f32 %v1084, %v1088
        %v1091 = vadd.f32 %v1085, %v1088
        %v1092 = vadd.f32 %v1086, %v1088
        %v1093 = vtanh.pop %v1089
        %v1094 = vtanh.pop %v1090
        %v1095 = vtanh.pop %v1091
        %v1096 = vtanh.pop %v1092
        %s1097 = sld [smem:[#allocation6 + $0x680]]
        %v1098 = vstv %s1097
        %v1099 = vmul.f32 %v1093, %v1098
        %v1100 = vmul.f32 %v1094, %v1098
        %v1101 = vmul.f32 %v1095, %v1098
        %v1102 = vmul.f32 %v1096, %v1098
        %v1103 = vadd.f32 %v1047, %v1099
        %v1104 = vadd.f32 %v1048, %v1100
        %v1105 = vadd.f32 %v1049, %v1101
        %v1106 = vadd.f32 %v1050, %v1102
        %s1107 = sld [smem:[#allocation6 + $0x681]]
        %v1108 = vstv %s1107
        %v1109 = vmul.f32 %v1093, %v1108
        %v1110 = vmul.f32 %v1094, %v1108
        %v1111 = vmul.f32 %v1095, %v1108
        %v1112 = vmul.f32 %v1096, %v1108
        %v1113 = vadd.f32 %v1057, %v1109
        %v1114 = vadd.f32 %v1058, %v1110
        %v1115 = vadd.f32 %v1059, %v1111
        %v1116 = vadd.f32 %v1060, %v1112
        %s1117 = sld [smem:[#allocation6 + $0x682]]
        %v1118 = vstv %s1117
        %v1119 = vmul.f32 %v1093, %v1118
        %v1120 = vmul.f32 %v1094, %v1118
        %v1121 = vmul.f32 %v1095, %v1118
        %v1122 = vmul.f32 %v1096, %v1118
        %v1123 = vadd.f32 %v1067, %v1119
        %v1124 = vadd.f32 %v1068, %v1120
        %v1125 = vadd.f32 %v1069, %v1121
        %v1126 = vadd.f32 %v1070, %v1122
        %s1127 = sld [smem:[#allocation2 + $0xe]]
        %v1128 = vstv %s1127
        %v1129 = vmul.f32 %v326, %v1128
        %v1130 = vmul.f32 %v327, %v1128
        %v1131 = vmul.f32 %v328, %v1128
        %v1132 = vmul.f32 %v329, %v1128
        %s1133 = sld [smem:[#allocation2 + $0x8e]]
        %v1134 = vstv %s1133
        %v1135 = vmul.f32 %v330, %v1134
        %v1136 = vmul.f32 %v331, %v1134
        %v1137 = vmul.f32 %v332, %v1134
        %v1138 = vmul.f32 %v333, %v1134
        %v1139 = vadd.f32 %v1129, %v1135
        %v1140 = vadd.f32 %v1130, %v1136
        %v1141 = vadd.f32 %v1131, %v1137
        %v1142 = vadd.f32 %v1132, %v1138
        %s1143 = sld [smem:[#allocation4 + $0xe]]
        %v1144 = vstv %s1143
        %v1145 = vadd.f32 %v1139, %v1144
        %v1146 = vadd.f32 %v1140, %v1144
        %v1147 = vadd.f32 %v1141, %v1144
        %v1148 = vadd.f32 %v1142, %v1144
        %v1149 = vtanh.pop %v1145
        %v1150 = vtanh.pop %v1146
        %v1151 = vtanh.pop %v1147
        %v1152 = vtanh.pop %v1148
        %s1153 = sld [smem:[#allocation6 + $0x700]]
        %v1154 = vstv %s1153
        %v1155 = vmul.f32 %v1149, %v1154
        %v1156 = vmul.f32 %v1150, %v1154
        %v1157 = vmul.f32 %v1151, %v1154
        %v1158 = vmul.f32 %v1152, %v1154
        %v1159 = vadd.f32 %v1103, %v1155
        %v1160 = vadd.f32 %v1104, %v1156
        %v1161 = vadd.f32 %v1105, %v1157
        %v1162 = vadd.f32 %v1106, %v1158
        %s1163 = sld [smem:[#allocation6 + $0x701]]
        %v1164 = vstv %s1163
        %v1165 = vmul.f32 %v1149, %v1164
        %v1166 = vmul.f32 %v1150, %v1164
        %v1167 = vmul.f32 %v1151, %v1164
        %v1168 = vmul.f32 %v1152, %v1164
        %v1169 = vadd.f32 %v1113, %v1165
        %v1170 = vadd.f32 %v1114, %v1166
        %v1171 = vadd.f32 %v1115, %v1167
        %v1172 = vadd.f32 %v1116, %v1168
        %s1173 = sld [smem:[#allocation6 + $0x702]]
        %v1174 = vstv %s1173
        %v1175 = vmul.f32 %v1149, %v1174
        %v1176 = vmul.f32 %v1150, %v1174
        %v1177 = vmul.f32 %v1151, %v1174
        %v1178 = vmul.f32 %v1152, %v1174
        %v1179 = vadd.f32 %v1123, %v1175
        %v1180 = vadd.f32 %v1124, %v1176
        %v1181 = vadd.f32 %v1125, %v1177
        %v1182 = vadd.f32 %v1126, %v1178
        %s1183 = sld [smem:[#allocation2 + $0xf]]
        %v1184 = vstv %s1183
        %v1185 = vmul.f32 %v326, %v1184
        %v1186 = vmul.f32 %v327, %v1184
        %v1187 = vmul.f32 %v328, %v1184
        %v1188 = vmul.f32 %v329, %v1184
        %s1189 = sld [smem:[#allocation2 + $0x8f]]
        %v1190 = vstv %s1189
        %v1191 = vmul.f32 %v330, %v1190
        %v1192 = vmul.f32 %v331, %v1190
        %v1193 = vmul.f32 %v332, %v1190
        %v1194 = vmul.f32 %v333, %v1190
        %v1195 = vadd.f32 %v1185, %v1191
        %v1196 = vadd.f32 %v1186, %v1192
        %v1197 = vadd.f32 %v1187, %v1193
        %v1198 = vadd.f32 %v1188, %v1194
        %s1199 = sld [smem:[#allocation4 + $0xf]]
        %v1200 = vstv %s1199
        %v1201 = vadd.f32 %v1195, %v1200
        %v1202 = vadd.f32 %v1196, %v1200
        %v1203 = vadd.f32 %v1197, %v1200
        %v1204 = vadd.f32 %v1198, %v1200
        %v1205 = vtanh.pop %v1201
        %v1206 = vtanh.pop %v1202
        %v1207 = vtanh.pop %v1203
        %v1208 = vtanh.pop %v1204
        %s1209 = sld [smem:[#allocation6 + $0x780]]
        %v1210 = vstv %s1209
        %v1211 = vmul.f32 %v1205, %v1210
        %v1212 = vmul.f32 %v1206, %v1210
        %v1213 = vmul.f32 %v1207, %v1210
        %v1214 = vmul.f32 %v1208, %v1210
        %v1215 = vadd.f32 %v1159, %v1211
        %v1216 = vadd.f32 %v1160, %v1212
        %v1217 = vadd.f32 %v1161, %v1213
        %v1218 = vadd.f32 %v1162, %v1214
        %s1219 = sld [smem:[#allocation6 + $0x781]]
        %v1220 = vstv %s1219
        %v1221 = vmul.f32 %v1205, %v1220
        %v1222 = vmul.f32 %v1206, %v1220
        %v1223 = vmul.f32 %v1207, %v1220
        %v1224 = vmul.f32 %v1208, %v1220
        %v1225 = vadd.f32 %v1169, %v1221
        %v1226 = vadd.f32 %v1170, %v1222
        %v1227 = vadd.f32 %v1171, %v1223
        %v1228 = vadd.f32 %v1172, %v1224
        %s1229 = sld [smem:[#allocation6 + $0x782]]
        %v1230 = vstv %s1229
        %v1231 = vmul.f32 %v1205, %v1230
        %v1232 = vmul.f32 %v1206, %v1230
        %v1233 = vmul.f32 %v1207, %v1230
        %v1234 = vmul.f32 %v1208, %v1230
        %v1235 = vadd.f32 %v1179, %v1231
        %v1236 = vadd.f32 %v1180, %v1232
        %v1237 = vadd.f32 %v1181, %v1233
        %v1238 = vadd.f32 %v1182, %v1234
        %v1239 = vtanh.pop %v1215
        %v1240 = vtanh.pop %v1216
        %v1241 = vtanh.pop %v1217
        %v1242 = vtanh.pop %v1218
        %v1243 = vmul.f32 %v1239, 2.0
        %v1244 = vmul.f32 %v1240, 2.0
        %v1245 = vmul.f32 %v1241, 2.0
        %v1246 = vmul.f32 %v1242, 2.0
        %1247 = vst [vmem:[%s325] sm:$0xff] %v1243
        %1248 = vst [vmem:[%s325 + $0x8] sm:$0xff] %v1244
        %1249 = vst [vmem:[%s325 + $0x10] sm:$0xff] %v1245
        %1250 = vst [vmem:[%s325 + $0x18] sm:$0xff] %v1246
        %v1251 = vtanh.pop %v1225
        %v1252 = vtanh.pop %v1226
        %v1253 = vtanh.pop %v1227
        %v1254 = vtanh.pop %v1228
        %v1255 = vmul.f32 %v1251, 2.0
        %v1256 = vmul.f32 %v1252, 2.0
        %v1257 = vmul.f32 %v1253, 2.0
        %v1258 = vmul.f32 %v1254, 2.0
        %s1259 = scalar_lea.vmem %s325, 32
        %1260 = vst [vmem:[%s1259] sm:$0xff] %v1255
        %1261 = vst [vmem:[%s1259 + $0x8] sm:$0xff] %v1256
        %1262 = vst [vmem:[%s1259 + $0x10] sm:$0xff] %v1257
        %1263 = vst [vmem:[%s1259 + $0x18] sm:$0xff] %v1258
        %v1264 = vtanh.pop %v1235
        %v1265 = vtanh.pop %v1236
        %v1266 = vtanh.pop %v1237
        %v1267 = vtanh.pop %v1238
        %v1268 = vmul.f32 %v1264, 2.0
        %v1269 = vmul.f32 %v1265, 2.0
        %v1270 = vmul.f32 %v1266, 2.0
        %v1271 = vmul.f32 %v1267, 2.0
        %s1272 = scalar_lea.vmem %s325, 64
        %1273 = vst [vmem:[%s1272] sm:$0xff] %v1268
        %1274 = vst [vmem:[%s1272 + $0x8] sm:$0xff] %v1269
        %1275 = vst [vmem:[%s1272 + $0x10] sm:$0xff] %v1270
        %1276 = vst [vmem:[%s1272 + $0x18] sm:$0xff] %v1271
        %p1277 = scmp.lt.s32.totalorder %s20, 1
        %s1278 = scalar_select %p1277, %s20, 1
        %s1279 = smul.addr %s1278, 12
        %s1280 = smul.addr %s1279, 8
        %s1281 = scalar_lea.vmem %s6, %s1280
        // Predicated region
        $region61: #{pre_register_forward.8} parent=43 // pred_check
          %p1282 = pneg %p174
        $region62: #{pre_register_forward.8} parent=43 // pred_check_branch
          %1284 = sbr.rel (%p1282) target = $region64
        $region63: #{pre_register_forward.8} parent=43 // pred_region
          _
        $region64: #{pre_register_forward.8} parent=43 // pred_fallthru
          _
      $region44: #{pre_register_forward.8} parent=5 // pred_fallthru
        _
      %p1285 = scmp.le.s32.totalorder 2, %s15
      // Predicated region
      $region65: #{pre_register_forward.8} parent=5 // pred_check
        %p1286 = pneg %p1285
      $region66: #{pre_register_forward.8} parent=5 // pred_check_branch
        %1288 = sbr.rel (%p1286) target = $region68
      $region67: #{pre_register_forward.8} parent=5 // pred_region
        %s1289 = ssub.s32 %s15, 2
        // Predicated region
        $region69: #{pre_register_forward.8} parent=67 // pred_check
          %p1290 = pneg %p180
        $region70: #{pre_register_forward.8} parent=67 // pred_check_branch
          %1292 = sbr.rel (%p1290) target = $region72
        $region71: #{pre_register_forward.8} parent=67 // pred_region
          %p1293 = scmp.lt.s32.totalorder %s21, 1
          %s1294 = scalar_select %p1293, %s21, 1
          %s1295 = smul.addr %s1294, 12
          %s1296 = smul.addr %s1295, 8
          %s1297 = scalar_lea.vmem %s6, %s1296
        $region72: #{pre_register_forward.8} parent=67 // pred_fallthru
          _
      $region68: #{pre_register_forward.8} parent=5 // pred_fallthru
        _
    $region6: #{pre_register_forward.8} parent=1 // loop_footer
      %s19 = sadd.s32 1, %s15
    $region7: #{pre_register_forward.8} parent=1 // loop_footer_branch
      %14 = sbr.rel target = $region3
    $region8: #{pre_register_forward.8} parent=1 // loop_exit
      _
    %1298 = vsyncpa [#allocation3], 1
    %s1299 = scalar_lea.sflag [#allocation3], 1
    %1300 = vsyncpa %s1299, 1
    %1301 = vsyncpa [#allocation5], 1
    %1302 = vsyncpa [#allocation8], 1

// kernel: pre_register_forward.7
$region0: #{pre_register_forward.7}
  #allocation0 [shape = 'u32[]', space=smem, size = 0x4, offset = 0x4, fixed_abs, tag = 'smem constant byte address 0x4 - core index']
  #allocation1 [shape = 'u32[144,128]{1,0:T(1,128)}', space=vmem, size = 0x12000, scoped, tag = 'internal scratch']
  %s0 = inlined_call_operand.vmem [shape: f32[2,3,16,256], index: 0, kind: input, shape index: {}]
  %s1 = inlined_call_operand.vmem [shape: f32[2,16,256], index: 1, kind: input, shape index: {}]
  %s2 = inlined_call_operand.vmem [shape: f32[2,16,256], index: 2, kind: input, shape index: {}]
  %s3 = inlined_call_operand.vmem [shape: f32[2,16,256], index: 3, kind: output, shape index: {}]
  %s4 = sld [smem:[#allocation0]]
  $region45: #{pre_register_forward.7} parent=0
    _
  %s6 = ssub.s32 1, %s4
  %s7 = scalar_select 0, %s6, %s4
  loop: start=0, step=1, limit=4
  $region2: #{pre_register_forward.7} parent=0 // loop_pre_header
    _
  $region3: #{pre_register_forward.7} parent=0 // loop_header
    %s9 = sphi 0, %s13
    %p10 = scmp.ge.s32.totalorder %s9, 4
    %s19 = sphi 0, %s21
    %s22 = sphi 0, %s19
    %s23 = sphi 0, %s22
    %s39 = sphi 0, %s23
    %s45 = sphi 0, %s47
    %s48 = sphi 0, %s45
    %s49 = sphi 0, %s48
    %s65 = sphi 0, %s49
    %s71 = sphi 0, %s73
    %s74 = sphi 0, %s71
    %s75 = sphi 0, %s74
    %s91 = sphi 0, %s75
    %s97 = sphi 0, %s99
    %s100 = sphi 0, %s97
    %s101 = sphi 0, %s100
    %s117 = sphi 0, %s101
  $region4: #{pre_register_forward.7} parent=0 // loop_header_branch
    %12 = sbr.rel (%p10) target = $region8
  $region5: #{pre_register_forward.7} parent=0 // loop_body
    %s14 = ssub.s32 %s9, 1
    %s15 = ssub.s32 %s9, 2
    %s16 = sadd.s32 %s9, 1
    %s17 = ssub.s32 %s9, %s16
    %p18 = scmp.eq.s32.totalorder %s17, 0
    %s20 = sadd.s32 %s19, 1
    %s21 = scalar_select %p18, %s19, %s20
    %p24 = pneg %p18
    %p25 = scmp.eq.s32.totalorder %s9, 1
    %p26 = por %p24, %p25
    %p27 = scmp.ne.s32.totalorder %s19, %s22
    %p28 = scmp.eq.s32.totalorder %s9, 0
    %p29 = por %p27, %p28
    %p30 = scmp.ne.s32.totalorder %s19, %s22
    %p31 = scmp.eq.s32.totalorder %s14, 1
    %p32 = por %p30, %p31
    %p33 = scmp.ne.s32.totalorder %s22, %s23
    %p34 = scmp.eq.s32.totalorder %s14, 0
    %p35 = por %p33, %p34
    %p36 = scmp.ne.s32.totalorder %s22, %s23
    %p37 = scmp.eq.s32.totalorder %s15, 1
    %p38 = por %p36, %p37
    %p40 = scmp.ne.s32.totalorder %s23, %s39
    %p41 = scmp.eq.s32.totalorder %s15, 0
    %p42 = por %p40, %p41
    %s43 = ssub.s32 %s9, %s16
    %p44 = scmp.eq.s32.totalorder %s43, 0
    %s46 = sadd.s32 %s45, 1
    %s47 = scalar_select %p44, %s45, %s46
    %p50 = pneg %p44
    %p51 = scmp.eq.s32.totalorder %s9, 1
    %p52 = por %p50, %p51
    %p53 = scmp.ne.s32.totalorder %s45, %s48
    %p54 = scmp.eq.s32.totalorder %s9, 0
    %p55 = por %p53, %p54
    %p56 = scmp.ne.s32.totalorder %s45, %s48
    %p57 = scmp.eq.s32.totalorder %s14, 1
    %p58 = por %p56, %p57
    %p59 = scmp.ne.s32.totalorder %s48, %s49
    %p60 = scmp.eq.s32.totalorder %s14, 0
    %p61 = por %p59, %p60
    %p62 = scmp.ne.s32.totalorder %s48, %s49
    %p63 = scmp.eq.s32.totalorder %s15, 1
    %p64 = por %p62, %p63
    %p66 = scmp.ne.s32.totalorder %s49, %s65
    %p67 = scmp.eq.s32.totalorder %s15, 0
    %p68 = por %p66, %p67
    %s69 = ssub.s32 %s9, %s16
    %p70 = scmp.eq.s32.totalorder %s69, 0
    %s72 = sadd.s32 %s71, 1
    %s73 = scalar_select %p70, %s71, %s72
    %p76 = pneg %p70
    %p77 = scmp.eq.s32.totalorder %s9, 1
    %p78 = por %p76, %p77
    %p79 = scmp.ne.s32.totalorder %s71, %s74
    %p80 = scmp.eq.s32.totalorder %s9, 0
    %p81 = por %p79, %p80
    %p82 = scmp.ne.s32.totalorder %s71, %s74
    %p83 = scmp.eq.s32.totalorder %s14, 1
    %p84 = por %p82, %p83
    %p85 = scmp.ne.s32.totalorder %s74, %s75
    %p86 = scmp.eq.s32.totalorder %s14, 0
    %p87 = por %p85, %p86
    %p88 = scmp.ne.s32.totalorder %s74, %s75
    %p89 = scmp.eq.s32.totalorder %s15, 1
    %p90 = por %p88, %p89
    %p92 = scmp.ne.s32.totalorder %s75, %s91
    %p93 = scmp.eq.s32.totalorder %s15, 0
    %p94 = por %p92, %p93
    %s95 = ssub.s32 %s9, %s16
    %p96 = scmp.eq.s32.totalorder %s95, 0
    %s98 = sadd.s32 %s97, 1
    %s99 = scalar_select %p96, %s97, %s98
    %p102 = pneg %p96
    %p103 = scmp.eq.s32.totalorder %s9, 1
    %p104 = por %p102, %p103
    %p105 = scmp.ne.s32.totalorder %s97, %s100
    %p106 = scmp.eq.s32.totalorder %s9, 0
    %p107 = por %p105, %p106
    %p108 = scmp.ne.s32.totalorder %s97, %s100
    %p109 = scmp.eq.s32.totalorder %s14, 1
    %p110 = por %p108, %p109
    %p111 = scmp.ne.s32.totalorder %s100, %s101
    %p112 = scmp.eq.s32.totalorder %s14, 0
    %p113 = por %p111, %p112
    %p114 = scmp.ne.s32.totalorder %s100, %s101
    %p115 = scmp.eq.s32.totalorder %s15, 1
    %p116 = por %p114, %p115
    %p118 = scmp.ne.s32.totalorder %s101, %s117
    %p119 = scmp.eq.s32.totalorder %s15, 0
    %p120 = por %p118, %p119
    %p121 = scmp.le.s32.totalorder 1, %s9
    %p122 = scmp.lt.s32.totalorder %s9, 3
    %p123 = pnand %p121, %p122
    %p124 = pneg %p123
    // Predicated region
    $region9: #{pre_register_forward.7} parent=5 // pred_check
      _
    $region10: #{pre_register_forward.7} parent=5 // pred_check_branch
      %126 = sbr.rel (%p123) target = $region12
    $region11: #{pre_register_forward.7} parent=5 // pred_region
      %s127 = ssub.s32 %s9, 1
    $region12: #{pre_register_forward.7} parent=5 // pred_fallthru
      _
    %p128 = scmp.lt.s32.totalorder %s9, 2
    // Predicated region
    $region13: #{pre_register_forward.7} parent=5 // pred_check
      %p129 = pneg %p128
    $region14: #{pre_register_forward.7} parent=5 // pred_check_branch
      %131 = sbr.rel (%p129) target = $region16
    $region15: #{pre_register_forward.7} parent=5 // pred_region
      // Predicated region
      $region17: #{pre_register_forward.7} parent=15 // pred_check
        %p132 = pneg %p29
      $region18: #{pre_register_forward.7} parent=15 // pred_check_branch
        %134 = sbr.rel (%p132) target = $region20
      $region19: #{pre_register_forward.7} parent=15 // pred_region
        %p135 = scmp.lt.s32.totalorder %s9, 1
        %s136 = scalar_select %p135, %s9, 1
        %s137 = smul.addr %s136, 12
        %s138 = smul.addr %s137, 8
        %s139 = scalar_lea.vmem %s0, %s138
      $region20: #{pre_register_forward.7} parent=15 // pred_fallthru
        _
      // Predicated region
      $region21: #{pre_register_forward.7} parent=15 // pred_check
        %p140 = pneg %p55
      $region22: #{pre_register_forward.7} parent=15 // pred_check_branch
        %142 = sbr.rel (%p140) target = $region24
      $region23: #{pre_register_forward.7} parent=15 // pred_region
        %p143 = scmp.lt.s32.totalorder %s9, 1
        %s144 = scalar_select %p143, %s9, 1
        %s145 = smul.addr %s144, 4
        %s146 = smul.addr %s145, 8
        %s147 = scalar_lea.vmem %s1, %s146
      $region24: #{pre_register_forward.7} parent=15 // pred_fallthru
        _
      // Predicated region
      $region25: #{pre_register_forward.7} parent=15 // pred_check
        %p148 = pneg %p81
      $region26: #{pre_register_forward.7} parent=15 // pred_check_branch
        %150 = sbr.rel (%p148) target = $region28
      $region27: #{pre_register_forward.7} parent=15 // pred_region
        %p151 = scmp.lt.s32.totalorder %s9, 1
        %s152 = scalar_select %p151, %s9, 1
        %s153 = smul.addr %s152, 4
        %s154 = smul.addr %s153, 8
        %s155 = scalar_lea.vmem %s2, %s154
      $region28: #{pre_register_forward.7} parent=15 // pred_fallthru
        _
    $region16: #{pre_register_forward.7} parent=5 // pred_fallthru
      _
    %p156 = scmp.le.s32.totalorder 1, %s9
    %p157 = scmp.lt.s32.totalorder %s9, 3
    %p158 = pnand %p156, %p157
    %p159 = pneg %p158
    // Predicated region
    $region29: #{pre_register_forward.7} parent=5 // pred_check
      _
    $region30: #{pre_register_forward.7} parent=5 // pred_check_branch
      %161 = sbr.rel (%p158) target = $region32
    $region31: #{pre_register_forward.7} parent=5 // pred_region
      %s162 = ssub.s32 %s9, 1
      %p163 = scmp.lt.s32.totalorder %s14, 1
      %s164 = scalar_select %p163, %s14, 1
      %s165 = smul.addr %s164, 12
      %s166 = smul.addr %s165, 8
      %s167 = scalar_lea.vmem %s0, %s166
      %p168 = pneg %p35
      %p169 = pneg %p32
      %p170 = scmp.lt.s32.totalorder %s14, 1
      %s171 = scalar_select %p170, %s14, 1
      %s172 = smul.addr %s171, 4
      %s173 = smul.addr %s172, 8
      %s174 = scalar_lea.vmem %s1, %s173
      %p175 = pneg %p61
      %p176 = pneg %p58
      %p177 = scmp.lt.s32.totalorder %s14, 1
      %s178 = scalar_select %p177, %s14, 1
      %s179 = smul.addr %s178, 4
      %s180 = smul.addr %s179, 8
      %s181 = scalar_lea.vmem %s2, %s180
      %p182 = pneg %p87
      %p183 = pneg %p84
      %p184 = pneg %p113
      %p185 = pneg %p110
      %p186 = scmp.lt.s32.totalorder %s14, 1
      %s187 = scalar_select %p186, %s14, 1
      %s188 = smul.addr %s187, 4
      %s189 = smul.addr %s188, 8
      %s190 = scalar_lea.vmem %s3, %s189
      %p191 = scmp.lt.s32.totalorder %s14, 1
      %s192 = scalar_select %p191, %s14, 1
      %s193 = smul.addr %s192, 12
      %s194 = smul.addr %s193, 8
      %s195 = scalar_lea.vmem %s0, %s194
      %p196 = scmp.lt.s32.totalorder %s14, 1
      %s197 = scalar_select %p196, %s14, 1
      %s198 = smul.addr %s197, 4
      %s199 = smul.addr %s198, 8
      %s200 = scalar_lea.vmem %s1, %s199
      %p201 = scmp.lt.s32.totalorder %s14, 1
      %s202 = scalar_select %p201, %s14, 1
      %s203 = smul.addr %s202, 4
      %s204 = smul.addr %s203, 8
      %s205 = scalar_lea.vmem %s2, %s204
      %p206 = scmp.lt.s32.totalorder %s14, 1
      %s207 = scalar_select %p206, %s14, 1
      %s208 = smul.addr %s207, 4
      %s209 = smul.addr %s208, 8
      %s210 = scalar_lea.vmem %s3, %s209
      %v211 = vld [vmem:[%s195] sm:$0xff]
      %v212 = vld [vmem:[%s195 + $0x8] sm:$0xff]
      %v213 = vld [vmem:[%s195 + $0x10] sm:$0xff]
      %v214 = vld [vmem:[%s195 + $0x18] sm:$0xff]
      %s215 = scalar_lea.vmem %s195, 32
      %v216 = vld [vmem:[%s215] sm:$0xff]
      %v217 = vld [vmem:[%s215 + $0x8] sm:$0xff]
      %v218 = vld [vmem:[%s215 + $0x10] sm:$0xff]
      %v219 = vld [vmem:[%s215 + $0x18] sm:$0xff]
      %s220 = scalar_lea.vmem %s195, 64
      %v221 = vld [vmem:[%s220] sm:$0xff]
      %v222 = vld [vmem:[%s220 + $0x8] sm:$0xff]
      %v223 = vld [vmem:[%s220 + $0x10] sm:$0xff]
      %v224 = vld [vmem:[%s220 + $0x18] sm:$0xff]
      %v225 = vld [vmem:[%s200] sm:$0xff]
      %v226 = vld [vmem:[%s200 + $0x8] sm:$0xff]
      %v227 = vld [vmem:[%s200 + $0x10] sm:$0xff]
      %v228 = vld [vmem:[%s200 + $0x18] sm:$0xff]
      %v229 = vld [vmem:[%s205] sm:$0xff]
      %v230 = vld [vmem:[%s205 + $0x8] sm:$0xff]
      %v231 = vld [vmem:[%s205 + $0x10] sm:$0xff]
      %v232 = vld [vmem:[%s205 + $0x18] sm:$0xff]
      %v233 = vlaneseq
      %v234 = vand.u32 %v233, 127
      %v235 = vadd.s32 %v234, 128
      %v236 = vlaneseq
      %v237 = vshrl.u32 %v236, 7
      %v238 = vadd.s32 %v237, 8
      %v239 = vand.u32 %v234, 15
      %v240 = vand.u32 %v235, 15
      %vm241 = vcmp.lt.s32.totalorder %v239, 15
      %vm242 = vcmp.lt.s32.totalorder %v240, 15
      %vm243 = vcmp.gt.s32.totalorder %v239, 0
      %vm244 = vcmp.gt.s32.totalorder %v240, 0
      %vm245 = vcmp.lt.s32.totalorder %v234, 240
      %vm246 = vcmp.lt.s32.totalorder %v235, 240
      %vm247 = vcmp.ge.s32.totalorder %v234, 16
      %vm248 = vcmp.ge.s32.totalorder %v235, 16
      %vm249 = vcmp.lt.s32.totalorder %v237, 15
      %vm250 = vcmp.lt.s32.totalorder %v238, 15
      %vm251 = vcmp.gt.s32.totalorder %v237, 0
      %vm252 = vcmp.gt.s32.totalorder %v238, 0
      %v253 = vrot.slane %v211, 1
      %v254 = vrot.slane %v212, 1
      %v255 = vrot.slane %v213, 1
      %v256 = vrot.slane %v214, 1
      %vm257 = vcmp.lt.s32.totalorder %v237, 7
      %v258 = vsel %vm257, %v253, %v255
      %v259 = vsel %vm257, %v254, %v256
      %v260 = vsel %vm257, %v255, %v253
      %v261 = vsel %vm257, %v256, %v254
      %v262 = vsub.f32 %v258, %v211
      %v263 = vsub.f32 %v259, %v212
      %v264 = vsub.f32 %v260, %v213
      %v265 = vsub.f32 %v261, %v214
      %v266 = vrot.slane %v262, 7
      %v267 = vrot.slane %v263, 7
      %v268 = vrot.slane %v264, 7
      %v269 = vrot.slane %v265, 7
      %vm270 = vcmp.lt.s32.totalorder %v237, 1
      %v271 = vsel %vm270, %v266, %v268
      %v272 = vsel %vm270, %v267, %v269
      %v273 = vsel %vm270, %v268, %v266
      %v274 = vsel %vm270, %v269, %v267
      %v275 = vsel %vm249, %v262, %v273
      %v276 = vsel %vm249, %v263, %v274
      %v277 = vsel %vm250, %v264, %v271
      %v278 = vsel %vm250, %v265, %v272
      %279 = vrot.lane.b32.xlu0 %v211, 112
      %v280 = vpop.permute.xlu0 %279
      %281 = vrot.lane.b32.xlu0 %v213, 112
      %v282 = vpop.permute.xlu0 %281
      %283 = vrot.lane.b32.xlu0 %v212, 112
      %v284 = vpop.permute.xlu0 %283
      %285 = vrot.lane.b32.xlu0 %v214, 112
      %v286 = vpop.permute.xlu0 %285
      %vm287 = vcmp.lt.s32.totalorder %v234, 112
      %v288 = vsel %vm287, %v280, %v284
      %v289 = vsel %vm287, %v282, %v286
      %v290 = vsel %vm287, %v284, %v280
      %v291 = vsel %vm287, %v286, %v282
      %v292 = vsub.f32 %v288, %v211
      %v293 = vsub.f32 %v290, %v212
      %v294 = vsub.f32 %v289, %v213
      %v295 = vsub.f32 %v291, %v214
      %296 = vrot.lane.b32.xlu0 %v292, 16
      %v297 = vpop.permute.xlu0 %296
      %298 = vrot.lane.b32.xlu0 %v294, 16
      %v299 = vpop.permute.xlu0 %298
      %300 = vrot.lane.b32.xlu0 %v293, 16
      %v301 = vpop.permute.xlu0 %300
      %302 = vrot.lane.b32.xlu0 %v295, 16
      %v303 = vpop.permute.xlu0 %302
      %vm304 = vcmp.lt.s32.totalorder %v234, 16
      %v305 = vsel %vm304, %v297, %v301
      %v306 = vsel %vm304, %v299, %v303
      %v307 = vsel %vm304, %v301, %v297
      %v308 = vsel %vm304, %v303, %v299
      %v309 = vsel %vm245, %v292, %v307
      %v310 = vsel %vm246, %v293, %v305
      %v311 = vsel %vm245, %v294, %v308
      %v312 = vsel %vm246, %v295, %v306
      %313 = vrot.lane.b32.xlu0 %v211, 127
      %v314 = vpop.permute.xlu0 %313
      %315 = vrot.lane.b32.xlu0 %v213, 127
      %v316 = vpop.permute.xlu0 %315
      %317 = vrot.lane.b32.xlu0 %v212, 127
      %v318 = vpop.permute.xlu0 %317
      %319 = vrot.lane.b32.xlu0 %v214, 127
      %v320 = vpop.permute.xlu0 %319
      %vm321 = vcmp.lt.s32.totalorder %v234, 127
      %v322 = vsel %vm321, %v314, %v318
      %v323 = vsel %vm321, %v316, %v320
      %v324 = vsel %vm321, %v318, %v314
      %v325 = vsel %vm321, %v320, %v316
      %v326 = vsub.f32 %v322, %v211
      %v327 = vsub.f32 %v324, %v212
      %v328 = vsub.f32 %v323, %v213
      %v329 = vsub.f32 %v325, %v214
      %330 = vrot.lane.b32.xlu0 %v326, 1
      %v331 = vpop.permute.xlu0 %330
      %332 = vrot.lane.b32.xlu0 %v328, 1
      %v333 = vpop.permute.xlu0 %332
      %334 = vrot.lane.b32.xlu0 %v327, 1
      %v335 = vpop.permute.xlu0 %334
      %336 = vrot.lane.b32.xlu0 %v329, 1
      %v337 = vpop.permute.xlu0 %336
      %vm338 = vcmp.lt.s32.totalorder %v234, 1
      %v339 = vsel %vm338, %v331, %v335
      %v340 = vsel %vm338, %v333, %v337
      %v341 = vsel %vm338, %v335, %v331
      %v342 = vsel %vm338, %v337, %v333
      %v343 = vsel %vm241, %v326, %v341
      %v344 = vsel %vm242, %v327, %v339
      %v345 = vsel %vm241, %v328, %v342
      %v346 = vsel %vm242, %v329, %v340
      %v347 = vrot.slane %v216, 1
      %v348 = vrot.slane %v217, 1
      %v349 = vrot.slane %v218, 1
      %v350 = vrot.slane %v219, 1
      %v351 = vsel %vm257, %v347, %v349
      %v352 = vsel %vm257, %v348, %v350
      %v353 = vsel %vm257, %v349, %v347
      %v354 = vsel %vm257, %v350, %v348
      %v355 = vsub.f32 %v351, %v216
      %v356 = vsub.f32 %v352, %v217
      %v357 = vsub.f32 %v353, %v218
      %v358 = vsub.f32 %v354, %v219
      %v359 = vrot.slane %v355, 7
      %v360 = vrot.slane %v356, 7
      %v361 = vrot.slane %v357, 7
      %v362 = vrot.slane %v358, 7
      %v363 = vsel %vm270, %v359, %v361
      %v364 = vsel %vm270, %v360, %v362
      %v365 = vsel %vm270, %v361, %v359
      %v366 = vsel %vm270, %v362, %v360
      %v367 = vsel %vm249, %v355, %v365
      %v368 = vsel %vm249, %v356, %v366
      %v369 = vsel %vm250, %v357, %v363
      %v370 = vsel %vm250, %v358, %v364
      %371 = vrot.lane.b32.xlu0 %v216, 112
      %v372 = vpop.permute.xlu0 %371
      %373 = vrot.lane.b32.xlu0 %v218, 112
      %v374 = vpop.permute.xlu0 %373
      %375 = vrot.lane.b32.xlu0 %v217, 112
      %v376 = vpop.permute.xlu0 %375
      %377 = vrot.lane.b32.xlu0 %v219, 112
      %v378 = vpop.permute.xlu0 %377
      %v379 = vsel %vm287, %v372, %v376
      %v380 = vsel %vm287, %v374, %v378
      %v381 = vsel %vm287, %v376, %v372
      %v382 = vsel %vm287, %v378, %v374
      %v383 = vsub.f32 %v379, %v216
      %v384 = vsub.f32 %v381, %v217
      %v385 = vsub.f32 %v380, %v218
      %v386 = vsub.f32 %v382, %v219
      %387 = vrot.lane.b32.xlu0 %v383, 16
      %v388 = vpop.permute.xlu0 %387
      %389 = vrot.lane.b32.xlu0 %v385, 16
      %v390 = vpop.permute.xlu0 %389
      %391 = vrot.lane.b32.xlu0 %v384, 16
      %v392 = vpop.permute.xlu0 %391
      %393 = vrot.lane.b32.xlu0 %v386, 16
      %v394 = vpop.permute.xlu0 %393
      %v395 = vsel %vm304, %v388, %v392
      %v396 = vsel %vm304, %v390, %v394
      %v397 = vsel %vm304, %v392, %v388
      %v398 = vsel %vm304, %v394, %v390
      %v399 = vsel %vm245, %v383, %v397
      %v400 = vsel %vm246, %v384, %v395
      %v401 = vsel %vm245, %v385, %v398
      %v402 = vsel %vm246, %v386, %v396
      %403 = vrot.lane.b32.xlu0 %v216, 127
      %v404 = vpop.permute.xlu0 %403
      %405 = vrot.lane.b32.xlu0 %v218, 127
      %v406 = vpop.permute.xlu0 %405
      %407 = vrot.lane.b32.xlu0 %v217, 127
      %v408 = vpop.permute.xlu0 %407
      %409 = vrot.lane.b32.xlu0 %v219, 127
      %v410 = vpop.permute.xlu0 %409
      %v411 = vsel %vm321, %v404, %v408
      %v412 = vsel %vm321, %v406, %v410
      %v413 = vsel %vm321, %v408, %v404
      %v414 = vsel %vm321, %v410, %v406
      %v415 = vsub.f32 %v411, %v216
      %v416 = vsub.f32 %v413, %v217
      %v417 = vsub.f32 %v412, %v218
      %v418 = vsub.f32 %v414, %v219
      %419 = vrot.lane.b32.xlu0 %v415, 1
      %v420 = vpop.permute.xlu0 %419
      %421 = vrot.lane.b32.xlu0 %v417, 1
      %v422 = vpop.permute.xlu0 %421
      %423 = vrot.lane.b32.xlu0 %v416, 1
      %v424 = vpop.permute.xlu0 %423
      %425 = vrot.lane.b32.xlu0 %v418, 1
      %v426 = vpop.permute.xlu0 %425
      %v427 = vsel %vm338, %v420, %v424
      %v428 = vsel %vm338, %v422, %v426
      %v429 = vsel %vm338, %v424, %v420
      %v430 = vsel %vm338, %v426, %v422
      %v431 = vsel %vm241, %v415, %v429
      %v432 = vsel %vm242, %v416, %v427
      %v433 = vsel %vm241, %v417, %v430
      %v434 = vsel %vm242, %v418, %v428
      %v435 = vrot.slane %v221, 1
      %v436 = vrot.slane %v222, 1
      %v437 = vrot.slane %v223, 1
      %v438 = vrot.slane %v224, 1
      %v439 = vsel %vm257, %v435, %v437
      %v440 = vsel %vm257, %v436, %v438
      %v441 = vsel %vm257, %v437, %v435
      %v442 = vsel %vm257, %v438, %v436
      %v443 = vsub.f32 %v439, %v221
      %v444 = vsub.f32 %v440, %v222
      %v445 = vsub.f32 %v441, %v223
      %v446 = vsub.f32 %v442, %v224
      %v447 = vrot.slane %v443, 7
      %v448 = vrot.slane %v444, 7
      %v449 = vrot.slane %v445, 7
      %v450 = vrot.slane %v446, 7
      %v451 = vsel %vm270, %v447, %v449
      %v452 = vsel %vm270, %v448, %v450
      %v453 = vsel %vm270, %v449, %v447
      %v454 = vsel %vm270, %v450, %v448
      %v455 = vsel %vm249, %v443, %v453
      %v456 = vsel %vm249, %v444, %v454
      %v457 = vsel %vm250, %v445, %v451
      %v458 = vsel %vm250, %v446, %v452
      %459 = vrot.lane.b32.xlu0 %v221, 112
      %v460 = vpop.permute.xlu0 %459
      %461 = vrot.lane.b32.xlu0 %v223, 112
      %v462 = vpop.permute.xlu0 %461
      %463 = vrot.lane.b32.xlu0 %v222, 112
      %v464 = vpop.permute.xlu0 %463
      %465 = vrot.lane.b32.xlu0 %v224, 112
      %v466 = vpop.permute.xlu0 %465
      %v467 = vsel %vm287, %v460, %v464
      %v468 = vsel %vm287, %v462, %v466
      %v469 = vsel %vm287, %v464, %v460
      %v470 = vsel %vm287, %v466, %v462
      %v471 = vsub.f32 %v467, %v221
      %v472 = vsub.f32 %v469, %v222
      %v473 = vsub.f32 %v468, %v223
      %v474 = vsub.f32 %v470, %v224
      %475 = vrot.lane.b32.xlu0 %v471, 16
      %v476 = vpop.permute.xlu0 %475
      %477 = vrot.lane.b32.xlu0 %v473, 16
      %v478 = vpop.permute.xlu0 %477
      %479 = vrot.lane.b32.xlu0 %v472, 16
      %v480 = vpop.permute.xlu0 %479
      %481 = vrot.lane.b32.xlu0 %v474, 16
      %v482 = vpop.permute.xlu0 %481
      %v483 = vsel %vm304, %v476, %v480
      %v484 = vsel %vm304, %v478, %v482
      %v485 = vsel %vm304, %v480, %v476
      %v486 = vsel %vm304, %v482, %v478
      %v487 = vsel %vm245, %v471, %v485
      %v488 = vsel %vm246, %v472, %v483
      %v489 = vsel %vm245, %v473, %v486
      %v490 = vsel %vm246, %v474, %v484
      %491 = vrot.lane.b32.xlu0 %v221, 127
      %v492 = vpop.permute.xlu0 %491
      %493 = vrot.lane.b32.xlu0 %v223, 127
      %v494 = vpop.permute.xlu0 %493
      %495 = vrot.lane.b32.xlu0 %v222, 127
      %v496 = vpop.permute.xlu0 %495
      %497 = vrot.lane.b32.xlu0 %v224, 127
      %v498 = vpop.permute.xlu0 %497
      %v499 = vsel %vm321, %v492, %v496
      %v500 = vsel %vm321, %v494, %v498
      %v501 = vsel %vm321, %v496, %v492
      %v502 = vsel %vm321, %v498, %v494
      %v503 = vsub.f32 %v499, %v221
      %v504 = vsub.f32 %v501, %v222
      %v505 = vsub.f32 %v500, %v223
      %v506 = vsub.f32 %v502, %v224
      %507 = vrot.lane.b32.xlu0 %v503, 1
      %v508 = vpop.permute.xlu0 %507
      %509 = vrot.lane.b32.xlu0 %v505, 1
      %v510 = vpop.permute.xlu0 %509
      %511 = vrot.lane.b32.xlu0 %v504, 1
      %v512 = vpop.permute.xlu0 %511
      %513 = vrot.lane.b32.xlu0 %v506, 1
      %v514 = vpop.permute.xlu0 %513
      %v515 = vsel %vm338, %v508, %v512
      %v516 = vsel %vm338, %v510, %v514
      %v517 = vsel %vm338, %v512, %v508
      %v518 = vsel %vm338, %v514, %v510
      %v519 = vsel %vm241, %v503, %v517
      %v520 = vsel %vm242, %v504, %v515
      %v521 = vsel %vm241, %v505, %v518
      %v522 = vsel %vm242, %v506, %v516
      %v523 = vadd.f32 %v275, 1.0
      %v524 = vadd.f32 %v276, 1.0
      %v525 = vadd.f32 %v277, 1.0
      %v526 = vadd.f32 %v278, 1.0
      %v527 = vadd.f32 %v399, 1.0
      %v528 = vadd.f32 %v400, 1.0
      %v529 = vadd.f32 %v401, 1.0
      %v530 = vadd.f32 %v402, 1.0
      %v531 = vadd.f32 %v519, 1.0
      %v532 = vadd.f32 %v520, 1.0
      %v533 = vadd.f32 %v521, 1.0
      %v534 = vadd.f32 %v522, 1.0
      %v535 = vmul.f32 %v527, %v531
      %v536 = vmul.f32 %v528, %v532
      %v537 = vmul.f32 %v529, %v533
      %v538 = vmul.f32 %v530, %v534
      %v539 = vmul.f32 %v431, %v487
      %v540 = vmul.f32 %v432, %v488
      %v541 = vmul.f32 %v433, %v489
      %v542 = vmul.f32 %v434, %v490
      %v543 = vsub.f32 %v535, %v539
      %v544 = vsub.f32 %v536, %v540
      %v545 = vsub.f32 %v537, %v541
      %v546 = vsub.f32 %v538, %v542
      %v547 = vmul.f32 %v523, %v543
      %v548 = vmul.f32 %v524, %v544
      %v549 = vmul.f32 %v525, %v545
      %v550 = vmul.f32 %v526, %v546
      %v551 = vmul.f32 %v367, %v531
      %v552 = vmul.f32 %v368, %v532
      %v553 = vmul.f32 %v369, %v533
      %v554 = vmul.f32 %v370, %v534
      %v555 = vmul.f32 %v431, %v455
      %v556 = vmul.f32 %v432, %v456
      %v557 = vmul.f32 %v433, %v457
      %v558 = vmul.f32 %v434, %v458
      %v559 = vsub.f32 %v551, %v555
      %v560 = vsub.f32 %v552, %v556
      %v561 = vsub.f32 %v553, %v557
      %v562 = vsub.f32 %v554, %v558
      %v563 = vmul.f32 %v309, %v559
      %v564 = vmul.f32 %v310, %v560
      %v565 = vmul.f32 %v311, %v561
      %v566 = vmul.f32 %v312, %v562
      %v567 = vsub.f32 %v547, %v563
      %v568 = vsub.f32 %v548, %v564
      %v569 = vsub.f32 %v549, %v565
      %v570 = vsub.f32 %v550, %v566
      %v571 = vmul.f32 %v367, %v487
      %v572 = vmul.f32 %v368, %v488
      %v573 = vmul.f32 %v369, %v489
      %v574 = vmul.f32 %v370, %v490
      %v575 = vmul.f32 %v527, %v455
      %v576 = vmul.f32 %v528, %v456
      %v577 = vmul.f32 %v529, %v457
      %v578 = vmul.f32 %v530, %v458
      %v579 = vsub.f32 %v571, %v575
      %v580 = vsub.f32 %v572, %v576
      %v581 = vsub.f32 %v573, %v577
      %v582 = vsub.f32 %v574, %v578
      %v583 = vmul.f32 %v343, %v579
      %v584 = vmul.f32 %v344, %v580
      %v585 = vmul.f32 %v345, %v581
      %v586 = vmul.f32 %v346, %v582
      %v587 = vadd.f32 %v567, %v583
      %v588 = vadd.f32 %v568, %v584
      %v589 = vadd.f32 %v569, %v585
      %v590 = vadd.f32 %v570, %v586
      %v591 = vand.u32 2147483647, %v587
      %v592 = vand.u32 2147483647, %v588
      %v593 = vand.u32 2147483647, %v589
      %v594 = vand.u32 2147483647, %v590
      %v595 = vmax.f32 %v591, 0.33333334
      %v596 = vmax.f32 %v592, 0.33333334
      %v597 = vmax.f32 %v593, 0.33333334
      %v598 = vmax.f32 %v594, 0.33333334
      %v599 = vmin.f32 %v595, 3.0
      %v600 = vmin.f32 %v596, 3.0
      %v601 = vmin.f32 %v597, 3.0
      %v602 = vmin.f32 %v598, 3.0
      %v603 = vrot.slane %v599, 7
      %v604 = vrot.slane %v600, 7
      %v605 = vrot.slane %v601, 7
      %v606 = vrot.slane %v602, 7
      %v607 = vsel %vm270, %v603, %v605
      %v608 = vsel %vm270, %v604, %v606
      %v609 = vsel %vm270, %v605, %v603
      %v610 = vsel %vm270, %v606, %v604
      %v611 = vsel %vm251, %v609, 0.0
      %v612 = vsel %vm251, %v610, 0.0
      %v613 = vsel %vm252, %v607, 0.0
      %v614 = vsel %vm252, %v608, 0.0
      %v615 = vadd.f32 %v611, %v599
      %v616 = vadd.f32 %v612, %v600
      %v617 = vadd.f32 %v613, %v601
      %v618 = vadd.f32 %v614, %v602
      %v619 = vrot.slane %v599, 1
      %v620 = vrot.slane %v600, 1
      %v621 = vrot.slane %v601, 1
      %v622 = vrot.slane %v602, 1
      %v623 = vsel %vm257, %v619, %v621
      %v624 = vsel %vm257, %v620, %v622
      %v625 = vsel %vm257, %v621, %v619
      %v626 = vsel %vm257, %v622, %v620
      %v627 = vsel %vm249, %v623, 0.0
      %v628 = vsel %vm249, %v624, 0.0
      %v629 = vsel %vm250, %v625, 0.0
      %v630 = vsel %vm250, %v626, 0.0
      %v631 = vadd.f32 %v615, %v627
      %v632 = vadd.f32 %v616, %v628
      %v633 = vadd.f32 %v617, %v629
      %v634 = vadd.f32 %v618, %v630
      %635 = vrot.lane.b32.xlu0 %v631, 16
      %v636 = vpop.permute.xlu0 %635
      %637 = vrot.lane.b32.xlu0 %v633, 16
      %v638 = vpop.permute.xlu0 %637
      %639 = vrot.lane.b32.xlu0 %v632, 16
      %v640 = vpop.permute.xlu0 %639
      %641 = vrot.lane.b32.xlu0 %v634, 16
      %v642 = vpop.permute.xlu0 %641
      %v643 = vsel %vm304, %v636, %v640
      %v644 = vsel %vm304, %v638, %v642
      %v645 = vsel %vm304, %v640, %v636
      %v646 = vsel %vm304, %v642, %v638
      %v647 = vsel %vm247, %v645, 0.0
      %v648 = vsel %vm248, %v643, 0.0
      %v649 = vsel %vm247, %v646, 0.0
      %v650 = vsel %vm248, %v644, 0.0
      %v651 = vadd.f32 %v647, %v631
      %v652 = vadd.f32 %v648, %v632
      %v653 = vadd.f32 %v649, %v633
      %v654 = vadd.f32 %v650, %v634
      %655 = vrot.lane.b32.xlu0 %v631, 112
      %v656 = vpop.permute.xlu0 %655
      %657 = vrot.lane.b32.xlu0 %v633, 112
      %v658 = vpop.permute.xlu0 %657
      %659 = vrot.lane.b32.xlu0 %v632, 112
      %v660 = vpop.permute.xlu0 %659
      %661 = vrot.lane.b32.xlu0 %v634, 112
      %v662 = vpop.permute.xlu0 %661
      %v663 = vsel %vm287, %v656, %v660
      %v664 = vsel %vm287, %v658, %v662
      %v665 = vsel %vm287, %v660, %v656
      %v666 = vsel %vm287, %v662, %v658
      %v667 = vsel %vm245, %v663, 0.0
      %v668 = vsel %vm246, %v665, 0.0
      %v669 = vsel %vm245, %v664, 0.0
      %v670 = vsel %vm246, %v666, 0.0
      %v671 = vadd.f32 %v651, %v667
      %v672 = vadd.f32 %v652, %v668
      %v673 = vadd.f32 %v653, %v669
      %v674 = vadd.f32 %v654, %v670
      %675 = vrot.lane.b32.xlu0 %v671, 1
      %v676 = vpop.permute.xlu0 %675
      %677 = vrot.lane.b32.xlu0 %v673, 1
      %v678 = vpop.permute.xlu0 %677
      %679 = vrot.lane.b32.xlu0 %v672, 1
      %v680 = vpop.permute.xlu0 %679
      %681 = vrot.lane.b32.xlu0 %v674, 1
      %v682 = vpop.permute.xlu0 %681
      %v683 = vsel %vm338, %v676, %v680
      %v684 = vsel %vm338, %v678, %v682
      %v685 = vsel %vm338, %v680, %v676
      %v686 = vsel %vm338, %v682, %v678
      %v687 = vsel %vm243, %v685, 0.0
      %v688 = vsel %vm244, %v683, 0.0
      %v689 = vsel %vm243, %v686, 0.0
      %v690 = vsel %vm244, %v684, 0.0
      %v691 = vadd.f32 %v687, %v671
      %v692 = vadd.f32 %v688, %v672
      %v693 = vadd.f32 %v689, %v673
      %v694 = vadd.f32 %v690, %v674
      %695 = vrot.lane.b32.xlu0 %v671, 127
      %v696 = vpop.permute.xlu0 %695
      %697 = vrot.lane.b32.xlu0 %v673, 127
      %v698 = vpop.permute.xlu0 %697
      %699 = vrot.lane.b32.xlu0 %v672, 127
      %v700 = vpop.permute.xlu0 %699
      %701 = vrot.lane.b32.xlu0 %v674, 127
      %v702 = vpop.permute.xlu0 %701
      %v703 = vsel %vm321, %v696, %v700
      %v704 = vsel %vm321, %v698, %v702
      %v705 = vsel %vm321, %v700, %v696
      %v706 = vsel %vm321, %v702, %v698
      %v707 = vsel %vm241, %v703, 0.0
      %v708 = vsel %vm242, %v705, 0.0
      %v709 = vsel %vm241, %v704, 0.0
      %v710 = vsel %vm242, %v706, 0.0
      %v711 = vadd.f32 %v691, %v707
      %v712 = vadd.f32 %v692, %v708
      %v713 = vadd.f32 %v693, %v709
      %v714 = vadd.f32 %v694, %v710
      %v715 = vmul.f32 %v711, 0.037037037
      %v716 = vmul.f32 %v712, 0.037037037
      %v717 = vmul.f32 %v713, 0.037037037
      %v718 = vmul.f32 %v714, 0.037037037
      %vm719 = vcmp.gt.f32.partialorder %v225, 0.5
      %vm720 = vcmp.gt.f32.partialorder %v226, 0.5
      %vm721 = vcmp.gt.f32.partialorder %v227, 0.5
      %vm722 = vcmp.gt.f32.partialorder %v228, 0.5
      %v723 = vsel %vm719, 1, 0
      %v724 = vsel %vm720, 1, 0
      %v725 = vsel %vm721, 1, 0
      %v726 = vsel %vm722, 1, 0
      %v727 = vcvt.s32.f32 %v723
      %v728 = vcvt.s32.f32 %v724
      %v729 = vcvt.s32.f32 %v725
      %v730 = vcvt.s32.f32 %v726
      %v731 = vadd.f32 %v727, %v728
      %732 = vadd.xlane.f32.xlu0 %v731
      %v733 = vpop.xlane.xlu0 %732
      %v734 = vadd.f32 %v729, %v730
      %735 = vadd.xlane.f32.xlu0 %v734
      %v736 = vpop.xlane.xlu0 %735
      %v737 = vadd.f32 %v733, %v736
      %v738 = vrot.slane %v737, 4
      %v739 = vadd.f32 %v737, %v738
      %v740 = vrot.slane %v739, 2
      %v741 = vadd.f32 %v739, %v740
      %v742 = vrot.slane %v741, 1
      %v743 = vadd.f32 %v741, %v742
      %vm744 = vcmp.gt.f32.partialorder %v229, 0.5
      %vm745 = vcmp.gt.f32.partialorder %v230, 0.5
      %vm746 = vcmp.gt.f32.partialorder %v231, 0.5
      %vm747 = vcmp.gt.f32.partialorder %v232, 0.5
      %v748 = vsel %vm744, 1, 0
      %v749 = vsel %vm745, 1, 0
      %v750 = vsel %vm746, 1, 0
      %v751 = vsel %vm747, 1, 0
      %v752 = vcvt.s32.f32 %v748
      %v753 = vcvt.s32.f32 %v749
      %v754 = vcvt.s32.f32 %v750
      %v755 = vcvt.s32.f32 %v751
      %v756 = vadd.f32 %v752, %v753
      %757 = vadd.xlane.f32.xlu0 %v756
      %v758 = vpop.xlane.xlu0 %757
      %v759 = vadd.f32 %v754, %v755
      %760 = vadd.xlane.f32.xlu0 %v759
      %v761 = vpop.xlane.xlu0 %760
      %v762 = vadd.f32 %v758, %v761
      %v763 = vrot.slane %v762, 4
      %v764 = vadd.f32 %v762, %v763
      %v765 = vrot.slane %v764, 2
      %v766 = vadd.f32 %v764, %v765
      %v767 = vrot.slane %v766, 1
      %v768 = vadd.f32 %v766, %v767
      %v769 = vrcp.pop %v768
      %v770 = vmul.f32 %v743, %v769
      %v771 = vmul.f32 %v715, %v770
      %v772 = vmul.f32 %v716, %v770
      %v773 = vmul.f32 %v717, %v770
      %v774 = vmul.f32 %v718, %v770
      %v775 = vsel %vm719, %v771, 0.0
      %v776 = vsel %vm720, %v772, 0.0
      %v777 = vsel %vm721, %v773, 0.0
      %v778 = vsel %vm722, %v774, 0.0
      %779 = vst [vmem:[%s210] sm:$0xff] %v775
      %780 = vst [vmem:[%s210 + $0x8] sm:$0xff] %v776
      %781 = vst [vmem:[%s210 + $0x10] sm:$0xff] %v777
      %782 = vst [vmem:[%s210 + $0x18] sm:$0xff] %v778
      %p783 = scmp.lt.s32.totalorder %s14, 1
      %s784 = scalar_select %p783, %s14, 1
      %s785 = smul.addr %s784, 4
      %s786 = smul.addr %s785, 8
      %s787 = scalar_lea.vmem %s3, %s786
      // Predicated region
      $region33: #{pre_register_forward.7} parent=31 // pred_check
        %p788 = pneg %p110
      $region34: #{pre_register_forward.7} parent=31 // pred_check_branch
        %790 = sbr.rel (%p788) target = $region36
      $region35: #{pre_register_forward.7} parent=31 // pred_region
        _
      $region36: #{pre_register_forward.7} parent=31 // pred_fallthru
        _
    $region32: #{pre_register_forward.7} parent=5 // pred_fallthru
      _
    %p791 = scmp.le.s32.totalorder 2, %s9
    // Predicated region
    $region37: #{pre_register_forward.7} parent=5 // pred_check
      %p792 = pneg %p791
    $region38: #{pre_register_forward.7} parent=5 // pred_check_branch
      %794 = sbr.rel (%p792) target = $region40
    $region39: #{pre_register_forward.7} parent=5 // pred_region
      %s795 = ssub.s32 %s9, 2
      // Predicated region
      $region41: #{pre_register_forward.7} parent=39 // pred_check
        %p796 = pneg %p116
      $region42: #{pre_register_forward.7} parent=39 // pred_check_branch
        %798 = sbr.rel (%p796) target = $region44
      $region43: #{pre_register_forward.7} parent=39 // pred_region
        %p799 = scmp.lt.s32.totalorder %s15, 1
        %s800 = scalar_select %p799, %s15, 1
        %s801 = smul.addr %s800, 4
        %s802 = smul.addr %s801, 8
        %s803 = scalar_lea.vmem %s3, %s802
      $region44: #{pre_register_forward.7} parent=39 // pred_fallthru
        _
    $region40: #{pre_register_forward.7} parent=5 // pred_fallthru
      _
  $region6: #{pre_register_forward.7} parent=0 // loop_footer
    %s13 = sadd.s32 1, %s9
  $region7: #{pre_register_forward.7} parent=0 // loop_footer_branch
    %8 = sbr.rel target = $region3
  $region8: #{pre_register_forward.7} parent=0 // loop_exit
    _

// kernel: pre_register_forward.9
$region0: #{pre_register_forward.9}
  #allocation0 [shape = 'u32[]', space=smem, size = 0x4, offset = 0x4, fixed_abs, tag = 'smem constant byte address 0x4 - core index']
  #allocation1 [shape = 'u32[144,128]{1,0:T(1,128)}', space=vmem, size = 0x12000, scoped, tag = 'internal scratch']
  %s0 = inlined_call_operand.vmem [shape: f32[32,256], index: 0, kind: input, shape index: {}]
  %s1 = inlined_call_operand.vmem [shape: f32[32,256], index: 1, kind: input, shape index: {}]
  %s2 = inlined_call_operand.vmem [shape: f32[32,256], index: 2, kind: output, shape index: {0}]
  %s3 = inlined_call_operand.vmem [shape: f32[32,256], index: 3, kind: output, shape index: {1}]
  %4 = xla_tuple %s2, %s3
  %s5 = sld [smem:[#allocation0]]
  $region26: #{pre_register_forward.9} parent=0
    _
  %s7 = ssub.s32 1, %s5
  %s8 = scalar_select 0, %s7, %s5
  // Predicated region
  $region2: #{pre_register_forward.9} parent=0 // pred_check
    _
  $region3: #{pre_register_forward.9} parent=0 // pred_check_branch
    %10 = sbr.rel (0) target = $region5
  $region4: #{pre_register_forward.9} parent=0 // pred_region
    _
  $region5: #{pre_register_forward.9} parent=0 // pred_fallthru
    _
  // Predicated region
  $region6: #{pre_register_forward.9} parent=0 // pred_check
    _
  $region7: #{pre_register_forward.9} parent=0 // pred_check_branch
    %12 = sbr.rel (0) target = $region9
  $region8: #{pre_register_forward.9} parent=0 // pred_region
    _
  $region9: #{pre_register_forward.9} parent=0 // pred_fallthru
    _
  %v13 = vld [vmem:[%s0] sm:$0xff]
  %v14 = vld [vmem:[%s0 + $0x8] sm:$0xff]
  %v15 = vld [vmem:[%s0 + $0x10] sm:$0xff]
  %v16 = vld [vmem:[%s0 + $0x18] sm:$0xff]
  %v17 = vld [vmem:[%s0 + $0x20] sm:$0xff]
  %v18 = vld [vmem:[%s0 + $0x28] sm:$0xff]
  %v19 = vld [vmem:[%s0 + $0x30] sm:$0xff]
  %v20 = vld [vmem:[%s0 + $0x38] sm:$0xff]
  %v21 = vld [vmem:[%s1] sm:$0xff]
  %v22 = vld [vmem:[%s1 + $0x8] sm:$0xff]
  %v23 = vld [vmem:[%s1 + $0x10] sm:$0xff]
  %v24 = vld [vmem:[%s1 + $0x18] sm:$0xff]
  %v25 = vld [vmem:[%s1 + $0x20] sm:$0xff]
  %v26 = vld [vmem:[%s1 + $0x28] sm:$0xff]
  %v27 = vld [vmem:[%s1 + $0x30] sm:$0xff]
  %v28 = vld [vmem:[%s1 + $0x38] sm:$0xff]
  %v29 = vsub.f32 %v13, 0.5
  %v30 = vsub.f32 %v14, 0.5
  %v31 = vsub.f32 %v15, 0.5
  %v32 = vsub.f32 %v16, 0.5
  %v33 = vsub.f32 %v17, 0.5
  %v34 = vsub.f32 %v18, 0.5
  %v35 = vsub.f32 %v19, 0.5
  %v36 = vsub.f32 %v20, 0.5
  %v37 = vmul.f32 %v29, 5.0
  %v38 = vmul.f32 %v30, 5.0
  %v39 = vmul.f32 %v31, 5.0
  %v40 = vmul.f32 %v32, 5.0
  %v41 = vmul.f32 %v33, 5.0
  %v42 = vmul.f32 %v34, 5.0
  %v43 = vmul.f32 %v35, 5.0
  %v44 = vmul.f32 %v36, 5.0
  %v45 = vxor.u32 %v37, 2147483648
  %v46 = vxor.u32 %v38, 2147483648
  %v47 = vxor.u32 %v39, 2147483648
  %v48 = vxor.u32 %v40, 2147483648
  %v49 = vxor.u32 %v41, 2147483648
  %v50 = vxor.u32 %v42, 2147483648
  %v51 = vxor.u32 %v43, 2147483648
  %v52 = vxor.u32 %v44, 2147483648
  %v53 = vmul.f32 %v45, 1.442695
  %v54 = vpow.pop %v53
  %v55 = vmul.f32 %v46, 1.442695
  %v56 = vpow.pop %v55
  %v57 = vmul.f32 %v47, 1.442695
  %v58 = vpow.pop %v57
  %v59 = vmul.f32 %v48, 1.442695
  %v60 = vpow.pop %v59
  %v61 = vmul.f32 %v49, 1.442695
  %v62 = vpow.pop %v61
  %v63 = vmul.f32 %v50, 1.442695
  %v64 = vpow.pop %v63
  %v65 = vmul.f32 %v51, 1.442695
  %v66 = vpow.pop %v65
  %v67 = vmul.f32 %v52, 1.442695
  %v68 = vpow.pop %v67
  %v69 = vadd.f32 %v54, 1.0
  %v70 = vadd.f32 %v56, 1.0
  %v71 = vadd.f32 %v58, 1.0
  %v72 = vadd.f32 %v60, 1.0
  %v73 = vadd.f32 %v62, 1.0
  %v74 = vadd.f32 %v64, 1.0
  %v75 = vadd.f32 %v66, 1.0
  %v76 = vadd.f32 %v68, 1.0
  %v77 = vrcp.pop %v69
  %v78 = vmul.f32 1.0, %v77
  %v79 = vrcp.pop %v70
  %v80 = vmul.f32 1.0, %v79
  %v81 = vrcp.pop %v71
  %v82 = vmul.f32 1.0, %v81
  %v83 = vrcp.pop %v72
  %v84 = vmul.f32 1.0, %v83
  %v85 = vrcp.pop %v73
  %v86 = vmul.f32 1.0, %v85
  %v87 = vrcp.pop %v74
  %v88 = vmul.f32 1.0, %v87
  %v89 = vrcp.pop %v75
  %v90 = vmul.f32 1.0, %v89
  %v91 = vrcp.pop %v76
  %v92 = vmul.f32 1.0, %v91
  %vm93 = vcmp.gt.f32.partialorder %v21, 0.5
  %vm94 = vcmp.gt.f32.partialorder %v22, 0.5
  %vm95 = vcmp.gt.f32.partialorder %v23, 0.5
  %vm96 = vcmp.gt.f32.partialorder %v24, 0.5
  %vm97 = vcmp.gt.f32.partialorder %v25, 0.5
  %vm98 = vcmp.gt.f32.partialorder %v26, 0.5
  %vm99 = vcmp.gt.f32.partialorder %v27, 0.5
  %vm100 = vcmp.gt.f32.partialorder %v28, 0.5
  %v101 = vsel %vm93, %v78, 0.0
  %v102 = vsel %vm94, %v80, 0.0
  %v103 = vsel %vm95, %v82, 0.0
  %v104 = vsel %vm96, %v84, 0.0
  %v105 = vsel %vm97, %v86, 0.0
  %v106 = vsel %vm98, %v88, 0.0
  %v107 = vsel %vm99, %v90, 0.0
  %v108 = vsel %vm100, %v92, 0.0
  %109 = vst [vmem:[%s3] sm:$0xff] %v101
  %110 = vst [vmem:[%s3 + $0x8] sm:$0xff] %v102
  %111 = vst [vmem:[%s3 + $0x10] sm:$0xff] %v103
  %112 = vst [vmem:[%s3 + $0x18] sm:$0xff] %v104
  %113 = vst [vmem:[%s3 + $0x20] sm:$0xff] %v105
  %114 = vst [vmem:[%s3 + $0x28] sm:$0xff] %v106
  %115 = vst [vmem:[%s3 + $0x30] sm:$0xff] %v107
  %116 = vst [vmem:[%s3 + $0x38] sm:$0xff] %v108
  %v117 = vadd.f32 %v101, %v21
  %v118 = vadd.f32 %v102, %v22
  %v119 = vadd.f32 %v103, %v23
  %v120 = vadd.f32 %v104, %v24
  %v121 = vadd.f32 %v105, %v25
  %v122 = vadd.f32 %v106, %v26
  %v123 = vadd.f32 %v107, %v27
  %v124 = vadd.f32 %v108, %v28
  %125 = vst [vmem:[%s2] sm:$0xff] %v117
  %126 = vst [vmem:[%s2 + $0x8] sm:$0xff] %v118
  %127 = vst [vmem:[%s2 + $0x10] sm:$0xff] %v119
  %128 = vst [vmem:[%s2 + $0x18] sm:$0xff] %v120
  %129 = vst [vmem:[%s2 + $0x20] sm:$0xff] %v121
  %130 = vst [vmem:[%s2 + $0x28] sm:$0xff] %v122
  %131 = vst [vmem:[%s2 + $0x30] sm:$0xff] %v123
  %132 = vst [vmem:[%s2 + $0x38] sm:$0xff] %v124
  // Predicated region
  $region10: #{pre_register_forward.9} parent=0 // pred_check
    _
  $region11: #{pre_register_forward.9} parent=0 // pred_check_branch
    %134 = sbr.rel (0) target = $region13
  $region12: #{pre_register_forward.9} parent=0 // pred_region
    _
  $region13: #{pre_register_forward.9} parent=0 // pred_fallthru
    _
  // Predicated region
  $region14: #{pre_register_forward.9} parent=0 // pred_check
    _
  $region15: #{pre_register_forward.9} parent=0 // pred_check_branch
    %136 = sbr.rel (0) target = $region17
  $region16: #{pre_register_forward.9} parent=0 // pred_region
    _
  $region17: #{pre_register_forward.9} parent=0 // pred_fallthru
    _
  // Predicated region
  $region18: #{pre_register_forward.9} parent=0 // pred_check
    _
  $region19: #{pre_register_forward.9} parent=0 // pred_check_branch
    %138 = sbr.rel (0) target = $region21
  $region20: #{pre_register_forward.9} parent=0 // pred_region
    _
  $region21: #{pre_register_forward.9} parent=0 // pred_fallthru
    _
  // Predicated region
  $region22: #{pre_register_forward.9} parent=0 // pred_check
    _
  $region23: #{pre_register_forward.9} parent=0 // pred_check_branch
    %140 = sbr.rel (0) target = $region25
  $region24: #{pre_register_forward.9} parent=0 // pred_region
    _
  $region25: #{pre_register_forward.9} parent=0 // pred_fallthru
    _

</llo_original>
